<compile_context>
chip_gen: v7x
topology: tpu7x:2x2x1
jax: 0.10.0
libtpu: 0.0.40
codegen_flags: <defaults>
</compile_context>

<pallas_src>
import functools

import jax
import jax.numpy as jnp
import numpy as np
from jax import lax
from jax.experimental import pallas as pl
from jax.experimental.pallas import tpu as pltpu

EPS = 1e-5


def _round_up(x, m):
    return (x + m - 1) // m * m


# ------------------------------ Pallas kernel -------------------------------


def _residual_block_kernel(x_ref, mask_ref, w1_ref, w2_ref, w3_ref,
                           scale_ref, bias_ref, o_ref, col_ref, hp_ref, *,
                           x_offsets, hp_offsets, x_inner_off, hp_store_off):
    """One batch element of the fused residual block.

    x_ref:     (Cin, SPAD)       zero-padded input volume, padded-stride flat
    mask_ref:  (1, NQ)           1.0 where column q maps to a real (d,h,w)
    w1/w2_ref: (Cout, 27*KP)     im2col-packed 3x3x3 weights (K rows per tap
                                 padded to KP, padding rows are zero)
    w3_ref:    (Cout, Cin)       1x1x1 shortcut weight
    scale_ref: (3, Cout, 1)      folded BN scales  (conv1, conv2, conv3)
    bias_ref:  (3, Cout, 1)      folded BN biases (include conv bias)
    o_ref:     (Cout, NQ)        output in padded-stride flattening
    col_ref:   (27*KP, NQ)       shared im2col scratch (VMEM)
    hp_ref:    (Cout, HPW)       zero-padded intermediate volume (VMEM)
    """
    cin = x_ref.shape[0]
    cmid = hp_ref.shape[0]
    kp = col_ref.shape[0] // len(x_offsets)
    nq = o_ref.shape[-1]

    mask = mask_ref[...]                                   # (1, nq)

    # Zero the im2col scratch once; rows never written below stay zero and the
    # matching packed-weight columns are zero too.
    col_ref[...] = jnp.zeros_like(col_ref)

    # ---- stage 1: 3x3x3 conv (cin -> cmid) + folded BN + ReLU --------------
    for k, off in enumerate(x_offsets):
        col_ref[k * kp:k * kp + cin, :] = x_ref[:, off:off + nq]
    acc1 = jnp.dot(w1_ref[...], col_ref[...],
                   preferred_element_type=jnp.float32)
    h1 = jnp.maximum(acc1 * scale_ref[0] + bias_ref[0], 0.0) * mask

    # Rebuild the zero-padded intermediate volume entirely in VMEM.
    hp_ref[...] = jnp.zeros_like(hp_ref)
    hp_ref[:, hp_store_off:hp_store_off + nq] = h1

    # ---- stage 2: 3x3x3 conv (cmid -> cout) + folded BN + ReLU -------------
    for k, off in enumerate(hp_offsets):
        col_ref[k * kp:k * kp + cmid, :] = hp_ref[:, off:off + nq]
    acc2 = jnp.dot(w2_ref[...], col_ref[...],
                   preferred_element_type=jnp.float32)
    h2 = jnp.maximum(acc2 * scale_ref[1] + bias_ref[1], 0.0)

    # ---- shortcut: 1x1x1 conv + folded BN + ReLU + residual add ------------
    y3 = jnp.dot(w3_ref[...], x_ref[:, x_inner_off:x_inner_off + nq],
                 preferred_element_type=jnp.float32)
    y3 = jnp.maximum(y3 * scale_ref[2] + bias_ref[2], 0.0)

    o_ref[...] = (h2 + y3).astype(o_ref.dtype)


# --------------------------------- wrapper ----------------------------------


def _fold_bn(p):
    scale = p["gamma"] / jnp.sqrt(p["var"] + EPS)
    bias = p["beta"] + scale * (p["b"] - p["mean"])
    return scale, bias


def residual_block_forward(x_ncdhw, params):
    """Pallas implementation of ResidualBlock.forward (eval-mode BN), NCDHW."""
    N, Cin, D, H, W = x_ncdhw.shape
    Cout = params["conv1"]["w"].shape[0]
    Dp, Hp, Wp = D + 2, H + 2, W + 2
    Sp = Dp * Hp * Wp               # padded volume, flat
    NQ = D * Hp * Wp                # output columns (padded-stride flattening)

    # Tap offsets: in padded-stride flattening a 3x3x3 tap is a constant shift.
    x_offsets = tuple(kd * Hp * Wp + kh * Wp + kw
                      for kd in range(3) for kh in range(3) for kw in range(3))
    inner = Hp * Wp + Wp + 1        # flat offset of padded voxel (1,1,1)

    sp_pad = _round_up(max(Sp, x_offsets[-1] + NQ), 128)
    hp_store = _round_up(inner, 128)                 # lane-aligned store start
    hp_offsets = tuple(hp_store - inner + o for o in x_offsets)
    hp_width = _round_up(max(hp_store, hp_offsets[-1]) + NQ, 128)

    # Channel-major, zero-padded, flattened input: (N, Cin, sp_pad).
    xp = jnp.pad(x_ncdhw, ((0, 0), (0, 0), (1, 1), (1, 1), (1, 1)))
    xflat = jnp.pad(xp.reshape(N, Cin, Sp),
                    ((0, 0), (0, 0), (0, sp_pad - Sp)))

    # Mask of columns q that correspond to a real (d, h, w).
    q = np.arange(NQ)
    valid = ((q % (Hp * Wp)) // Wp < H) & (q % Wp < W)
    mask = jnp.asarray(valid.astype(np.float32)).reshape(1, NQ)

    kp = _round_up(max(Cin, Cout), 8)                # K rows per tap, 8-aligned

    def pack3(w):    # (Cout, Ci, 3, 3, 3) -> (Cout, 27*kp), tap-major groups
        co, ci = w.shape[0], w.shape[1]
        w = jnp.transpose(w, (0, 2, 3, 4, 1)).reshape(co, 27, ci)
        w = jnp.pad(w, ((0, 0), (0, 0), (0, kp - ci)))
        return w.reshape(co, 27 * kp)

    w1 = pack3(params["conv1"]["w"])
    w2 = pack3(params["conv2"]["w"])
    w3 = params["conv3"]["w"].reshape(Cout, Cin)

    s1, b1 = _fold_bn(params["conv1"])
    s2, b2 = _fold_bn(params["conv2"])
    s3, b3 = _fold_bn(params["conv3"])
    scales = jnp.stack([s1, s2, s3]).reshape(3, Cout, 1)
    biases = jnp.stack([b1, b2, b3]).reshape(3, Cout, 1)

    kernel = functools.partial(
        _residual_block_kernel, x_offsets=x_offsets, hp_offsets=hp_offsets,
        x_inner_off=inner, hp_store_off=hp_store)

    out = pl.pallas_call(
        kernel,
        out_shape=jax.ShapeDtypeStruct((N, Cout, NQ), jnp.float32),
        grid=(N,),
        in_specs=[
            pl.BlockSpec((None, Cin, sp_pad), lambda n: (n, 0, 0)),
            pl.BlockSpec((1, NQ), lambda n: (0, 0)),
            pl.BlockSpec((Cout, 27 * kp), lambda n: (0, 0)),
            pl.BlockSpec((Cout, 27 * kp), lambda n: (0, 0)),
            pl.BlockSpec((Cout, Cin), lambda n: (0, 0)),
            pl.BlockSpec((3, Cout, 1), lambda n: (0, 0, 0)),
            pl.BlockSpec((3, Cout, 1), lambda n: (0, 0, 0)),
        ],
        out_specs=pl.BlockSpec((None, Cout, NQ), lambda n: (n, 0, 0)),
        scratch_shapes=[
            pltpu.VMEM((27 * kp, NQ), jnp.float32),      # shared im2col matrix
            pltpu.VMEM((Cout, hp_width), jnp.float32),   # padded intermediate
        ],
        compiler_params=pltpu.CompilerParams(
            dimension_semantics=("parallel",)),
    )(xflat, mask, w1, w2, w3, scales, biases)

    # q = d*Hp*Wp + h*Wp + w  ->  reshape + crop gives NCDHW directly.
    return out.reshape(N, Cout, D, Hp, Wp)[:, :, :, :H, :W]


# --------------------------- params & reference -----------------------------


def _conv_bn_params(key, cin, cout, ksz):
    ks = jax.random.split(key, 6)
    fan_in = float(cin * ksz ** 3)
    return {
        "w": jax.random.normal(ks[0], (cout, cin, ksz, ksz, ksz),
                               jnp.float32) / np.sqrt(fan_in),
        "b": 0.1 * jax.random.normal(ks[1], (cout,), jnp.float32),
        "gamma": 1.0 + 0.1 * jax.random.normal(ks[2], (cout,), jnp.float32),
        "beta": 0.1 * jax.random.normal(ks[3], (cout,), jnp.float32),
        "mean": 0.1 * jax.random.normal(ks[4], (cout,), jnp.float32),
        "var": 0.5 + jax.random.uniform(ks[5], (cout,), jnp.float32),
    }


def init_params(key, in_channels, out_channels):
    k1, k2, k3 = jax.random.split(key, 3)
    return {
        "conv1": _conv_bn_params(k1, in_channels, out_channels, 3),
        "conv2": _conv_bn_params(k2, out_channels, out_channels, 3),
        "conv3": _conv_bn_params(k3, in_channels, out_channels, 1),
    }


def _ref_conv_bn_relu(x, p, padding):
    y = lax.conv_general_dilated(
        x, p["w"], window_strides=(1, 1, 1),
        padding=[(padding, padding)] * 3,
        dimension_numbers=("NCDHW", "OIDHW", "NCDHW"))
    y = y + p["b"].reshape(1, -1, 1, 1, 1)
    scale = (p["gamma"] / jnp.sqrt(p["var"] + EPS)).reshape(1, -1, 1, 1, 1)
    y = scale * (y - p["mean"].reshape(1, -1, 1, 1, 1)) \
        + p["beta"].reshape(1, -1, 1, 1, 1)
    return jnp.maximum(y, 0.0)


def ref_forward(x, params):
    out1 = _ref_conv_bn_relu(x, params["conv3"], 0)
    out = _ref_conv_bn_relu(x, params["conv1"], 1)
    out = _ref_conv_bn_relu(out, params["conv2"], 1)
    return out + out1


# --------------------------------- main --------------------------------------

if __name__ == "__main__":
    key = jax.random.PRNGKey(0)
    kx, kp_ = jax.random.split(key)

    N, C_IN, C_OUT, D, H, W = 2, 4, 8, 8, 8, 8
    x = jax.random.normal(kx, (N, C_IN, D, H, W), jnp.float32)
    params = init_params(kp_, C_IN, C_OUT)

    out = jax.jit(residual_block_forward)(x, params)
    out = jax.block_until_ready(out)
    assert out.shape == (N, C_OUT, D, H, W)

    ref = jax.block_until_ready(ref_forward(x, params))
    err = float(jnp.max(jnp.abs(out - ref)))
    if not np.isfinite(err) or err > 2e-3:
        raise AssertionError(f"Pallas result mismatch, max abs err = {err}")

    print("KERNEL_OK")
</pallas_src>

<mosaic_0001>
module attributes {stable_mosaic.version = 11 : i64} {
  func.func @_residual_block_kernel(%arg0: i32, %arg1: memref<1x4x1024xf32, #tpu.memory_space<vmem>>, %arg2: memref<1x800xf32, #tpu.memory_space<vmem>>, %arg3: memref<8x216xf32, #tpu.memory_space<vmem>>, %arg4: memref<8x216xf32, #tpu.memory_space<vmem>>, %arg5: memref<8x4xf32, #tpu.memory_space<vmem>>, %arg6: memref<3x8x1xf32, #tpu.memory_space<vmem>>, %arg7: memref<3x8x1xf32, #tpu.memory_space<vmem>>, %arg8: memref<1x8x800xf32, #tpu.memory_space<vmem>>, %arg9: memref<216x800xf32, #tpu.memory_space<vmem>>, %arg10: memref<8x1152xf32, #tpu.memory_space<vmem>>) attributes {dimension_semantics = [#tpu.dimension_semantics<parallel>], iteration_bounds = array<i64: 2>, scalar_prefetch = 0 : i64, scratch_operands = 2 : i64, tpu.core_type = #tpu.core_type<tc>, window_params = [{transform_indices = @transform_0, window_bounds = array<i64: 1, 4, 1024>}, {pipeline_mode = #tpu.pipeline_mode<synchronous>, transform_indices = @transform_1, window_bounds = array<i64: 1, 800>}, {pipeline_mode = #tpu.pipeline_mode<synchronous>, transform_indices = @transform_2, window_bounds = array<i64: 8, 216>}, {pipeline_mode = #tpu.pipeline_mode<synchronous>, transform_indices = @transform_3, window_bounds = array<i64: 8, 216>}, {pipeline_mode = #tpu.pipeline_mode<synchronous>, transform_indices = @transform_4, window_bounds = array<i64: 8, 4>}, {pipeline_mode = #tpu.pipeline_mode<synchronous>, transform_indices = @transform_5, window_bounds = array<i64: 3, 8, 1>}, {pipeline_mode = #tpu.pipeline_mode<synchronous>, transform_indices = @transform_6, window_bounds = array<i64: 3, 8, 1>}, {transform_indices = @transform_7, window_bounds = array<i64: 1, 8, 800>}]} {
    %c0 = arith.constant 0 : index
    %c0_0 = arith.constant 0 : index
    %0 = vector.load %arg2[%c0, %c0_0] : memref<1x800xf32, #tpu.memory_space<vmem>>, vector<1x800xf32>
    %cst = arith.constant 0.000000e+00 : f32
    %1 = vector.broadcast %cst : f32 to vector<216x800xf32>
    %c0_1 = arith.constant 0 : index
    %c0_2 = arith.constant 0 : index
    %2 = vector.load %arg9[%c0_1, %c0_2] : memref<216x800xf32, #tpu.memory_space<vmem>>, vector<216x800xf32>
    tpu.vector_store %arg9[%c0_1, %c0_2], %1 {strides = array<i32>} : memref<216x800xf32, #tpu.memory_space<vmem>>, vector<216x800xf32>,
    %c0_3 = arith.constant 0 : index
    %c0_4 = arith.constant 0 : index
    %c0_5 = arith.constant 0 : index
    %3 = vector.load %arg1[%c0_3, %c0_4, %c0_5] : memref<1x4x1024xf32, #tpu.memory_space<vmem>>, vector<1x4x800xf32>
    %4 = vector.shape_cast %3 : vector<1x4x800xf32> to vector<4x800xf32>
    %c0_6 = arith.constant 0 : index
    %c0_7 = arith.constant 0 : index
    %5 = vector.load %arg9[%c0_6, %c0_7] : memref<216x800xf32, #tpu.memory_space<vmem>>, vector<4x800xf32>
    tpu.vector_store %arg9[%c0_6, %c0_7], %4 {strides = array<i32>} : memref<216x800xf32, #tpu.memory_space<vmem>>, vector<4x800xf32>,
    %c0_8 = arith.constant 0 : index
    %c0_9 = arith.constant 0 : index
    %c1 = arith.constant 1 : index
    %6 = vector.load %arg1[%c0_8, %c0_9, %c1] : memref<1x4x1024xf32, #tpu.memory_space<vmem>>, vector<1x4x800xf32>
    %7 = vector.shape_cast %6 : vector<1x4x800xf32> to vector<4x800xf32>
    %c8 = arith.constant 8 : index
    %c0_10 = arith.constant 0 : index
    %8 = vector.load %arg9[%c8, %c0_10] : memref<216x800xf32, #tpu.memory_space<vmem>>, vector<4x800xf32>
    tpu.vector_store %arg9[%c8, %c0_10], %7 {strides = array<i32>} : memref<216x800xf32, #tpu.memory_space<vmem>>, vector<4x800xf32>,
    %c0_11 = arith.constant 0 : index
    %c0_12 = arith.constant 0 : index
    %c2 = arith.constant 2 : index
    %9 = vector.load %arg1[%c0_11, %c0_12, %c2] : memref<1x4x1024xf32, #tpu.memory_space<vmem>>, vector<1x4x800xf32>
    %10 = vector.shape_cast %9 : vector<1x4x800xf32> to vector<4x800xf32>
    %c16 = arith.constant 16 : index
    %c0_13 = arith.constant 0 : index
    %11 = vector.load %arg9[%c16, %c0_13] : memref<216x800xf32, #tpu.memory_space<vmem>>, vector<4x800xf32>
    tpu.vector_store %arg9[%c16, %c0_13], %10 {strides = array<i32>} : memref<216x800xf32, #tpu.memory_space<vmem>>, vector<4x800xf32>,
    %c0_14 = arith.constant 0 : index
    %c0_15 = arith.constant 0 : index
    %c10 = arith.constant 10 : index
    %12 = vector.load %arg1[%c0_14, %c0_15, %c10] : memref<1x4x1024xf32, #tpu.memory_space<vmem>>, vector<1x4x800xf32>
    %13 = vector.shape_cast %12 : vector<1x4x800xf32> to vector<4x800xf32>
    %c24 = arith.constant 24 : index
    %c0_16 = arith.constant 0 : index
    %14 = vector.load %arg9[%c24, %c0_16] : memref<216x800xf32, #tpu.memory_space<vmem>>, vector<4x800xf32>
    tpu.vector_store %arg9[%c24, %c0_16], %13 {strides = array<i32>} : memref<216x800xf32, #tpu.memory_space<vmem>>, vector<4x800xf32>,
    %c0_17 = arith.constant 0 : index
    %c0_18 = arith.constant 0 : index
    %c11 = arith.constant 11 : index
    %15 = vector.load %arg1[%c0_17, %c0_18, %c11] : memref<1x4x1024xf32, #tpu.memory_space<vmem>>, vector<1x4x800xf32>
    %16 = vector.shape_cast %15 : vector<1x4x800xf32> to vector<4x800xf32>
    %c32 = arith.constant 32 : index
    %c0_19 = arith.constant 0 : index
    %17 = vector.load %arg9[%c32, %c0_19] : memref<216x800xf32, #tpu.memory_space<vmem>>, vector<4x800xf32>
    tpu.vector_store %arg9[%c32, %c0_19], %16 {strides = array<i32>} : memref<216x800xf32, #tpu.memory_space<vmem>>, vector<4x800xf32>,
    %c0_20 = arith.constant 0 : index
    %c0_21 = arith.constant 0 : index
    %c12 = arith.constant 12 : index
    %18 = vector.load %arg1[%c0_20, %c0_21, %c12] : memref<1x4x1024xf32, #tpu.memory_space<vmem>>, vector<1x4x800xf32>
    %19 = vector.shape_cast %18 : vector<1x4x800xf32> to vector<4x800xf32>
    %c40 = arith.constant 40 : index
    %c0_22 = arith.constant 0 : index
    %20 = vector.load %arg9[%c40, %c0_22] : memref<216x800xf32, #tpu.memory_space<vmem>>, vector<4x800xf32>
    tpu.vector_store %arg9[%c40, %c0_22], %19 {strides = array<i32>} : memref<216x800xf32, #tpu.memory_space<vmem>>, vector<4x800xf32>,
    %c0_23 = arith.constant 0 : index
    %c0_24 = arith.constant 0 : index
    %c20 = arith.constant 20 : index
    %21 = vector.load %arg1[%c0_23, %c0_24, %c20] : memref<1x4x1024xf32, #tpu.memory_space<vmem>>, vector<1x4x800xf32>
    %22 = vector.shape_cast %21 : vector<1x4x800xf32> to vector<4x800xf32>
    %c48 = arith.constant 48 : index
    %c0_25 = arith.constant 0 : index
    %23 = vector.load %arg9[%c48, %c0_25] : memref<216x800xf32, #tpu.memory_space<vmem>>, vector<4x800xf32>
    tpu.vector_store %arg9[%c48, %c0_25], %22 {strides = array<i32>} : memref<216x800xf32, #tpu.memory_space<vmem>>, vector<4x800xf32>,
    %c0_26 = arith.constant 0 : index
    %c0_27 = arith.constant 0 : index
    %c21 = arith.constant 21 : index
    %24 = vector.load %arg1[%c0_26, %c0_27, %c21] : memref<1x4x1024xf32, #tpu.memory_space<vmem>>, vector<1x4x800xf32>
    %25 = vector.shape_cast %24 : vector<1x4x800xf32> to vector<4x800xf32>
    %c56 = arith.constant 56 : index
    %c0_28 = arith.constant 0 : index
    %26 = vector.load %arg9[%c56, %c0_28] : memref<216x800xf32, #tpu.memory_space<vmem>>, vector<4x800xf32>
    tpu.vector_store %arg9[%c56, %c0_28], %25 {strides = array<i32>} : memref<216x800xf32, #tpu.memory_space<vmem>>, vector<4x800xf32>,
    %c0_29 = arith.constant 0 : index
    %c0_30 = arith.constant 0 : index
    %c22 = arith.constant 22 : index
    %27 = vector.load %arg1[%c0_29, %c0_30, %c22] : memref<1x4x1024xf32, #tpu.memory_space<vmem>>, vector<1x4x800xf32>
    %28 = vector.shape_cast %27 : vector<1x4x800xf32> to vector<4x800xf32>
    %c64 = arith.constant 64 : index
    %c0_31 = arith.constant 0 : index
    %29 = vector.load %arg9[%c64, %c0_31] : memref<216x800xf32, #tpu.memory_space<vmem>>, vector<4x800xf32>
    tpu.vector_store %arg9[%c64, %c0_31], %28 {strides = array<i32>} : memref<216x800xf32, #tpu.memory_space<vmem>>, vector<4x800xf32>,
    %c0_32 = arith.constant 0 : index
    %c0_33 = arith.constant 0 : index
    %c100 = arith.constant 100 : index
    %30 = vector.load %arg1[%c0_32, %c0_33, %c100] : memref<1x4x1024xf32, #tpu.memory_space<vmem>>, vector<1x4x800xf32>
    %31 = vector.shape_cast %30 : vector<1x4x800xf32> to vector<4x800xf32>
    %c72 = arith.constant 72 : index
    %c0_34 = arith.constant 0 : index
    %32 = vector.load %arg9[%c72, %c0_34] : memref<216x800xf32, #tpu.memory_space<vmem>>, vector<4x800xf32>
    tpu.vector_store %arg9[%c72, %c0_34], %31 {strides = array<i32>} : memref<216x800xf32, #tpu.memory_space<vmem>>, vector<4x800xf32>,
    %c0_35 = arith.constant 0 : index
    %c0_36 = arith.constant 0 : index
    %c101 = arith.constant 101 : index
    %33 = vector.load %arg1[%c0_35, %c0_36, %c101] : memref<1x4x1024xf32, #tpu.memory_space<vmem>>, vector<1x4x800xf32>
    %34 = vector.shape_cast %33 : vector<1x4x800xf32> to vector<4x800xf32>
    %c80 = arith.constant 80 : index
    %c0_37 = arith.constant 0 : index
    %35 = vector.load %arg9[%c80, %c0_37] : memref<216x800xf32, #tpu.memory_space<vmem>>, vector<4x800xf32>
    tpu.vector_store %arg9[%c80, %c0_37], %34 {strides = array<i32>} : memref<216x800xf32, #tpu.memory_space<vmem>>, vector<4x800xf32>,
    %c0_38 = arith.constant 0 : index
    %c0_39 = arith.constant 0 : index
    %c102 = arith.constant 102 : index
    %36 = vector.load %arg1[%c0_38, %c0_39, %c102] : memref<1x4x1024xf32, #tpu.memory_space<vmem>>, vector<1x4x800xf32>
    %37 = vector.shape_cast %36 : vector<1x4x800xf32> to vector<4x800xf32>
    %c88 = arith.constant 88 : index
    %c0_40 = arith.constant 0 : index
    %38 = vector.load %arg9[%c88, %c0_40] : memref<216x800xf32, #tpu.memory_space<vmem>>, vector<4x800xf32>
    tpu.vector_store %arg9[%c88, %c0_40], %37 {strides = array<i32>} : memref<216x800xf32, #tpu.memory_space<vmem>>, vector<4x800xf32>,
    %c0_41 = arith.constant 0 : index
    %c0_42 = arith.constant 0 : index
    %c110 = arith.constant 110 : index
    %39 = vector.load %arg1[%c0_41, %c0_42, %c110] : memref<1x4x1024xf32, #tpu.memory_space<vmem>>, vector<1x4x800xf32>
    %40 = vector.shape_cast %39 : vector<1x4x800xf32> to vector<4x800xf32>
    %c96 = arith.constant 96 : index
    %c0_43 = arith.constant 0 : index
    %41 = vector.load %arg9[%c96, %c0_43] : memref<216x800xf32, #tpu.memory_space<vmem>>, vector<4x800xf32>
    tpu.vector_store %arg9[%c96, %c0_43], %40 {strides = array<i32>} : memref<216x800xf32, #tpu.memory_space<vmem>>, vector<4x800xf32>,
    %c0_44 = arith.constant 0 : index
    %c0_45 = arith.constant 0 : index
    %c111 = arith.constant 111 : index
    %42 = vector.load %arg1[%c0_44, %c0_45, %c111] : memref<1x4x1024xf32, #tpu.memory_space<vmem>>, vector<1x4x800xf32>
    %43 = vector.shape_cast %42 : vector<1x4x800xf32> to vector<4x800xf32>
    %c104 = arith.constant 104 : index
    %c0_46 = arith.constant 0 : index
    %44 = vector.load %arg9[%c104, %c0_46] : memref<216x800xf32, #tpu.memory_space<vmem>>, vector<4x800xf32>
    tpu.vector_store %arg9[%c104, %c0_46], %43 {strides = array<i32>} : memref<216x800xf32, #tpu.memory_space<vmem>>, vector<4x800xf32>,
    %c0_47 = arith.constant 0 : index
    %c0_48 = arith.constant 0 : index
    %c112 = arith.constant 112 : index
    %45 = vector.load %arg1[%c0_47, %c0_48, %c112] : memref<1x4x1024xf32, #tpu.memory_space<vmem>>, vector<1x4x800xf32>
    %46 = vector.shape_cast %45 : vector<1x4x800xf32> to vector<4x800xf32>
    %c112_49 = arith.constant 112 : index
    %c0_50 = arith.constant 0 : index
    %47 = vector.load %arg9[%c112_49, %c0_50] : memref<216x800xf32, #tpu.memory_space<vmem>>, vector<4x800xf32>
    tpu.vector_store %arg9[%c112_49, %c0_50], %46 {strides = array<i32>} : memref<216x800xf32, #tpu.memory_space<vmem>>, vector<4x800xf32>,
    %c0_51 = arith.constant 0 : index
    %c0_52 = arith.constant 0 : index
    %c120 = arith.constant 120 : index
    %48 = vector.load %arg1[%c0_51, %c0_52, %c120] : memref<1x4x1024xf32, #tpu.memory_space<vmem>>, vector<1x4x800xf32>
    %49 = vector.shape_cast %48 : vector<1x4x800xf32> to vector<4x800xf32>
    %c120_53 = arith.constant 120 : index
    %c0_54 = arith.constant 0 : index
    %50 = vector.load %arg9[%c120_53, %c0_54] : memref<216x800xf32, #tpu.memory_space<vmem>>, vector<4x800xf32>
    tpu.vector_store %arg9[%c120_53, %c0_54], %49 {strides = array<i32>} : memref<216x800xf32, #tpu.memory_space<vmem>>, vector<4x800xf32>,
    %c0_55 = arith.constant 0 : index
    %c0_56 = arith.constant 0 : index
    %c121 = arith.constant 121 : index
    %51 = vector.load %arg1[%c0_55, %c0_56, %c121] : memref<1x4x1024xf32, #tpu.memory_space<vmem>>, vector<1x4x800xf32>
    %52 = vector.shape_cast %51 : vector<1x4x800xf32> to vector<4x800xf32>
    %c128 = arith.constant 128 : index
    %c0_57 = arith.constant 0 : index
    %53 = vector.load %arg9[%c128, %c0_57] : memref<216x800xf32, #tpu.memory_space<vmem>>, vector<4x800xf32>
    tpu.vector_store %arg9[%c128, %c0_57], %52 {strides = array<i32>} : memref<216x800xf32, #tpu.memory_space<vmem>>, vector<4x800xf32>,
    %c0_58 = arith.constant 0 : index
    %c0_59 = arith.constant 0 : index
    %c122 = arith.constant 122 : index
    %54 = vector.load %arg1[%c0_58, %c0_59, %c122] : memref<1x4x1024xf32, #tpu.memory_space<vmem>>, vector<1x4x800xf32>
    %55 = vector.shape_cast %54 : vector<1x4x800xf32> to vector<4x800xf32>
    %c136 = arith.constant 136 : index
    %c0_60 = arith.constant 0 : index
    %56 = vector.load %arg9[%c136, %c0_60] : memref<216x800xf32, #tpu.memory_space<vmem>>, vector<4x800xf32>
    tpu.vector_store %arg9[%c136, %c0_60], %55 {strides = array<i32>} : memref<216x800xf32, #tpu.memory_space<vmem>>, vector<4x800xf32>,
    %c0_61 = arith.constant 0 : index
    %c0_62 = arith.constant 0 : index
    %c200 = arith.constant 200 : index
    %57 = vector.load %arg1[%c0_61, %c0_62, %c200] : memref<1x4x1024xf32, #tpu.memory_space<vmem>>, vector<1x4x800xf32>
    %58 = vector.shape_cast %57 : vector<1x4x800xf32> to vector<4x800xf32>
    %c144 = arith.constant 144 : index
    %c0_63 = arith.constant 0 : index
    %59 = vector.load %arg9[%c144, %c0_63] : memref<216x800xf32, #tpu.memory_space<vmem>>, vector<4x800xf32>
    tpu.vector_store %arg9[%c144, %c0_63], %58 {strides = array<i32>} : memref<216x800xf32, #tpu.memory_space<vmem>>, vector<4x800xf32>,
    %c0_64 = arith.constant 0 : index
    %c0_65 = arith.constant 0 : index
    %c201 = arith.constant 201 : index
    %60 = vector.load %arg1[%c0_64, %c0_65, %c201] : memref<1x4x1024xf32, #tpu.memory_space<vmem>>, vector<1x4x800xf32>
    %61 = vector.shape_cast %60 : vector<1x4x800xf32> to vector<4x800xf32>
    %c152 = arith.constant 152 : index
    %c0_66 = arith.constant 0 : index
    %62 = vector.load %arg9[%c152, %c0_66] : memref<216x800xf32, #tpu.memory_space<vmem>>, vector<4x800xf32>
    tpu.vector_store %arg9[%c152, %c0_66], %61 {strides = array<i32>} : memref<216x800xf32, #tpu.memory_space<vmem>>, vector<4x800xf32>,
    %c0_67 = arith.constant 0 : index
    %c0_68 = arith.constant 0 : index
    %c202 = arith.constant 202 : index
    %63 = vector.load %arg1[%c0_67, %c0_68, %c202] : memref<1x4x1024xf32, #tpu.memory_space<vmem>>, vector<1x4x800xf32>
    %64 = vector.shape_cast %63 : vector<1x4x800xf32> to vector<4x800xf32>
    %c160 = arith.constant 160 : index
    %c0_69 = arith.constant 0 : index
    %65 = vector.load %arg9[%c160, %c0_69] : memref<216x800xf32, #tpu.memory_space<vmem>>, vector<4x800xf32>
    tpu.vector_store %arg9[%c160, %c0_69], %64 {strides = array<i32>} : memref<216x800xf32, #tpu.memory_space<vmem>>, vector<4x800xf32>,
    %c0_70 = arith.constant 0 : index
    %c0_71 = arith.constant 0 : index
    %c210 = arith.constant 210 : index
    %66 = vector.load %arg1[%c0_70, %c0_71, %c210] : memref<1x4x1024xf32, #tpu.memory_space<vmem>>, vector<1x4x800xf32>
    %67 = vector.shape_cast %66 : vector<1x4x800xf32> to vector<4x800xf32>
    %c168 = arith.constant 168 : index
    %c0_72 = arith.constant 0 : index
    %68 = vector.load %arg9[%c168, %c0_72] : memref<216x800xf32, #tpu.memory_space<vmem>>, vector<4x800xf32>
    tpu.vector_store %arg9[%c168, %c0_72], %67 {strides = array<i32>} : memref<216x800xf32, #tpu.memory_space<vmem>>, vector<4x800xf32>,
    %c0_73 = arith.constant 0 : index
    %c0_74 = arith.constant 0 : index
    %c211 = arith.constant 211 : index
    %69 = vector.load %arg1[%c0_73, %c0_74, %c211] : memref<1x4x1024xf32, #tpu.memory_space<vmem>>, vector<1x4x800xf32>
    %70 = vector.shape_cast %69 : vector<1x4x800xf32> to vector<4x800xf32>
    %c176 = arith.constant 176 : index
    %c0_75 = arith.constant 0 : index
    %71 = vector.load %arg9[%c176, %c0_75] : memref<216x800xf32, #tpu.memory_space<vmem>>, vector<4x800xf32>
    tpu.vector_store %arg9[%c176, %c0_75], %70 {strides = array<i32>} : memref<216x800xf32, #tpu.memory_space<vmem>>, vector<4x800xf32>,
    %c0_76 = arith.constant 0 : index
    %c0_77 = arith.constant 0 : index
    %c212 = arith.constant 212 : index
    %72 = vector.load %arg1[%c0_76, %c0_77, %c212] : memref<1x4x1024xf32, #tpu.memory_space<vmem>>, vector<1x4x800xf32>
    %73 = vector.shape_cast %72 : vector<1x4x800xf32> to vector<4x800xf32>
    %c184 = arith.constant 184 : index
    %c0_78 = arith.constant 0 : index
    %74 = vector.load %arg9[%c184, %c0_78] : memref<216x800xf32, #tpu.memory_space<vmem>>, vector<4x800xf32>
    tpu.vector_store %arg9[%c184, %c0_78], %73 {strides = array<i32>} : memref<216x800xf32, #tpu.memory_space<vmem>>, vector<4x800xf32>,
    %c0_79 = arith.constant 0 : index
    %c0_80 = arith.constant 0 : index
    %c220 = arith.constant 220 : index
    %75 = vector.load %arg1[%c0_79, %c0_80, %c220] : memref<1x4x1024xf32, #tpu.memory_space<vmem>>, vector<1x4x800xf32>
    %76 = vector.shape_cast %75 : vector<1x4x800xf32> to vector<4x800xf32>
    %c192 = arith.constant 192 : index
    %c0_81 = arith.constant 0 : index
    %77 = vector.load %arg9[%c192, %c0_81] : memref<216x800xf32, #tpu.memory_space<vmem>>, vector<4x800xf32>
    tpu.vector_store %arg9[%c192, %c0_81], %76 {strides = array<i32>} : memref<216x800xf32, #tpu.memory_space<vmem>>, vector<4x800xf32>,
    %c0_82 = arith.constant 0 : index
    %c0_83 = arith.constant 0 : index
    %c221 = arith.constant 221 : index
    %78 = vector.load %arg1[%c0_82, %c0_83, %c221] : memref<1x4x1024xf32, #tpu.memory_space<vmem>>, vector<1x4x800xf32>
    %79 = vector.shape_cast %78 : vector<1x4x800xf32> to vector<4x800xf32>
    %c200_84 = arith.constant 200 : index
    %c0_85 = arith.constant 0 : index
    %80 = vector.load %arg9[%c200_84, %c0_85] : memref<216x800xf32, #tpu.memory_space<vmem>>, vector<4x800xf32>
    tpu.vector_store %arg9[%c200_84, %c0_85], %79 {strides = array<i32>} : memref<216x800xf32, #tpu.memory_space<vmem>>, vector<4x800xf32>,
    %c0_86 = arith.constant 0 : index
    %c0_87 = arith.constant 0 : index
    %c222 = arith.constant 222 : index
    %81 = vector.load %arg1[%c0_86, %c0_87, %c222] : memref<1x4x1024xf32, #tpu.memory_space<vmem>>, vector<1x4x800xf32>
    %82 = vector.shape_cast %81 : vector<1x4x800xf32> to vector<4x800xf32>
    %c208 = arith.constant 208 : index
    %c0_88 = arith.constant 0 : index
    %83 = vector.load %arg9[%c208, %c0_88] : memref<216x800xf32, #tpu.memory_space<vmem>>, vector<4x800xf32>
    tpu.vector_store %arg9[%c208, %c0_88], %82 {strides = array<i32>} : memref<216x800xf32, #tpu.memory_space<vmem>>, vector<4x800xf32>,
    %c0_89 = arith.constant 0 : index
    %c0_90 = arith.constant 0 : index
    %84 = vector.load %arg3[%c0_89, %c0_90] : memref<8x216xf32, #tpu.memory_space<vmem>>, vector<8x216xf32>
    %c0_91 = arith.constant 0 : index
    %c0_92 = arith.constant 0 : index
    %85 = vector.load %arg9[%c0_91, %c0_92] : memref<216x800xf32, #tpu.memory_space<vmem>>, vector<216x800xf32>
    %cst_93 = arith.constant dense<0.000000e+00> : vector<8x800xf32>
    %86 = tpu.matmul %84, %85, %cst_93 {dimension_numbers = #tpu.dot_dimension_numbers<[1], [0], [0], [1], [0, 0, 1, 1], [], []>} : vector<8x216xf32>, vector<216x800xf32>, vector<8x800xf32> -> vector<8x800xf32>
    %c0_94 = arith.constant 0 : index
    %c0_95 = arith.constant 0 : index
    %c0_96 = arith.constant 0 : index
    %87 = vector.load %arg6[%c0_94, %c0_95, %c0_96] : memref<3x8x1xf32, #tpu.memory_space<vmem>>, vector<1x8x1xf32>
    %88 = vector.shape_cast %87 : vector<1x8x1xf32> to vector<8x1xf32>
    %89 = vector.broadcast %88 : vector<8x1xf32> to vector<8x800xf32>
    %90 = arith.mulf %86, %89 : vector<8x800xf32>
    %c0_97 = arith.constant 0 : index
    %c0_98 = arith.constant 0 : index
    %c0_99 = arith.constant 0 : index
    %91 = vector.load %arg7[%c0_97, %c0_98, %c0_99] : memref<3x8x1xf32, #tpu.memory_space<vmem>>, vector<1x8x1xf32>
    %92 = vector.shape_cast %91 : vector<1x8x1xf32> to vector<8x1xf32>
    %93 = vector.broadcast %92 : vector<8x1xf32> to vector<8x800xf32>
    %94 = arith.addf %90, %93 : vector<8x800xf32>
    %cst_100 = arith.constant 0.000000e+00 : f32
    %95 = vector.broadcast %cst_100 : f32 to vector<8x800xf32>
    %96 = arith.maximumf %94, %95 : vector<8x800xf32>
    %97 = vector.broadcast %0 : vector<1x800xf32> to vector<8x800xf32>
    %98 = arith.mulf %96, %97 : vector<8x800xf32>
    %cst_101 = arith.constant 0.000000e+00 : f32
    %99 = vector.broadcast %cst_101 : f32 to vector<8x1152xf32>
    %c0_102 = arith.constant 0 : index
    %c0_103 = arith.constant 0 : index
    %100 = vector.load %arg10[%c0_102, %c0_103] : memref<8x1152xf32, #tpu.memory_space<vmem>>, vector<8x1152xf32>
    tpu.vector_store %arg10[%c0_102, %c0_103], %99 {strides = array<i32>} : memref<8x1152xf32, #tpu.memory_space<vmem>>, vector<8x1152xf32>,
    %c0_104 = arith.constant 0 : index
    %c128_105 = arith.constant 128 : index
    %101 = vector.load %arg10[%c0_104, %c128_105] : memref<8x1152xf32, #tpu.memory_space<vmem>>, vector<8x800xf32>
    tpu.vector_store %arg10[%c0_104, %c128_105], %98 {strides = array<i32>} : memref<8x1152xf32, #tpu.memory_space<vmem>>, vector<8x800xf32>,
    %c0_106 = arith.constant 0 : index
    %c17 = arith.constant 17 : index
    %102 = vector.load %arg10[%c0_106, %c17] : memref<8x1152xf32, #tpu.memory_space<vmem>>, vector<8x800xf32>
    %c0_107 = arith.constant 0 : index
    %c0_108 = arith.constant 0 : index
    %103 = vector.load %arg9[%c0_107, %c0_108] : memref<216x800xf32, #tpu.memory_space<vmem>>, vector<8x800xf32>
    tpu.vector_store %arg9[%c0_107, %c0_108], %102 {strides = array<i32>} : memref<216x800xf32, #tpu.memory_space<vmem>>, vector<8x800xf32>,
    %c0_109 = arith.constant 0 : index
    %c18 = arith.constant 18 : index
    %104 = vector.load %arg10[%c0_109, %c18] : memref<8x1152xf32, #tpu.memory_space<vmem>>, vector<8x800xf32>
    %c8_110 = arith.constant 8 : index
    %c0_111 = arith.constant 0 : index
    %105 = vector.load %arg9[%c8_110, %c0_111] : memref<216x800xf32, #tpu.memory_space<vmem>>, vector<8x800xf32>
    tpu.vector_store %arg9[%c8_110, %c0_111], %104 {strides = array<i32>} : memref<216x800xf32, #tpu.memory_space<vmem>>, vector<8x800xf32>,
    %c0_112 = arith.constant 0 : index
    %c19 = arith.constant 19 : index
    %106 = vector.load %arg10[%c0_112, %c19] : memref<8x1152xf32, #tpu.memory_space<vmem>>, vector<8x800xf32>
    %c16_113 = arith.constant 16 : index
    %c0_114 = arith.constant 0 : index
    %107 = vector.load %arg9[%c16_113, %c0_114] : memref<216x800xf32, #tpu.memory_space<vmem>>, vector<8x800xf32>
    tpu.vector_store %arg9[%c16_113, %c0_114], %106 {strides = array<i32>} : memref<216x800xf32, #tpu.memory_space<vmem>>, vector<8x800xf32>,
    %c0_115 = arith.constant 0 : index
    %c27 = arith.constant 27 : index
    %108 = vector.load %arg10[%c0_115, %c27] : memref<8x1152xf32, #tpu.memory_space<vmem>>, vector<8x800xf32>
    %c24_116 = arith.constant 24 : index
    %c0_117 = arith.constant 0 : index
    %109 = vector.load %arg9[%c24_116, %c0_117] : memref<216x800xf32, #tpu.memory_space<vmem>>, vector<8x800xf32>
    tpu.vector_store %arg9[%c24_116, %c0_117], %108 {strides = array<i32>} : memref<216x800xf32, #tpu.memory_space<vmem>>, vector<8x800xf32>,
    %c0_118 = arith.constant 0 : index
    %c28 = arith.constant 28 : index
    %110 = vector.load %arg10[%c0_118, %c28] : memref<8x1152xf32, #tpu.memory_space<vmem>>, vector<8x800xf32>
    %c32_119 = arith.constant 32 : index
    %c0_120 = arith.constant 0 : index
    %111 = vector.load %arg9[%c32_119, %c0_120] : memref<216x800xf32, #tpu.memory_space<vmem>>, vector<8x800xf32>
    tpu.vector_store %arg9[%c32_119, %c0_120], %110 {strides = array<i32>} : memref<216x800xf32, #tpu.memory_space<vmem>>, vector<8x800xf32>,
    %c0_121 = arith.constant 0 : index
    %c29 = arith.constant 29 : index
    %112 = vector.load %arg10[%c0_121, %c29] : memref<8x1152xf32, #tpu.memory_space<vmem>>, vector<8x800xf32>
    %c40_122 = arith.constant 40 : index
    %c0_123 = arith.constant 0 : index
    %113 = vector.load %arg9[%c40_122, %c0_123] : memref<216x800xf32, #tpu.memory_space<vmem>>, vector<8x800xf32>
    tpu.vector_store %arg9[%c40_122, %c0_123], %112 {strides = array<i32>} : memref<216x800xf32, #tpu.memory_space<vmem>>, vector<8x800xf32>,
    %c0_124 = arith.constant 0 : index
    %c37 = arith.constant 37 : index
    %114 = vector.load %arg10[%c0_124, %c37] : memref<8x1152xf32, #tpu.memory_space<vmem>>, vector<8x800xf32>
    %c48_125 = arith.constant 48 : index
    %c0_126 = arith.constant 0 : index
    %115 = vector.load %arg9[%c48_125, %c0_126] : memref<216x800xf32, #tpu.memory_space<vmem>>, vector<8x800xf32>
    tpu.vector_store %arg9[%c48_125, %c0_126], %114 {strides = array<i32>} : memref<216x800xf32, #tpu.memory_space<vmem>>, vector<8x800xf32>,
    %c0_127 = arith.constant 0 : index
    %c38 = arith.constant 38 : index
    %116 = vector.load %arg10[%c0_127, %c38] : memref<8x1152xf32, #tpu.memory_space<vmem>>, vector<8x800xf32>
    %c56_128 = arith.constant 56 : index
    %c0_129 = arith.constant 0 : index
    %117 = vector.load %arg9[%c56_128, %c0_129] : memref<216x800xf32, #tpu.memory_space<vmem>>, vector<8x800xf32>
    tpu.vector_store %arg9[%c56_128, %c0_129], %116 {strides = array<i32>} : memref<216x800xf32, #tpu.memory_space<vmem>>, vector<8x800xf32>,
    %c0_130 = arith.constant 0 : index
    %c39 = arith.constant 39 : index
    %118 = vector.load %arg10[%c0_130, %c39] : memref<8x1152xf32, #tpu.memory_space<vmem>>, vector<8x800xf32>
    %c64_131 = arith.constant 64 : index
    %c0_132 = arith.constant 0 : index
    %119 = vector.load %arg9[%c64_131, %c0_132] : memref<216x800xf32, #tpu.memory_space<vmem>>, vector<8x800xf32>
    tpu.vector_store %arg9[%c64_131, %c0_132], %118 {strides = array<i32>} : memref<216x800xf32, #tpu.memory_space<vmem>>, vector<8x800xf32>,
    %c0_133 = arith.constant 0 : index
    %c117 = arith.constant 117 : index
    %120 = vector.load %arg10[%c0_133, %c117] : memref<8x1152xf32, #tpu.memory_space<vmem>>, vector<8x800xf32>
    %c72_134 = arith.constant 72 : index
    %c0_135 = arith.constant 0 : index
    %121 = vector.load %arg9[%c72_134, %c0_135] : memref<216x800xf32, #tpu.memory_space<vmem>>, vector<8x800xf32>
    tpu.vector_store %arg9[%c72_134, %c0_135], %120 {strides = array<i32>} : memref<216x800xf32, #tpu.memory_space<vmem>>, vector<8x800xf32>,
    %c0_136 = arith.constant 0 : index
    %c118 = arith.constant 118 : index
    %122 = vector.load %arg10[%c0_136, %c118] : memref<8x1152xf32, #tpu.memory_space<vmem>>, vector<8x800xf32>
    %c80_137 = arith.constant 80 : index
    %c0_138 = arith.constant 0 : index
    %123 = vector.load %arg9[%c80_137, %c0_138] : memref<216x800xf32, #tpu.memory_space<vmem>>, vector<8x800xf32>
    tpu.vector_store %arg9[%c80_137, %c0_138], %122 {strides = array<i32>} : memref<216x800xf32, #tpu.memory_space<vmem>>, vector<8x800xf32>,
    %c0_139 = arith.constant 0 : index
    %c119 = arith.constant 119 : index
    %124 = vector.load %arg10[%c0_139, %c119] : memref<8x1152xf32, #tpu.memory_space<vmem>>, vector<8x800xf32>
    %c88_140 = arith.constant 88 : index
    %c0_141 = arith.constant 0 : index
    %125 = vector.load %arg9[%c88_140, %c0_141] : memref<216x800xf32, #tpu.memory_space<vmem>>, vector<8x800xf32>
    tpu.vector_store %arg9[%c88_140, %c0_141], %124 {strides = array<i32>} : memref<216x800xf32, #tpu.memory_space<vmem>>, vector<8x800xf32>,
    %c0_142 = arith.constant 0 : index
    %c127 = arith.constant 127 : index
    %126 = vector.load %arg10[%c0_142, %c127] : memref<8x1152xf32, #tpu.memory_space<vmem>>, vector<8x800xf32>
    %c96_143 = arith.constant 96 : index
    %c0_144 = arith.constant 0 : index
    %127 = vector.load %arg9[%c96_143, %c0_144] : memref<216x800xf32, #tpu.memory_space<vmem>>, vector<8x800xf32>
    tpu.vector_store %arg9[%c96_143, %c0_144], %126 {strides = array<i32>} : memref<216x800xf32, #tpu.memory_space<vmem>>, vector<8x800xf32>,
    %c0_145 = arith.constant 0 : index
    %c128_146 = arith.constant 128 : index
    %128 = vector.load %arg10[%c0_145, %c128_146] : memref<8x1152xf32, #tpu.memory_space<vmem>>, vector<8x800xf32>
    %c104_147 = arith.constant 104 : index
    %c0_148 = arith.constant 0 : index
    %129 = vector.load %arg9[%c104_147, %c0_148] : memref<216x800xf32, #tpu.memory_space<vmem>>, vector<8x800xf32>
    tpu.vector_store %arg9[%c104_147, %c0_148], %128 {strides = array<i32>} : memref<216x800xf32, #tpu.memory_space<vmem>>, vector<8x800xf32>,
    %c0_149 = arith.constant 0 : index
    %c129 = arith.constant 129 : index
    %130 = vector.load %arg10[%c0_149, %c129] : memref<8x1152xf32, #tpu.memory_space<vmem>>, vector<8x800xf32>
    %c112_150 = arith.constant 112 : index
    %c0_151 = arith.constant 0 : index
    %131 = vector.load %arg9[%c112_150, %c0_151] : memref<216x800xf32, #tpu.memory_space<vmem>>, vector<8x800xf32>
    tpu.vector_store %arg9[%c112_150, %c0_151], %130 {strides = array<i32>} : memref<216x800xf32, #tpu.memory_space<vmem>>, vector<8x800xf32>,
    %c0_152 = arith.constant 0 : index
    %c137 = arith.constant 137 : index
    %132 = vector.load %arg10[%c0_152, %c137] : memref<8x1152xf32, #tpu.memory_space<vmem>>, vector<8x800xf32>
    %c120_153 = arith.constant 120 : index
    %c0_154 = arith.constant 0 : index
    %133 = vector.load %arg9[%c120_153, %c0_154] : memref<216x800xf32, #tpu.memory_space<vmem>>, vector<8x800xf32>
    tpu.vector_store %arg9[%c120_153, %c0_154], %132 {strides = array<i32>} : memref<216x800xf32, #tpu.memory_space<vmem>>, vector<8x800xf32>,
    %c0_155 = arith.constant 0 : index
    %c138 = arith.constant 138 : index
    %134 = vector.load %arg10[%c0_155, %c138] : memref<8x1152xf32, #tpu.memory_space<vmem>>, vector<8x800xf32>
    %c128_156 = arith.constant 128 : index
    %c0_157 = arith.constant 0 : index
    %135 = vector.load %arg9[%c128_156, %c0_157] : memref<216x800xf32, #tpu.memory_space<vmem>>, vector<8x800xf32>
    tpu.vector_store %arg9[%c128_156, %c0_157], %134 {strides = array<i32>} : memref<216x800xf32, #tpu.memory_space<vmem>>, vector<8x800xf32>,
    %c0_158 = arith.constant 0 : index
    %c139 = arith.constant 139 : index
    %136 = vector.load %arg10[%c0_158, %c139] : memref<8x1152xf32, #tpu.memory_space<vmem>>, vector<8x800xf32>
    %c136_159 = arith.constant 136 : index
    %c0_160 = arith.constant 0 : index
    %137 = vector.load %arg9[%c136_159, %c0_160] : memref<216x800xf32, #tpu.memory_space<vmem>>, vector<8x800xf32>
    tpu.vector_store %arg9[%c136_159, %c0_160], %136 {strides = array<i32>} : memref<216x800xf32, #tpu.memory_space<vmem>>, vector<8x800xf32>,
    %c0_161 = arith.constant 0 : index
    %c217 = arith.constant 217 : index
    %138 = vector.load %arg10[%c0_161, %c217] : memref<8x1152xf32, #tpu.memory_space<vmem>>, vector<8x800xf32>
    %c144_162 = arith.constant 144 : index
    %c0_163 = arith.constant 0 : index
    %139 = vector.load %arg9[%c144_162, %c0_163] : memref<216x800xf32, #tpu.memory_space<vmem>>, vector<8x800xf32>
    tpu.vector_store %arg9[%c144_162, %c0_163], %138 {strides = array<i32>} : memref<216x800xf32, #tpu.memory_space<vmem>>, vector<8x800xf32>,
    %c0_164 = arith.constant 0 : index
    %c218 = arith.constant 218 : index
    %140 = vector.load %arg10[%c0_164, %c218] : memref<8x1152xf32, #tpu.memory_space<vmem>>, vector<8x800xf32>
    %c152_165 = arith.constant 152 : index
    %c0_166 = arith.constant 0 : index
    %141 = vector.load %arg9[%c152_165, %c0_166] : memref<216x800xf32, #tpu.memory_space<vmem>>, vector<8x800xf32>
    tpu.vector_store %arg9[%c152_165, %c0_166], %140 {strides = array<i32>} : memref<216x800xf32, #tpu.memory_space<vmem>>, vector<8x800xf32>,
    %c0_167 = arith.constant 0 : index
    %c219 = arith.constant 219 : index
    %142 = vector.load %arg10[%c0_167, %c219] : memref<8x1152xf32, #tpu.memory_space<vmem>>, vector<8x800xf32>
    %c160_168 = arith.constant 160 : index
    %c0_169 = arith.constant 0 : index
    %143 = vector.load %arg9[%c160_168, %c0_169] : memref<216x800xf32, #tpu.memory_space<vmem>>, vector<8x800xf32>
    tpu.vector_store %arg9[%c160_168, %c0_169], %142 {strides = array<i32>} : memref<216x800xf32, #tpu.memory_space<vmem>>, vector<8x800xf32>,
    %c0_170 = arith.constant 0 : index
    %c227 = arith.constant 227 : index
    %144 = vector.load %arg10[%c0_170, %c227] : memref<8x1152xf32, #tpu.memory_space<vmem>>, vector<8x800xf32>
    %c168_171 = arith.constant 168 : index
    %c0_172 = arith.constant 0 : index
    %145 = vector.load %arg9[%c168_171, %c0_172] : memref<216x800xf32, #tpu.memory_space<vmem>>, vector<8x800xf32>
    tpu.vector_store %arg9[%c168_171, %c0_172], %144 {strides = array<i32>} : memref<216x800xf32, #tpu.memory_space<vmem>>, vector<8x800xf32>,
    %c0_173 = arith.constant 0 : index
    %c228 = arith.constant 228 : index
    %146 = vector.load %arg10[%c0_173, %c228] : memref<8x1152xf32, #tpu.memory_space<vmem>>, vector<8x800xf32>
    %c176_174 = arith.constant 176 : index
    %c0_175 = arith.constant 0 : index
    %147 = vector.load %arg9[%c176_174, %c0_175] : memref<216x800xf32, #tpu.memory_space<vmem>>, vector<8x800xf32>
    tpu.vector_store %arg9[%c176_174, %c0_175], %146 {strides = array<i32>} : memref<216x800xf32, #tpu.memory_space<vmem>>, vector<8x800xf32>,
    %c0_176 = arith.constant 0 : index
    %c229 = arith.constant 229 : index
    %148 = vector.load %arg10[%c0_176, %c229] : memref<8x1152xf32, #tpu.memory_space<vmem>>, vector<8x800xf32>
    %c184_177 = arith.constant 184 : index
    %c0_178 = arith.constant 0 : index
    %149 = vector.load %arg9[%c184_177, %c0_178] : memref<216x800xf32, #tpu.memory_space<vmem>>, vector<8x800xf32>
    tpu.vector_store %arg9[%c184_177, %c0_178], %148 {strides = array<i32>} : memref<216x800xf32, #tpu.memory_space<vmem>>, vector<8x800xf32>,
    %c0_179 = arith.constant 0 : index
    %c237 = arith.constant 237 : index
    %150 = vector.load %arg10[%c0_179, %c237] : memref<8x1152xf32, #tpu.memory_space<vmem>>, vector<8x800xf32>
    %c192_180 = arith.constant 192 : index
    %c0_181 = arith.constant 0 : index
    %151 = vector.load %arg9[%c192_180, %c0_181] : memref<216x800xf32, #tpu.memory_space<vmem>>, vector<8x800xf32>
    tpu.vector_store %arg9[%c192_180, %c0_181], %150 {strides = array<i32>} : memref<216x800xf32, #tpu.memory_space<vmem>>, vector<8x800xf32>,
    %c0_182 = arith.constant 0 : index
    %c238 = arith.constant 238 : index
    %152 = vector.load %arg10[%c0_182, %c238] : memref<8x1152xf32, #tpu.memory_space<vmem>>, vector<8x800xf32>
    %c200_183 = arith.constant 200 : index
    %c0_184 = arith.constant 0 : index
    %153 = vector.load %arg9[%c200_183, %c0_184] : memref<216x800xf32, #tpu.memory_space<vmem>>, vector<8x800xf32>
    tpu.vector_store %arg9[%c200_183, %c0_184], %152 {strides = array<i32>} : memref<216x800xf32, #tpu.memory_space<vmem>>, vector<8x800xf32>,
    %c0_185 = arith.constant 0 : index
    %c239 = arith.constant 239 : index
    %154 = vector.load %arg10[%c0_185, %c239] : memref<8x1152xf32, #tpu.memory_space<vmem>>, vector<8x800xf32>
    %c208_186 = arith.constant 208 : index
    %c0_187 = arith.constant 0 : index
    %155 = vector.load %arg9[%c208_186, %c0_187] : memref<216x800xf32, #tpu.memory_space<vmem>>, vector<8x800xf32>
    tpu.vector_store %arg9[%c208_186, %c0_187], %154 {strides = array<i32>} : memref<216x800xf32, #tpu.memory_space<vmem>>, vector<8x800xf32>,
    %c0_188 = arith.constant 0 : index
    %c0_189 = arith.constant 0 : index
    %156 = vector.load %arg4[%c0_188, %c0_189] : memref<8x216xf32, #tpu.memory_space<vmem>>, vector<8x216xf32>
    %c0_190 = arith.constant 0 : index
    %c0_191 = arith.constant 0 : index
    %157 = vector.load %arg9[%c0_190, %c0_191] : memref<216x800xf32, #tpu.memory_space<vmem>>, vector<216x800xf32>
    %cst_192 = arith.constant dense<0.000000e+00> : vector<8x800xf32>
    %158 = tpu.matmul %156, %157, %cst_192 {dimension_numbers = #tpu.dot_dimension_numbers<[1], [0], [0], [1], [0, 0, 1, 1], [], []>} : vector<8x216xf32>, vector<216x800xf32>, vector<8x800xf32> -> vector<8x800xf32>
    %c1_193 = arith.constant 1 : index
    %c0_194 = arith.constant 0 : index
    %c0_195 = arith.constant 0 : index
    %159 = vector.load %arg6[%c1_193, %c0_194, %c0_195] : memref<3x8x1xf32, #tpu.memory_space<vmem>>, vector<1x8x1xf32>
    %160 = vector.shape_cast %159 : vector<1x8x1xf32> to vector<8x1xf32>
    %161 = vector.broadcast %160 : vector<8x1xf32> to vector<8x800xf32>
    %162 = arith.mulf %158, %161 : vector<8x800xf32>
    %c1_196 = arith.constant 1 : index
    %c0_197 = arith.constant 0 : index
    %c0_198 = arith.constant 0 : index
    %163 = vector.load %arg7[%c1_196, %c0_197, %c0_198] : memref<3x8x1xf32, #tpu.memory_space<vmem>>, vector<1x8x1xf32>
    %164 = vector.shape_cast %163 : vector<1x8x1xf32> to vector<8x1xf32>
    %165 = vector.broadcast %164 : vector<8x1xf32> to vector<8x800xf32>
    %166 = arith.addf %162, %165 : vector<8x800xf32>
    %cst_199 = arith.constant 0.000000e+00 : f32
    %167 = vector.broadcast %cst_199 : f32 to vector<8x800xf32>
    %168 = arith.maximumf %166, %167 : vector<8x800xf32>
    %c0_200 = arith.constant 0 : index
    %c0_201 = arith.constant 0 : index
    %169 = vector.load %arg5[%c0_200, %c0_201] : memref<8x4xf32, #tpu.memory_space<vmem>>, vector<8x4xf32>
    %c0_202 = arith.constant 0 : index
    %c0_203 = arith.constant 0 : index
    %c111_204 = arith.constant 111 : index
    %170 = vector.load %arg1[%c0_202, %c0_203, %c111_204] : memref<1x4x1024xf32, #tpu.memory_space<vmem>>, vector<1x4x800xf32>
    %171 = vector.shape_cast %170 : vector<1x4x800xf32> to vector<4x800xf32>
    %cst_205 = arith.constant dense<0.000000e+00> : vector<8x800xf32>
    %172 = tpu.matmul %169, %171, %cst_205 {dimension_numbers = #tpu.dot_dimension_numbers<[1], [0], [0], [1], [0, 0, 1, 1], [], []>} : vector<8x4xf32>, vector<4x800xf32>, vector<8x800xf32> -> vector<8x800xf32>
    %c2_206 = arith.constant 2 : index
    %c0_207 = arith.constant 0 : index
    %c0_208 = arith.constant 0 : index
    %173 = vector.load %arg6[%c2_206, %c0_207, %c0_208] : memref<3x8x1xf32, #tpu.memory_space<vmem>>, vector<1x8x1xf32>
    %174 = vector.shape_cast %173 : vector<1x8x1xf32> to vector<8x1xf32>
    %175 = vector.broadcast %174 : vector<8x1xf32> to vector<8x800xf32>
    %176 = arith.mulf %172, %175 : vector<8x800xf32>
    %c2_209 = arith.constant 2 : index
    %c0_210 = arith.constant 0 : index
    %c0_211 = arith.constant 0 : index
    %177 = vector.load %arg7[%c2_209, %c0_210, %c0_211] : memref<3x8x1xf32, #tpu.memory_space<vmem>>, vector<1x8x1xf32>
    %178 = vector.shape_cast %177 : vector<1x8x1xf32> to vector<8x1xf32>
    %179 = vector.broadcast %178 : vector<8x1xf32> to vector<8x800xf32>
    %180 = arith.addf %176, %179 : vector<8x800xf32>
    %cst_212 = arith.constant 0.000000e+00 : f32
    %181 = vector.broadcast %cst_212 : f32 to vector<8x800xf32>
    %182 = arith.maximumf %180, %181 : vector<8x800xf32>
    %183 = arith.addf %168, %182 : vector<8x800xf32>
    %c0_213 = arith.constant 0 : index
    %c0_214 = arith.constant 0 : index
    %c0_215 = arith.constant 0 : index
    %184 = vector.load %arg8[%c0_213, %c0_214, %c0_215] : memref<1x8x800xf32, #tpu.memory_space<vmem>>, vector<1x8x800xf32>
    %185 = vector.shape_cast %184 : vector<1x8x800xf32> to vector<8x800xf32>
    %186 = vector.shape_cast %183 : vector<8x800xf32> to vector<1x8x800xf32>
    tpu.vector_store %arg8[%c0_213, %c0_214, %c0_215], %186 {strides = array<i32>} : memref<1x8x800xf32, #tpu.memory_space<vmem>>, vector<1x8x800xf32>,
    return
  }
  func.func @transform_0(%arg0: i32) -> (i32, i32, i32) {
    %c0_i32 = arith.constant 0 : i32
    %c0_i32_0 = arith.constant 0 : i32
    %c0_i32_1 = arith.constant 0 : i32
    return %arg0, %c0_i32, %c0_i32_0 : i32, i32, i32
  }
  func.func @transform_1(%arg0: i32) -> (i32, i32) {
    %c0_i32 = arith.constant 0 : i32
    %c0_i32_0 = arith.constant 0 : i32
    %c0_i32_1 = arith.constant 0 : i32
    return %c0_i32, %c0_i32_0 : i32, i32
  }
  func.func @transform_2(%arg0: i32) -> (i32, i32) {
    %c0_i32 = arith.constant 0 : i32
    %c0_i32_0 = arith.constant 0 : i32
    %c0_i32_1 = arith.constant 0 : i32
    return %c0_i32, %c0_i32_0 : i32, i32
  }
  func.func @transform_3(%arg0: i32) -> (i32, i32) {
    %c0_i32 = arith.constant 0 : i32
    %c0_i32_0 = arith.constant 0 : i32
    %c0_i32_1 = arith.constant 0 : i32
    return %c0_i32, %c0_i32_0 : i32, i32
  }
  func.func @transform_4(%arg0: i32) -> (i32, i32) {
    %c0_i32 = arith.constant 0 : i32
    %c0_i32_0 = arith.constant 0 : i32
    %c0_i32_1 = arith.constant 0 : i32
    return %c0_i32, %c0_i32_0 : i32, i32
  }
  func.func @transform_5(%arg0: i32) -> (i32, i32, i32) {
    %c0_i32 = arith.constant 0 : i32
    %c0_i32_0 = arith.constant 0 : i32
    %c0_i32_1 = arith.constant 0 : i32
    %c0_i32_2 = arith.constant 0 : i32
    return %c0_i32, %c0_i32_0, %c0_i32_1 : i32, i32, i32
  }
  func.func @transform_6(%arg0: i32) -> (i32, i32, i32) {
    %c0_i32 = arith.constant 0 : i32
    %c0_i32_0 = arith.constant 0 : i32
    %c0_i32_1 = arith.constant 0 : i32
    %c0_i32_2 = arith.constant 0 : i32
    return %c0_i32, %c0_i32_0, %c0_i32_1 : i32, i32, i32
  }
  func.func @transform_7(%arg0: i32) -> (i32, i32, i32) {
    %c0_i32 = arith.constant 0 : i32
    %c0_i32_0 = arith.constant 0 : i32
    %c0_i32_1 = arith.constant 0 : i32
    return %arg0, %c0_i32, %c0_i32_0 : i32, i32, i32
  }
}

</mosaic_0001>

<llo_original>
// kernel: residual_block_forward.1
$region0: #{residual_block_forward.1}
  #allocation0 [shape = 'u32[]', space=smem, size = 0x4, offset = 0x4, fixed_abs, tag = 'smem constant byte address 0x4 - core index']
  #allocation1 [shape = 'u32[144,128]{1,0:T(1,128)}', space=vmem, size = 0x12000, scoped, tag = 'internal scratch']
  #allocation2 [shape = 'f32[216,800]{1,0:T(8,128)}', space=vmem, size = 0xbd000, scoped, tag = 'scratch operand']
  #allocation3 [shape = 'f32[8,1152]{1,0:T(8,128)}', space=vmem, size = 0x9000, scoped, tag = 'scratch operand']
  %s0 = inlined_call_operand.vmem [shape: f32[2,4,1024], index: 0, kind: input, shape index: {}]
  %s1 = inlined_call_operand.vmem [shape: f32[1,800], index: 1, kind: input, shape index: {}]
  %s2 = inlined_call_operand.vmem [shape: f32[8,216], index: 2, kind: input, shape index: {}]
  %s3 = inlined_call_operand.vmem [shape: f32[8,216], index: 3, kind: input, shape index: {}]
  %s4 = inlined_call_operand.vmem [shape: f32[8,4], index: 4, kind: input, shape index: {}]
  %s5 = inlined_call_operand.vmem [shape: f32[3,8,1], index: 5, kind: input, shape index: {}]
  %s6 = inlined_call_operand.vmem [shape: f32[3,8,1], index: 6, kind: input, shape index: {}]
  %s7 = inlined_call_operand.vmem [shape: f32[2,8,800], index: 7, kind: output, shape index: {}]
  %s8 = sld [smem:[#allocation0]]
  $region61: #{residual_block_forward.1} parent=0
    _
  %s10 = ssub.s32 1, %s8
  %s11 = scalar_select 0, %s10, %s8
  loop: start=0, step=1, limit=4
  $region2: #{residual_block_forward.1} parent=0 // loop_pre_header
    _
  $region3: #{residual_block_forward.1} parent=0 // loop_header
    %s13 = sphi 0, %s17
    %p14 = scmp.ge.s32.totalorder %s13, 4
    %s23 = sphi 0, %s25
    %s26 = sphi 0, %s23
    %s27 = sphi 0, %s26
    %s43 = sphi 0, %s27
    %s47 = sphi 0, %s47
    %s49 = sphi 0, %s47
    %s50 = sphi 0, %s49
    %s64 = sphi 0, %s50
    %s68 = sphi 0, %s68
    %s70 = sphi 0, %s68
    %s71 = sphi 0, %s70
    %s85 = sphi 0, %s71
    %s89 = sphi 0, %s89
    %s91 = sphi 0, %s89
    %s92 = sphi 0, %s91
    %s106 = sphi 0, %s92
    %s110 = sphi 0, %s110
    %s112 = sphi 0, %s110
    %s113 = sphi 0, %s112
    %s127 = sphi 0, %s113
    %s131 = sphi 0, %s131
    %s133 = sphi 0, %s131
    %s134 = sphi 0, %s133
    %s148 = sphi 0, %s134
    %s152 = sphi 0, %s152
    %s154 = sphi 0, %s152
    %s155 = sphi 0, %s154
    %s169 = sphi 0, %s155
    %s175 = sphi 0, %s177
    %s178 = sphi 0, %s175
    %s179 = sphi 0, %s178
    %s195 = sphi 0, %s179
  $region4: #{residual_block_forward.1} parent=0 // loop_header_branch
    %16 = sbr.rel (%p14) target = $region8
  $region5: #{residual_block_forward.1} parent=0 // loop_body
    %s18 = ssub.s32 %s13, 1
    %s19 = ssub.s32 %s13, 2
    %s20 = sadd.s32 %s13, 1
    %s21 = ssub.s32 %s13, %s20
    %p22 = scmp.eq.s32.totalorder %s21, 0
    %s24 = sadd.s32 %s23, 1
    %s25 = scalar_select %p22, %s23, %s24
    %p28 = pneg %p22
    %p29 = scmp.eq.s32.totalorder %s13, 1
    %p30 = por %p28, %p29
    %p31 = scmp.ne.s32.totalorder %s23, %s26
    %p32 = scmp.eq.s32.totalorder %s13, 0
    %p33 = por %p31, %p32
    %p34 = scmp.ne.s32.totalorder %s23, %s26
    %p35 = scmp.eq.s32.totalorder %s18, 1
    %p36 = por %p34, %p35
    %p37 = scmp.ne.s32.totalorder %s26, %s27
    %p38 = scmp.eq.s32.totalorder %s18, 0
    %p39 = por %p37, %p38
    %p40 = scmp.ne.s32.totalorder %s26, %s27
    %p41 = scmp.eq.s32.totalorder %s19, 1
    %p42 = por %p40, %p41
    %p44 = scmp.ne.s32.totalorder %s27, %s43
    %p45 = scmp.eq.s32.totalorder %s19, 0
    %p46 = por %p44, %p45
    %s48 = sadd.s32 %s47, 1
    %p51 = scmp.eq.s32.totalorder %s13, 1
    %p52 = scmp.ne.s32.totalorder %s47, %s49
    %p53 = scmp.eq.s32.totalorder %s13, 0
    %p54 = por %p52, %p53
    %p55 = scmp.ne.s32.totalorder %s47, %s49
    %p56 = scmp.eq.s32.totalorder %s18, 1
    %p57 = por %p55, %p56
    %p58 = scmp.ne.s32.totalorder %s49, %s50
    %p59 = scmp.eq.s32.totalorder %s18, 0
    %p60 = por %p58, %p59
    %p61 = scmp.ne.s32.totalorder %s49, %s50
    %p62 = scmp.eq.s32.totalorder %s19, 1
    %p63 = por %p61, %p62
    %p65 = scmp.ne.s32.totalorder %s50, %s64
    %p66 = scmp.eq.s32.totalorder %s19, 0
    %p67 = por %p65, %p66
    %s69 = sadd.s32 %s68, 1
    %p72 = scmp.eq.s32.totalorder %s13, 1
    %p73 = scmp.ne.s32.totalorder %s68, %s70
    %p74 = scmp.eq.s32.totalorder %s13, 0
    %p75 = por %p73, %p74
    %p76 = scmp.ne.s32.totalorder %s68, %s70
    %p77 = scmp.eq.s32.totalorder %s18, 1
    %p78 = por %p76, %p77
    %p79 = scmp.ne.s32.totalorder %s70, %s71
    %p80 = scmp.eq.s32.totalorder %s18, 0
    %p81 = por %p79, %p80
    %p82 = scmp.ne.s32.totalorder %s70, %s71
    %p83 = scmp.eq.s32.totalorder %s19, 1
    %p84 = por %p82, %p83
    %p86 = scmp.ne.s32.totalorder %s71, %s85
    %p87 = scmp.eq.s32.totalorder %s19, 0
    %p88 = por %p86, %p87
    %s90 = sadd.s32 %s89, 1
    %p93 = scmp.eq.s32.totalorder %s13, 1
    %p94 = scmp.ne.s32.totalorder %s89, %s91
    %p95 = scmp.eq.s32.totalorder %s13, 0
    %p96 = por %p94, %p95
    %p97 = scmp.ne.s32.totalorder %s89, %s91
    %p98 = scmp.eq.s32.totalorder %s18, 1
    %p99 = por %p97, %p98
    %p100 = scmp.ne.s32.totalorder %s91, %s92
    %p101 = scmp.eq.s32.totalorder %s18, 0
    %p102 = por %p100, %p101
    %p103 = scmp.ne.s32.totalorder %s91, %s92
    %p104 = scmp.eq.s32.totalorder %s19, 1
    %p105 = por %p103, %p104
    %p107 = scmp.ne.s32.totalorder %s92, %s106
    %p108 = scmp.eq.s32.totalorder %s19, 0
    %p109 = por %p107, %p108
    %s111 = sadd.s32 %s110, 1
    %p114 = scmp.eq.s32.totalorder %s13, 1
    %p115 = scmp.ne.s32.totalorder %s110, %s112
    %p116 = scmp.eq.s32.totalorder %s13, 0
    %p117 = por %p115, %p116
    %p118 = scmp.ne.s32.totalorder %s110, %s112
    %p119 = scmp.eq.s32.totalorder %s18, 1
    %p120 = por %p118, %p119
    %p121 = scmp.ne.s32.totalorder %s112, %s113
    %p122 = scmp.eq.s32.totalorder %s18, 0
    %p123 = por %p121, %p122
    %p124 = scmp.ne.s32.totalorder %s112, %s113
    %p125 = scmp.eq.s32.totalorder %s19, 1
    %p126 = por %p124, %p125
    %p128 = scmp.ne.s32.totalorder %s113, %s127
    %p129 = scmp.eq.s32.totalorder %s19, 0
    %p130 = por %p128, %p129
    %s132 = sadd.s32 %s131, 1
    %p135 = scmp.eq.s32.totalorder %s13, 1
    %p136 = scmp.ne.s32.totalorder %s131, %s133
    %p137 = scmp.eq.s32.totalorder %s13, 0
    %p138 = por %p136, %p137
    %p139 = scmp.ne.s32.totalorder %s131, %s133
    %p140 = scmp.eq.s32.totalorder %s18, 1
    %p141 = por %p139, %p140
    %p142 = scmp.ne.s32.totalorder %s133, %s134
    %p143 = scmp.eq.s32.totalorder %s18, 0
    %p144 = por %p142, %p143
    %p145 = scmp.ne.s32.totalorder %s133, %s134
    %p146 = scmp.eq.s32.totalorder %s19, 1
    %p147 = por %p145, %p146
    %p149 = scmp.ne.s32.totalorder %s134, %s148
    %p150 = scmp.eq.s32.totalorder %s19, 0
    %p151 = por %p149, %p150
    %s153 = sadd.s32 %s152, 1
    %p156 = scmp.eq.s32.totalorder %s13, 1
    %p157 = scmp.ne.s32.totalorder %s152, %s154
    %p158 = scmp.eq.s32.totalorder %s13, 0
    %p159 = por %p157, %p158
    %p160 = scmp.ne.s32.totalorder %s152, %s154
    %p161 = scmp.eq.s32.totalorder %s18, 1
    %p162 = por %p160, %p161
    %p163 = scmp.ne.s32.totalorder %s154, %s155
    %p164 = scmp.eq.s32.totalorder %s18, 0
    %p165 = por %p163, %p164
    %p166 = scmp.ne.s32.totalorder %s154, %s155
    %p167 = scmp.eq.s32.totalorder %s19, 1
    %p168 = por %p166, %p167
    %p170 = scmp.ne.s32.totalorder %s155, %s169
    %p171 = scmp.eq.s32.totalorder %s19, 0
    %p172 = por %p170, %p171
    %s173 = ssub.s32 %s13, %s20
    %p174 = scmp.eq.s32.totalorder %s173, 0
    %s176 = sadd.s32 %s175, 1
    %s177 = scalar_select %p174, %s175, %s176
    %p180 = pneg %p174
    %p181 = scmp.eq.s32.totalorder %s13, 1
    %p182 = por %p180, %p181
    %p183 = scmp.ne.s32.totalorder %s175, %s178
    %p184 = scmp.eq.s32.totalorder %s13, 0
    %p185 = por %p183, %p184
    %p186 = scmp.ne.s32.totalorder %s175, %s178
    %p187 = scmp.eq.s32.totalorder %s18, 1
    %p188 = por %p186, %p187
    %p189 = scmp.ne.s32.totalorder %s178, %s179
    %p190 = scmp.eq.s32.totalorder %s18, 0
    %p191 = por %p189, %p190
    %p192 = scmp.ne.s32.totalorder %s178, %s179
    %p193 = scmp.eq.s32.totalorder %s19, 1
    %p194 = por %p192, %p193
    %p196 = scmp.ne.s32.totalorder %s179, %s195
    %p197 = scmp.eq.s32.totalorder %s19, 0
    %p198 = por %p196, %p197
    %p199 = scmp.le.s32.totalorder 1, %s13
    %p200 = scmp.lt.s32.totalorder %s13, 3
    %p201 = pnand %p199, %p200
    %p202 = pneg %p201
    // Predicated region
    $region9: #{residual_block_forward.1} parent=5 // pred_check
      _
    $region10: #{residual_block_forward.1} parent=5 // pred_check_branch
      %204 = sbr.rel (%p201) target = $region12
    $region11: #{residual_block_forward.1} parent=5 // pred_region
      %s205 = ssub.s32 %s13, 1
      // Predicated region
      $region13: #{residual_block_forward.1} parent=11 // pred_check
        %p206 = pneg %p60
      $region14: #{residual_block_forward.1} parent=11 // pred_check_branch
        %208 = sbr.rel (%p206) target = $region16
      $region15: #{residual_block_forward.1} parent=11 // pred_region
        _
      $region16: #{residual_block_forward.1} parent=11 // pred_fallthru
        _
      // Predicated region
      $region17: #{residual_block_forward.1} parent=11 // pred_check
        %p209 = pneg %p81
      $region18: #{residual_block_forward.1} parent=11 // pred_check_branch
        %211 = sbr.rel (%p209) target = $region20
      $region19: #{residual_block_forward.1} parent=11 // pred_region
        _
      $region20: #{residual_block_forward.1} parent=11 // pred_fallthru
        _
      // Predicated region
      $region21: #{residual_block_forward.1} parent=11 // pred_check
        %p212 = pneg %p102
      $region22: #{residual_block_forward.1} parent=11 // pred_check_branch
        %214 = sbr.rel (%p212) target = $region24
      $region23: #{residual_block_forward.1} parent=11 // pred_region
        _
      $region24: #{residual_block_forward.1} parent=11 // pred_fallthru
        _
      // Predicated region
      $region25: #{residual_block_forward.1} parent=11 // pred_check
        %p215 = pneg %p123
      $region26: #{residual_block_forward.1} parent=11 // pred_check_branch
        %217 = sbr.rel (%p215) target = $region28
      $region27: #{residual_block_forward.1} parent=11 // pred_region
        _
      $region28: #{residual_block_forward.1} parent=11 // pred_fallthru
        _
      // Predicated region
      $region29: #{residual_block_forward.1} parent=11 // pred_check
        %p218 = pneg %p144
      $region30: #{residual_block_forward.1} parent=11 // pred_check_branch
        %220 = sbr.rel (%p218) target = $region32
      $region31: #{residual_block_forward.1} parent=11 // pred_region
        _
      $region32: #{residual_block_forward.1} parent=11 // pred_fallthru
        _
      // Predicated region
      $region33: #{residual_block_forward.1} parent=11 // pred_check
        %p221 = pneg %p165
      $region34: #{residual_block_forward.1} parent=11 // pred_check_branch
        %223 = sbr.rel (%p221) target = $region36
      $region35: #{residual_block_forward.1} parent=11 // pred_region
        _
      $region36: #{residual_block_forward.1} parent=11 // pred_fallthru
        _
    $region12: #{residual_block_forward.1} parent=5 // pred_fallthru
      _
    %p224 = scmp.lt.s32.totalorder %s13, 2
    // Predicated region
    $region37: #{residual_block_forward.1} parent=5 // pred_check
      %p225 = pneg %p224
    $region38: #{residual_block_forward.1} parent=5 // pred_check_branch
      %227 = sbr.rel (%p225) target = $region40
    $region39: #{residual_block_forward.1} parent=5 // pred_region
      // Predicated region
      $region41: #{residual_block_forward.1} parent=39 // pred_check
        %p228 = pneg %p33
      $region42: #{residual_block_forward.1} parent=39 // pred_check_branch
        %230 = sbr.rel (%p228) target = $region44
      $region43: #{residual_block_forward.1} parent=39 // pred_region
        %p231 = scmp.lt.s32.totalorder %s13, 1
        %s232 = scalar_select %p231, %s13, 1
        %s233 = smul.addr %s232, 8
        %s234 = smul.addr %s233, 4
        %s235 = scalar_lea.vmem %s0, %s234
      $region44: #{residual_block_forward.1} parent=39 // pred_fallthru
        _
    $region40: #{residual_block_forward.1} parent=5 // pred_fallthru
      _
    %p236 = scmp.le.s32.totalorder 1, %s13
    %p237 = scmp.lt.s32.totalorder %s13, 3
    %p238 = pnand %p236, %p237
    %p239 = pneg %p238
    // Predicated region
    $region45: #{residual_block_forward.1} parent=5 // pred_check
      _
    $region46: #{residual_block_forward.1} parent=5 // pred_check_branch
      %241 = sbr.rel (%p238) target = $region48
    $region47: #{residual_block_forward.1} parent=5 // pred_region
      %s242 = ssub.s32 %s13, 1
      %p243 = scmp.lt.s32.totalorder %s18, 1
      %s244 = scalar_select %p243, %s18, 1
      %s245 = smul.addr %s244, 8
      %s246 = smul.addr %s245, 4
      %s247 = scalar_lea.vmem %s0, %s246
      %p248 = pneg %p39
      %p249 = pneg %p36
      %p250 = pneg %p60
      %p251 = pneg %p57
      %p252 = pneg %p81
      %p253 = pneg %p78
      %p254 = pneg %p102
      %p255 = pneg %p99
      %p256 = pneg %p123
      %p257 = pneg %p120
      %p258 = pneg %p144
      %p259 = pneg %p141
      %p260 = pneg %p165
      %p261 = pneg %p162
      %p262 = pneg %p191
      %p263 = pneg %p188
      %p264 = scmp.lt.s32.totalorder %s18, 1
      %s265 = scalar_select %p264, %s18, 1
      %s266 = smul.addr %s265, 7
      %s267 = smul.addr %s266, 8
      %s268 = scalar_lea.vmem %s7, %s267
      %p269 = scmp.lt.s32.totalorder %s18, 1
      %s270 = scalar_select %p269, %s18, 1
      %s271 = smul.addr %s270, 8
      %s272 = smul.addr %s271, 4
      %s273 = scalar_lea.vmem %s0, %s272
      %p274 = scmp.lt.s32.totalorder %s18, 1
      %s275 = scalar_select %p274, %s18, 1
      %s276 = smul.addr %s275, 7
      %s277 = smul.addr %s276, 8
      %s278 = scalar_lea.vmem %s7, %s277
      %v279 = vld [vmem:[%s1] sm:$0x7f]
      %280 = vst [vmem:[#allocation2] sm:$0xff] 0.0
      %281 = vst [vmem:[#allocation2 + $0x8] sm:$0xff] 0.0
      %282 = vst [vmem:[#allocation2 + $0x10] sm:$0xff] 0.0
      %283 = vst [vmem:[#allocation2 + $0x18] sm:$0xff] 0.0
      %284 = vst [vmem:[#allocation2 + $0x20] sm:$0xff] 0.0
      %285 = vst [vmem:[#allocation2 + $0x28] sm:$0xff] 0.0
      %vm286 = vcmask 261120
      %287 = vst.msk [vmem:[#allocation2 + $0x30] sm:$0xff] %vm286, 0.0
      %288 = vst [vmem:[#allocation2 + $0x38] sm:$0xff] 0.0
      %289 = vst [vmem:[#allocation2 + $0x40] sm:$0xff] 0.0
      %290 = vst [vmem:[#allocation2 + $0x48] sm:$0xff] 0.0
      %291 = vst [vmem:[#allocation2 + $0x50] sm:$0xff] 0.0
      %292 = vst [vmem:[#allocation2 + $0x58] sm:$0xff] 0.0
      %293 = vst [vmem:[#allocation2 + $0x60] sm:$0xff] 0.0
      %294 = vst.msk [vmem:[#allocation2 + $0x68] sm:$0xff] %vm286, 0.0
      %295 = vst [vmem:[#allocation2 + $0x70] sm:$0xff] 0.0
      %296 = vst [vmem:[#allocation2 + $0x78] sm:$0xff] 0.0
      %297 = vst [vmem:[#allocation2 + $0x80] sm:$0xff] 0.0
      %298 = vst [vmem:[#allocation2 + $0x88] sm:$0xff] 0.0
      %299 = vst [vmem:[#allocation2 + $0x90] sm:$0xff] 0.0
      %300 = vst [vmem:[#allocation2 + $0x98] sm:$0xff] 0.0
      %301 = vst.msk [vmem:[#allocation2 + $0xa0] sm:$0xff] %vm286, 0.0
      %302 = vst [vmem:[#allocation2 + $0xa8] sm:$0xff] 0.0
      %303 = vst [vmem:[#allocation2 + $0xb0] sm:$0xff] 0.0
      %304 = vst [vmem:[#allocation2 + $0xb8] sm:$0xff] 0.0
      %305 = vst [vmem:[#allocation2 + $0xc0] sm:$0xff] 0.0
      %306 = vst [vmem:[#allocation2 + $0xc8] sm:$0xff] 0.0
      %307 = vst [vmem:[#allocation2 + $0xd0] sm:$0xff] 0.0
      %308 = vst.msk [vmem:[#allocation2 + $0xd8] sm:$0xff] %vm286, 0.0
      %309 = vst [vmem:[#allocation2 + $0xe0] sm:$0xff] 0.0
      %310 = vst [vmem:[#allocation2 + $0xe8] sm:$0xff] 0.0
      %311 = vst [vmem:[#allocation2 + $0xf0] sm:$0xff] 0.0
      %312 = vst [vmem:[#allocation2 + $0xf8] sm:$0xff] 0.0
      %313 = vst [vmem:[#allocation2 + $0x100] sm:$0xff] 0.0
      %314 = vst [vmem:[#allocation2 + $0x108] sm:$0xff] 0.0
      %315 = vst.msk [vmem:[#allocation2 + $0x110] sm:$0xff] %vm286, 0.0
      %316 = vst [vmem:[#allocation2 + $0x118] sm:$0xff] 0.0
      %317 = vst [vmem:[#allocation2 + $0x120] sm:$0xff] 0.0
      %318 = vst [vmem:[#allocation2 + $0x128] sm:$0xff] 0.0
      %319 = vst [vmem:[#allocation2 + $0x130] sm:$0xff] 0.0
      %320 = vst [vmem:[#allocation2 + $0x138] sm:$0xff] 0.0
      %321 = vst [vmem:[#allocation2 + $0x140] sm:$0xff] 0.0
      %322 = vst.msk [vmem:[#allocation2 + $0x148] sm:$0xff] %vm286, 0.0
      %323 = vst [vmem:[#allocation2 + $0x150] sm:$0xff] 0.0
      %324 = vst [vmem:[#allocation2 + $0x158] sm:$0xff] 0.0
      %325 = vst [vmem:[#allocation2 + $0x160] sm:$0xff] 0.0
      %326 = vst [vmem:[#allocation2 + $0x168] sm:$0xff] 0.0
      %327 = vst [vmem:[#allocation2 + $0x170] sm:$0xff] 0.0
      %328 = vst [vmem:[#allocation2 + $0x178] sm:$0xff] 0.0
      %329 = vst.msk [vmem:[#allocation2 + $0x180] sm:$0xff] %vm286, 0.0
      %330 = vst [vmem:[#allocation2 + $0x188] sm:$0xff] 0.0
      %331 = vst [vmem:[#allocation2 + $0x190] sm:$0xff] 0.0
      %332 = vst [vmem:[#allocation2 + $0x198] sm:$0xff] 0.0
      %333 = vst [vmem:[#allocation2 + $0x1a0] sm:$0xff] 0.0
      %334 = vst [vmem:[#allocation2 + $0x1a8] sm:$0xff] 0.0
      %335 = vst [vmem:[#allocation2 + $0x1b0] sm:$0xff] 0.0
      %336 = vst.msk [vmem:[#allocation2 + $0x1b8] sm:$0xff] %vm286, 0.0
      %337 = vst [vmem:[#allocation2 + $0x1c0] sm:$0xff] 0.0
      %338 = vst [vmem:[#allocation2 + $0x1c8] sm:$0xff] 0.0
      %339 = vst [vmem:[#allocation2 + $0x1d0] sm:$0xff] 0.0
      %340 = vst [vmem:[#allocation2 + $0x1d8] sm:$0xff] 0.0
      %341 = vst [vmem:[#allocation2 + $0x1e0] sm:$0xff] 0.0
      %342 = vst [vmem:[#allocation2 + $0x1e8] sm:$0xff] 0.0
      %343 = vst.msk [vmem:[#allocation2 + $0x1f0] sm:$0xff] %vm286, 0.0
      %344 = vst [vmem:[#allocation2 + $0x1f8] sm:$0xff] 0.0
      %345 = vst [vmem:[#allocation2 + $0x200] sm:$0xff] 0.0
      %346 = vst [vmem:[#allocation2 + $0x208] sm:$0xff] 0.0
      %347 = vst [vmem:[#allocation2 + $0x210] sm:$0xff] 0.0
      %348 = vst [vmem:[#allocation2 + $0x218] sm:$0xff] 0.0
      %349 = vst [vmem:[#allocation2 + $0x220] sm:$0xff] 0.0
      %350 = vst.msk [vmem:[#allocation2 + $0x228] sm:$0xff] %vm286, 0.0
      %351 = vst [vmem:[#allocation2 + $0x230] sm:$0xff] 0.0
      %352 = vst [vmem:[#allocation2 + $0x238] sm:$0xff] 0.0
      %353 = vst [vmem:[#allocation2 + $0x240] sm:$0xff] 0.0
      %354 = vst [vmem:[#allocation2 + $0x248] sm:$0xff] 0.0
      %355 = vst [vmem:[#allocation2 + $0x250] sm:$0xff] 0.0
      %356 = vst [vmem:[#allocation2 + $0x258] sm:$0xff] 0.0
      %357 = vst.msk [vmem:[#allocation2 + $0x260] sm:$0xff] %vm286, 0.0
      %358 = vst [vmem:[#allocation2 + $0x268] sm:$0xff] 0.0
      %359 = vst [vmem:[#allocation2 + $0x270] sm:$0xff] 0.0
      %360 = vst [vmem:[#allocation2 + $0x278] sm:$0xff] 0.0
      %361 = vst [vmem:[#allocation2 + $0x280] sm:$0xff] 0.0
      %362 = vst [vmem:[#allocation2 + $0x288] sm:$0xff] 0.0
      %363 = vst [vmem:[#allocation2 + $0x290] sm:$0xff] 0.0
      %364 = vst.msk [vmem:[#allocation2 + $0x298] sm:$0xff] %vm286, 0.0
      %365 = vst [vmem:[#allocation2 + $0x2a0] sm:$0xff] 0.0
      %366 = vst [vmem:[#allocation2 + $0x2a8] sm:$0xff] 0.0
      %367 = vst [vmem:[#allocation2 + $0x2b0] sm:$0xff] 0.0
      %368 = vst [vmem:[#allocation2 + $0x2b8] sm:$0xff] 0.0
      %369 = vst [vmem:[#allocation2 + $0x2c0] sm:$0xff] 0.0
      %370 = vst [vmem:[#allocation2 + $0x2c8] sm:$0xff] 0.0
      %371 = vst.msk [vmem:[#allocation2 + $0x2d0] sm:$0xff] %vm286, 0.0
      %372 = vst [vmem:[#allocation2 + $0x2d8] sm:$0xff] 0.0
      %373 = vst [vmem:[#allocation2 + $0x2e0] sm:$0xff] 0.0
      %374 = vst [vmem:[#allocation2 + $0x2e8] sm:$0xff] 0.0
      %375 = vst [vmem:[#allocation2 + $0x2f0] sm:$0xff] 0.0
      %376 = vst [vmem:[#allocation2 + $0x2f8] sm:$0xff] 0.0
      %377 = vst [vmem:[#allocation2 + $0x300] sm:$0xff] 0.0
      %378 = vst.msk [vmem:[#allocation2 + $0x308] sm:$0xff] %vm286, 0.0
      %379 = vst [vmem:[#allocation2 + $0x310] sm:$0xff] 0.0
      %380 = vst [vmem:[#allocation2 + $0x318] sm:$0xff] 0.0
      %381 = vst [vmem:[#allocation2 + $0x320] sm:$0xff] 0.0
      %382 = vst [vmem:[#allocation2 + $0x328] sm:$0xff] 0.0
      %383 = vst [vmem:[#allocation2 + $0x330] sm:$0xff] 0.0
      %384 = vst [vmem:[#allocation2 + $0x338] sm:$0xff] 0.0
      %385 = vst.msk [vmem:[#allocation2 + $0x340] sm:$0xff] %vm286, 0.0
      %386 = vst [vmem:[#allocation2 + $0x348] sm:$0xff] 0.0
      %387 = vst [vmem:[#allocation2 + $0x350] sm:$0xff] 0.0
      %388 = vst [vmem:[#allocation2 + $0x358] sm:$0xff] 0.0
      %389 = vst [vmem:[#allocation2 + $0x360] sm:$0xff] 0.0
      %390 = vst [vmem:[#allocation2 + $0x368] sm:$0xff] 0.0
      %391 = vst [vmem:[#allocation2 + $0x370] sm:$0xff] 0.0
      %392 = vst.msk [vmem:[#allocation2 + $0x378] sm:$0xff] %vm286, 0.0
      %393 = vst [vmem:[#allocation2 + $0x380] sm:$0xff] 0.0
      %394 = vst [vmem:[#allocation2 + $0x388] sm:$0xff] 0.0
      %395 = vst [vmem:[#allocation2 + $0x390] sm:$0xff] 0.0
      %396 = vst [vmem:[#allocation2 + $0x398] sm:$0xff] 0.0
      %397 = vst [vmem:[#allocation2 + $0x3a0] sm:$0xff] 0.0
      %398 = vst [vmem:[#allocation2 + $0x3a8] sm:$0xff] 0.0
      %399 = vst.msk [vmem:[#allocation2 + $0x3b0] sm:$0xff] %vm286, 0.0
      %400 = vst [vmem:[#allocation2 + $0x3b8] sm:$0xff] 0.0
      %401 = vst [vmem:[#allocation2 + $0x3c0] sm:$0xff] 0.0
      %402 = vst [vmem:[#allocation2 + $0x3c8] sm:$0xff] 0.0
      %403 = vst [vmem:[#allocation2 + $0x3d0] sm:$0xff] 0.0
      %404 = vst [vmem:[#allocation2 + $0x3d8] sm:$0xff] 0.0
      %405 = vst [vmem:[#allocation2 + $0x3e0] sm:$0xff] 0.0
      %406 = vst.msk [vmem:[#allocation2 + $0x3e8] sm:$0xff] %vm286, 0.0
      %407 = vst [vmem:[#allocation2 + $0x3f0] sm:$0xff] 0.0
      %408 = vst [vmem:[#allocation2 + $0x3f8] sm:$0xff] 0.0
      %409 = vst [vmem:[#allocation2 + $0x400] sm:$0xff] 0.0
      %410 = vst [vmem:[#allocation2 + $0x408] sm:$0xff] 0.0
      %411 = vst [vmem:[#allocation2 + $0x410] sm:$0xff] 0.0
      %412 = vst [vmem:[#allocation2 + $0x418] sm:$0xff] 0.0
      %413 = vst.msk [vmem:[#allocation2 + $0x420] sm:$0xff] %vm286, 0.0
      %414 = vst [vmem:[#allocation2 + $0x428] sm:$0xff] 0.0
      %415 = vst [vmem:[#allocation2 + $0x430] sm:$0xff] 0.0
      %416 = vst [vmem:[#allocation2 + $0x438] sm:$0xff] 0.0
      %417 = vst [vmem:[#allocation2 + $0x440] sm:$0xff] 0.0
      %418 = vst [vmem:[#allocation2 + $0x448] sm:$0xff] 0.0
      %419 = vst [vmem:[#allocation2 + $0x450] sm:$0xff] 0.0
      %420 = vst.msk [vmem:[#allocation2 + $0x458] sm:$0xff] %vm286, 0.0
      %421 = vst [vmem:[#allocation2 + $0x460] sm:$0xff] 0.0
      %422 = vst [vmem:[#allocation2 + $0x468] sm:$0xff] 0.0
      %423 = vst [vmem:[#allocation2 + $0x470] sm:$0xff] 0.0
      %424 = vst [vmem:[#allocation2 + $0x478] sm:$0xff] 0.0
      %425 = vst [vmem:[#allocation2 + $0x480] sm:$0xff] 0.0
      %426 = vst [vmem:[#allocation2 + $0x488] sm:$0xff] 0.0
      %427 = vst.msk [vmem:[#allocation2 + $0x490] sm:$0xff] %vm286, 0.0
      %428 = vst [vmem:[#allocation2 + $0x498] sm:$0xff] 0.0
      %429 = vst [vmem:[#allocation2 + $0x4a0] sm:$0xff] 0.0
      %430 = vst [vmem:[#allocation2 + $0x4a8] sm:$0xff] 0.0
      %431 = vst [vmem:[#allocation2 + $0x4b0] sm:$0xff] 0.0
      %432 = vst [vmem:[#allocation2 + $0x4b8] sm:$0xff] 0.0
      %433 = vst [vmem:[#allocation2 + $0x4c0] sm:$0xff] 0.0
      %434 = vst.msk [vmem:[#allocation2 + $0x4c8] sm:$0xff] %vm286, 0.0
      %435 = vst [vmem:[#allocation2 + $0x4d0] sm:$0xff] 0.0
      %436 = vst [vmem:[#allocation2 + $0x4d8] sm:$0xff] 0.0
      %437 = vst [vmem:[#allocation2 + $0x4e0] sm:$0xff] 0.0
      %438 = vst [vmem:[#allocation2 + $0x4e8] sm:$0xff] 0.0
      %439 = vst [vmem:[#allocation2 + $0x4f0] sm:$0xff] 0.0
      %440 = vst [vmem:[#allocation2 + $0x4f8] sm:$0xff] 0.0
      %441 = vst.msk [vmem:[#allocation2 + $0x500] sm:$0xff] %vm286, 0.0
      %442 = vst [vmem:[#allocation2 + $0x508] sm:$0xff] 0.0
      %443 = vst [vmem:[#allocation2 + $0x510] sm:$0xff] 0.0
      %444 = vst [vmem:[#allocation2 + $0x518] sm:$0xff] 0.0
      %445 = vst [vmem:[#allocation2 + $0x520] sm:$0xff] 0.0
      %446 = vst [vmem:[#allocation2 + $0x528] sm:$0xff] 0.0
      %447 = vst [vmem:[#allocation2 + $0x530] sm:$0xff] 0.0
      %448 = vst.msk [vmem:[#allocation2 + $0x538] sm:$0xff] %vm286, 0.0
      %449 = vst [vmem:[#allocation2 + $0x540] sm:$0xff] 0.0
      %450 = vst [vmem:[#allocation2 + $0x548] sm:$0xff] 0.0
      %451 = vst [vmem:[#allocation2 + $0x550] sm:$0xff] 0.0
      %452 = vst [vmem:[#allocation2 + $0x558] sm:$0xff] 0.0
      %453 = vst [vmem:[#allocation2 + $0x560] sm:$0xff] 0.0
      %454 = vst [vmem:[#allocation2 + $0x568] sm:$0xff] 0.0
      %455 = vst.msk [vmem:[#allocation2 + $0x570] sm:$0xff] %vm286, 0.0
      %456 = vst [vmem:[#allocation2 + $0x578] sm:$0xff] 0.0
      %457 = vst [vmem:[#allocation2 + $0x580] sm:$0xff] 0.0
      %458 = vst [vmem:[#allocation2 + $0x588] sm:$0xff] 0.0
      %459 = vst [vmem:[#allocation2 + $0x590] sm:$0xff] 0.0
      %460 = vst [vmem:[#allocation2 + $0x598] sm:$0xff] 0.0
      %461 = vst [vmem:[#allocation2 + $0x5a0] sm:$0xff] 0.0
      %462 = vst.msk [vmem:[#allocation2 + $0x5a8] sm:$0xff] %vm286, 0.0
      %463 = vst [vmem:[#allocation2 + $0x5b0] sm:$0xff] 0.0
      %464 = vst [vmem:[#allocation2 + $0x5b8] sm:$0xff] 0.0
      %465 = vst [vmem:[#allocation2 + $0x5c0] sm:$0xff] 0.0
      %466 = vst [vmem:[#allocation2 + $0x5c8] sm:$0xff] 0.0
      %467 = vst [vmem:[#allocation2 + $0x5d0] sm:$0xff] 0.0
      %468 = vst [vmem:[#allocation2 + $0x5d8] sm:$0xff] 0.0
      %469 = vst.msk [vmem:[#allocation2 + $0x5e0] sm:$0xff] %vm286, 0.0
      %v470 = vld [vmem:[%s273] sm:$0xff]
      %v471 = vld [vmem:[%s273 + $0x8] sm:$0xff]
      %v472 = vld [vmem:[%s273 + $0x10] sm:$0xff]
      %v473 = vld [vmem:[%s273 + $0x18] sm:$0xf]
      %v477 = vcombine.high %v470, %v470
      %v478 = vcombine.high %v471, %v471
      %v479 = vcombine.high %v472, %v472
      %483 = vst [vmem:[#allocation2] sm:$0xf] %v470
      %484 = vst [vmem:[#allocation2 + $0x8] sm:$0xf] %v477
      %485 = vst [vmem:[#allocation2 + $0x10] sm:$0xf] %v471
      %486 = vst [vmem:[#allocation2 + $0x18] sm:$0xf] %v478
      %487 = vst [vmem:[#allocation2 + $0x20] sm:$0xf] %v472
      %488 = vst [vmem:[#allocation2 + $0x28] sm:$0xf] %v479
      %vm489 = vcmask 257024
      %490 = vst.msk [vmem:[#allocation2 + $0x30] sm:$0xf] %vm489, %v473
      %v491 = vld [vmem:[%s273] sm:$0xff]
      %v492 = vld [vmem:[%s273 + $0x8] sm:$0xff]
      %v493 = vld [vmem:[%s273 + $0x10] sm:$0xff]
      %v494 = vld [vmem:[%s273 + $0x18] sm:$0xf]
      %v499 = vcombine.high %v491, %v491
      %v500 = vcombine.high %v492, %v492
      %v501 = vcombine.high %v493, %v493
      %502 = vrot.lane.b32.xlu0 %v491, 127
      %v503 = vpop.permute.xlu0 %502
      %504 = vrot.lane.b32.xlu0 %v499, 127
      %v505 = vpop.permute.xlu0 %504
      %506 = vrot.lane.b32.xlu0 %v492, 127
      %v507 = vpop.permute.xlu0 %506
      %508 = vrot.lane.b32.xlu0 %v500, 127
      %v509 = vpop.permute.xlu0 %508
      %510 = vrot.lane.b32.xlu0 %v493, 127
      %v511 = vpop.permute.xlu0 %510
      %512 = vrot.lane.b32.xlu0 %v501, 127
      %v513 = vpop.permute.xlu0 %512
      %514 = vrot.lane.b32.xlu0 %v494, 127
      %v515 = vpop.permute.xlu0 %514
      %vm516 = vcmask 1039360
      %v517 = vsel %vm516, %v503, %v505
      %v518 = vsel %vm516, %v505, %v507
      %v519 = vsel %vm516, %v507, %v509
      %v520 = vsel %vm516, %v509, %v511
      %v521 = vsel %vm516, %v511, %v513
      %v522 = vsel %vm516, %v513, %v515
      %530 = vst [vmem:[#allocation2 + $0x38] sm:$0xf] %v517
      %531 = vst [vmem:[#allocation2 + $0x40] sm:$0xf] %v518
      %532 = vst [vmem:[#allocation2 + $0x48] sm:$0xf] %v519
      %533 = vst [vmem:[#allocation2 + $0x50] sm:$0xf] %v520
      %534 = vst [vmem:[#allocation2 + $0x58] sm:$0xf] %v521
      %535 = vst [vmem:[#allocation2 + $0x60] sm:$0xf] %v522
      %536 = vst.msk [vmem:[#allocation2 + $0x68] sm:$0xf] %vm489, %v515
      %v537 = vld [vmem:[%s273] sm:$0xff]
      %v538 = vld [vmem:[%s273 + $0x8] sm:$0xff]
      %v539 = vld [vmem:[%s273 + $0x10] sm:$0xff]
      %v540 = vld [vmem:[%s273 + $0x18] sm:$0xf]
      %v545 = vcombine.high %v537, %v537
      %v546 = vcombine.high %v538, %v538
      %v547 = vcombine.high %v539, %v539
      %548 = vrot.lane.b32.xlu0 %v537, 126
      %v549 = vpop.permute.xlu0 %548
      %550 = vrot.lane.b32.xlu0 %v545, 126
      %v551 = vpop.permute.xlu0 %550
      %552 = vrot.lane.b32.xlu0 %v538, 126
      %v553 = vpop.permute.xlu0 %552
      %554 = vrot.lane.b32.xlu0 %v546, 126
      %v555 = vpop.permute.xlu0 %554
      %556 = vrot.lane.b32.xlu0 %v539, 126
      %v557 = vpop.permute.xlu0 %556
      %558 = vrot.lane.b32.xlu0 %v547, 126
      %v559 = vpop.permute.xlu0 %558
      %560 = vrot.lane.b32.xlu0 %v540, 126
      %v561 = vpop.permute.xlu0 %560
      %vm562 = vcmask 1031168
      %v563 = vsel %vm562, %v549, %v551
      %v564 = vsel %vm562, %v551, %v553
      %v565 = vsel %vm562, %v553, %v555
      %v566 = vsel %vm562, %v555, %v557
      %v567 = vsel %vm562, %v557, %v559
      %v568 = vsel %vm562, %v559, %v561
      %576 = vst [vmem:[#allocation2 + $0x70] sm:$0xf] %v563
      %577 = vst [vmem:[#allocation2 + $0x78] sm:$0xf] %v564
      %578 = vst [vmem:[#allocation2 + $0x80] sm:$0xf] %v565
      %579 = vst [vmem:[#allocation2 + $0x88] sm:$0xf] %v566
      %580 = vst [vmem:[#allocation2 + $0x90] sm:$0xf] %v567
      %581 = vst [vmem:[#allocation2 + $0x98] sm:$0xf] %v568
      %582 = vst.msk [vmem:[#allocation2 + $0xa0] sm:$0xf] %vm489, %v561
      %v583 = vld [vmem:[%s273] sm:$0xff]
      %v584 = vld [vmem:[%s273 + $0x8] sm:$0xff]
      %v585 = vld [vmem:[%s273 + $0x10] sm:$0xff]
      %v586 = vld [vmem:[%s273 + $0x18] sm:$0xf]
      %v591 = vcombine.high %v583, %v583
      %v592 = vcombine.high %v584, %v584
      %v593 = vcombine.high %v585, %v585
      %594 = vrot.lane.b32.xlu0 %v583, 118
      %v595 = vpop.permute.xlu0 %594
      %596 = vrot.lane.b32.xlu0 %v591, 118
      %v597 = vpop.permute.xlu0 %596
      %598 = vrot.lane.b32.xlu0 %v584, 118
      %v599 = vpop.permute.xlu0 %598
      %600 = vrot.lane.b32.xlu0 %v592, 118
      %v601 = vpop.permute.xlu0 %600
      %602 = vrot.lane.b32.xlu0 %v585, 118
      %v603 = vpop.permute.xlu0 %602
      %604 = vrot.lane.b32.xlu0 %v593, 118
      %v605 = vpop.permute.xlu0 %604
      %606 = vrot.lane.b32.xlu0 %v586, 118
      %v607 = vpop.permute.xlu0 %606
      %vm608 = vcmask 965632
      %v609 = vsel %vm608, %v595, %v597
      %v610 = vsel %vm608, %v597, %v599
      %v611 = vsel %vm608, %v599, %v601
      %v612 = vsel %vm608, %v601, %v603
      %v613 = vsel %vm608, %v603, %v605
      %v614 = vsel %vm608, %v605, %v607
      %622 = vst [vmem:[#allocation2 + $0xa8] sm:$0xf] %v609
      %623 = vst [vmem:[#allocation2 + $0xb0] sm:$0xf] %v610
      %624 = vst [vmem:[#allocation2 + $0xb8] sm:$0xf] %v611
      %625 = vst [vmem:[#allocation2 + $0xc0] sm:$0xf] %v612
      %626 = vst [vmem:[#allocation2 + $0xc8] sm:$0xf] %v613
      %627 = vst [vmem:[#allocation2 + $0xd0] sm:$0xf] %v614
      %628 = vst.msk [vmem:[#allocation2 + $0xd8] sm:$0xf] %vm489, %v607
      %v629 = vld [vmem:[%s273] sm:$0xff]
      %v630 = vld [vmem:[%s273 + $0x8] sm:$0xff]
      %v631 = vld [vmem:[%s273 + $0x10] sm:$0xff]
      %v632 = vld [vmem:[%s273 + $0x18] sm:$0xf]
      %v637 = vcombine.high %v629, %v629
      %v638 = vcombine.high %v630, %v630
      %v639 = vcombine.high %v631, %v631
      %640 = vrot.lane.b32.xlu0 %v629, 117
      %v641 = vpop.permute.xlu0 %640
      %642 = vrot.lane.b32.xlu0 %v637, 117
      %v643 = vpop.permute.xlu0 %642
      %644 = vrot.lane.b32.xlu0 %v630, 117
      %v645 = vpop.permute.xlu0 %644
      %646 = vrot.lane.b32.xlu0 %v638, 117
      %v647 = vpop.permute.xlu0 %646
      %648 = vrot.lane.b32.xlu0 %v631, 117
      %v649 = vpop.permute.xlu0 %648
      %650 = vrot.lane.b32.xlu0 %v639, 117
      %v651 = vpop.permute.xlu0 %650
      %652 = vrot.lane.b32.xlu0 %v632, 117
      %v653 = vpop.permute.xlu0 %652
      %vm654 = vcmask 957440
      %v655 = vsel %vm654, %v641, %v643
      %v656 = vsel %vm654, %v643, %v645
      %v657 = vsel %vm654, %v645, %v647
      %v658 = vsel %vm654, %v647, %v649
      %v659 = vsel %vm654, %v649, %v651
      %v660 = vsel %vm654, %v651, %v653
      %668 = vst [vmem:[#allocation2 + $0xe0] sm:$0xf] %v655
      %669 = vst [vmem:[#allocation2 + $0xe8] sm:$0xf] %v656
      %670 = vst [vmem:[#allocation2 + $0xf0] sm:$0xf] %v657
      %671 = vst [vmem:[#allocation2 + $0xf8] sm:$0xf] %v658
      %672 = vst [vmem:[#allocation2 + $0x100] sm:$0xf] %v659
      %673 = vst [vmem:[#allocation2 + $0x108] sm:$0xf] %v660
      %674 = vst.msk [vmem:[#allocation2 + $0x110] sm:$0xf] %vm489, %v653
      %v675 = vld [vmem:[%s273] sm:$0xff]
      %v676 = vld [vmem:[%s273 + $0x8] sm:$0xff]
      %v677 = vld [vmem:[%s273 + $0x10] sm:$0xff]
      %v678 = vld [vmem:[%s273 + $0x18] sm:$0xf]
      %v683 = vcombine.high %v675, %v675
      %v684 = vcombine.high %v676, %v676
      %v685 = vcombine.high %v677, %v677
      %686 = vrot.lane.b32.xlu0 %v675, 116
      %v687 = vpop.permute.xlu0 %686
      %688 = vrot.lane.b32.xlu0 %v683, 116
      %v689 = vpop.permute.xlu0 %688
      %690 = vrot.lane.b32.xlu0 %v676, 116
      %v691 = vpop.permute.xlu0 %690
      %692 = vrot.lane.b32.xlu0 %v684, 116
      %v693 = vpop.permute.xlu0 %692
      %694 = vrot.lane.b32.xlu0 %v677, 116
      %v695 = vpop.permute.xlu0 %694
      %696 = vrot.lane.b32.xlu0 %v685, 116
      %v697 = vpop.permute.xlu0 %696
      %698 = vrot.lane.b32.xlu0 %v678, 116
      %v699 = vpop.permute.xlu0 %698
      %vm700 = vcmask 949248
      %v701 = vsel %vm700, %v687, %v689
      %v702 = vsel %vm700, %v689, %v691
      %v703 = vsel %vm700, %v691, %v693
      %v704 = vsel %vm700, %v693, %v695
      %v705 = vsel %vm700, %v695, %v697
      %v706 = vsel %vm700, %v697, %v699
      %714 = vst [vmem:[#allocation2 + $0x118] sm:$0xf] %v701
      %715 = vst [vmem:[#allocation2 + $0x120] sm:$0xf] %v702
      %716 = vst [vmem:[#allocation2 + $0x128] sm:$0xf] %v703
      %717 = vst [vmem:[#allocation2 + $0x130] sm:$0xf] %v704
      %718 = vst [vmem:[#allocation2 + $0x138] sm:$0xf] %v705
      %719 = vst [vmem:[#allocation2 + $0x140] sm:$0xf] %v706
      %720 = vst.msk [vmem:[#allocation2 + $0x148] sm:$0xf] %vm489, %v699
      %v721 = vld [vmem:[%s273] sm:$0xff]
      %v722 = vld [vmem:[%s273 + $0x8] sm:$0xff]
      %v723 = vld [vmem:[%s273 + $0x10] sm:$0xff]
      %v724 = vld [vmem:[%s273 + $0x18] sm:$0xf]
      %v729 = vcombine.high %v721, %v721
      %v730 = vcombine.high %v722, %v722
      %v731 = vcombine.high %v723, %v723
      %732 = vrot.lane.b32.xlu0 %v721, 108
      %v733 = vpop.permute.xlu0 %732
      %734 = vrot.lane.b32.xlu0 %v729, 108
      %v735 = vpop.permute.xlu0 %734
      %736 = vrot.lane.b32.xlu0 %v722, 108
      %v737 = vpop.permute.xlu0 %736
      %738 = vrot.lane.b32.xlu0 %v730, 108
      %v739 = vpop.permute.xlu0 %738
      %740 = vrot.lane.b32.xlu0 %v723, 108
      %v741 = vpop.permute.xlu0 %740
      %742 = vrot.lane.b32.xlu0 %v731, 108
      %v743 = vpop.permute.xlu0 %742
      %744 = vrot.lane.b32.xlu0 %v724, 108
      %v745 = vpop.permute.xlu0 %744
      %vm746 = vcmask 883712
      %v747 = vsel %vm746, %v733, %v735
      %v748 = vsel %vm746, %v735, %v737
      %v749 = vsel %vm746, %v737, %v739
      %v750 = vsel %vm746, %v739, %v741
      %v751 = vsel %vm746, %v741, %v743
      %v752 = vsel %vm746, %v743, %v745
      %760 = vst [vmem:[#allocation2 + $0x150] sm:$0xf] %v747
      %761 = vst [vmem:[#allocation2 + $0x158] sm:$0xf] %v748
      %762 = vst [vmem:[#allocation2 + $0x160] sm:$0xf] %v749
      %763 = vst [vmem:[#allocation2 + $0x168] sm:$0xf] %v750
      %764 = vst [vmem:[#allocation2 + $0x170] sm:$0xf] %v751
      %765 = vst [vmem:[#allocation2 + $0x178] sm:$0xf] %v752
      %766 = vst.msk [vmem:[#allocation2 + $0x180] sm:$0xf] %vm489, %v745
      %v767 = vld [vmem:[%s273] sm:$0xff]
      %v768 = vld [vmem:[%s273 + $0x8] sm:$0xff]
      %v769 = vld [vmem:[%s273 + $0x10] sm:$0xff]
      %v770 = vld [vmem:[%s273 + $0x18] sm:$0xf]
      %v775 = vcombine.high %v767, %v767
      %v776 = vcombine.high %v768, %v768
      %v777 = vcombine.high %v769, %v769
      %778 = vrot.lane.b32.xlu0 %v767, 107
      %v779 = vpop.permute.xlu0 %778
      %780 = vrot.lane.b32.xlu0 %v775, 107
      %v781 = vpop.permute.xlu0 %780
      %782 = vrot.lane.b32.xlu0 %v768, 107
      %v783 = vpop.permute.xlu0 %782
      %784 = vrot.lane.b32.xlu0 %v776, 107
      %v785 = vpop.permute.xlu0 %784
      %786 = vrot.lane.b32.xlu0 %v769, 107
      %v787 = vpop.permute.xlu0 %786
      %788 = vrot.lane.b32.xlu0 %v777, 107
      %v789 = vpop.permute.xlu0 %788
      %790 = vrot.lane.b32.xlu0 %v770, 107
      %v791 = vpop.permute.xlu0 %790
      %vm792 = vcmask 875520
      %v793 = vsel %vm792, %v779, %v781
      %v794 = vsel %vm792, %v781, %v783
      %v795 = vsel %vm792, %v783, %v785
      %v796 = vsel %vm792, %v785, %v787
      %v797 = vsel %vm792, %v787, %v789
      %v798 = vsel %vm792, %v789, %v791
      %806 = vst [vmem:[#allocation2 + $0x188] sm:$0xf] %v793
      %807 = vst [vmem:[#allocation2 + $0x190] sm:$0xf] %v794
      %808 = vst [vmem:[#allocation2 + $0x198] sm:$0xf] %v795
      %809 = vst [vmem:[#allocation2 + $0x1a0] sm:$0xf] %v796
      %810 = vst [vmem:[#allocation2 + $0x1a8] sm:$0xf] %v797
      %811 = vst [vmem:[#allocation2 + $0x1b0] sm:$0xf] %v798
      %812 = vst.msk [vmem:[#allocation2 + $0x1b8] sm:$0xf] %vm489, %v791
      %v813 = vld [vmem:[%s273] sm:$0xff]
      %v814 = vld [vmem:[%s273 + $0x8] sm:$0xff]
      %v815 = vld [vmem:[%s273 + $0x10] sm:$0xff]
      %v816 = vld [vmem:[%s273 + $0x18] sm:$0xf]
      %v821 = vcombine.high %v813, %v813
      %v822 = vcombine.high %v814, %v814
      %v823 = vcombine.high %v815, %v815
      %824 = vrot.lane.b32.xlu0 %v813, 106
      %v825 = vpop.permute.xlu0 %824
      %826 = vrot.lane.b32.xlu0 %v821, 106
      %v827 = vpop.permute.xlu0 %826
      %828 = vrot.lane.b32.xlu0 %v814, 106
      %v829 = vpop.permute.xlu0 %828
      %830 = vrot.lane.b32.xlu0 %v822, 106
      %v831 = vpop.permute.xlu0 %830
      %832 = vrot.lane.b32.xlu0 %v815, 106
      %v833 = vpop.permute.xlu0 %832
      %834 = vrot.lane.b32.xlu0 %v823, 106
      %v835 = vpop.permute.xlu0 %834
      %836 = vrot.lane.b32.xlu0 %v816, 106
      %v837 = vpop.permute.xlu0 %836
      %vm838 = vcmask 867328
      %v839 = vsel %vm838, %v825, %v827
      %v840 = vsel %vm838, %v827, %v829
      %v841 = vsel %vm838, %v829, %v831
      %v842 = vsel %vm838, %v831, %v833
      %v843 = vsel %vm838, %v833, %v835
      %v844 = vsel %vm838, %v835, %v837
      %852 = vst [vmem:[#allocation2 + $0x1c0] sm:$0xf] %v839
      %853 = vst [vmem:[#allocation2 + $0x1c8] sm:$0xf] %v840
      %854 = vst [vmem:[#allocation2 + $0x1d0] sm:$0xf] %v841
      %855 = vst [vmem:[#allocation2 + $0x1d8] sm:$0xf] %v842
      %856 = vst [vmem:[#allocation2 + $0x1e0] sm:$0xf] %v843
      %857 = vst [vmem:[#allocation2 + $0x1e8] sm:$0xf] %v844
      %858 = vst.msk [vmem:[#allocation2 + $0x1f0] sm:$0xf] %vm489, %v837
      %v859 = vld [vmem:[%s273] sm:$0xff]
      %v860 = vld [vmem:[%s273 + $0x8] sm:$0xff]
      %v861 = vld [vmem:[%s273 + $0x10] sm:$0xff]
      %v862 = vld [vmem:[%s273 + $0x18] sm:$0xff]
      %v867 = vcombine.high %v859, %v859
      %v868 = vcombine.high %v860, %v860
      %v869 = vcombine.high %v861, %v861
      %v870 = vcombine.high %v862, %v862
      %871 = vrot.lane.b32.xlu0 %v859, 28
      %v872 = vpop.permute.xlu0 %871
      %873 = vrot.lane.b32.xlu0 %v867, 28
      %v874 = vpop.permute.xlu0 %873
      %875 = vrot.lane.b32.xlu0 %v860, 28
      %v876 = vpop.permute.xlu0 %875
      %877 = vrot.lane.b32.xlu0 %v868, 28
      %v878 = vpop.permute.xlu0 %877
      %879 = vrot.lane.b32.xlu0 %v861, 28
      %v880 = vpop.permute.xlu0 %879
      %881 = vrot.lane.b32.xlu0 %v869, 28
      %v882 = vpop.permute.xlu0 %881
      %883 = vrot.lane.b32.xlu0 %v862, 28
      %v884 = vpop.permute.xlu0 %883
      %885 = vrot.lane.b32.xlu0 %v870, 28
      %v886 = vpop.permute.xlu0 %885
      %vm887 = vcmask 228352
      %v888 = vsel %vm887, %v872, %v874
      %v889 = vsel %vm887, %v874, %v876
      %v890 = vsel %vm887, %v876, %v878
      %v891 = vsel %vm887, %v878, %v880
      %v892 = vsel %vm887, %v880, %v882
      %v893 = vsel %vm887, %v882, %v884
      %v894 = vsel %vm887, %v884, %v886
      %902 = vst [vmem:[#allocation2 + $0x1f8] sm:$0xf] %v888
      %903 = vst [vmem:[#allocation2 + $0x200] sm:$0xf] %v889
      %904 = vst [vmem:[#allocation2 + $0x208] sm:$0xf] %v890
      %905 = vst [vmem:[#allocation2 + $0x210] sm:$0xf] %v891
      %906 = vst [vmem:[#allocation2 + $0x218] sm:$0xf] %v892
      %907 = vst [vmem:[#allocation2 + $0x220] sm:$0xf] %v893
      %908 = vst.msk [vmem:[#allocation2 + $0x228] sm:$0xf] %vm489, %v894
      %v909 = vld [vmem:[%s273] sm:$0xff]
      %v910 = vld [vmem:[%s273 + $0x8] sm:$0xff]
      %v911 = vld [vmem:[%s273 + $0x10] sm:$0xff]
      %v912 = vld [vmem:[%s273 + $0x18] sm:$0xff]
      %v917 = vcombine.high %v909, %v909
      %v918 = vcombine.high %v910, %v910
      %v919 = vcombine.high %v911, %v911
      %v920 = vcombine.high %v912, %v912
      %921 = vrot.lane.b32.xlu0 %v909, 27
      %v922 = vpop.permute.xlu0 %921
      %923 = vrot.lane.b32.xlu0 %v917, 27
      %v924 = vpop.permute.xlu0 %923
      %925 = vrot.lane.b32.xlu0 %v910, 27
      %v926 = vpop.permute.xlu0 %925
      %927 = vrot.lane.b32.xlu0 %v918, 27
      %v928 = vpop.permute.xlu0 %927
      %929 = vrot.lane.b32.xlu0 %v911, 27
      %v930 = vpop.permute.xlu0 %929
      %931 = vrot.lane.b32.xlu0 %v919, 27
      %v932 = vpop.permute.xlu0 %931
      %933 = vrot.lane.b32.xlu0 %v912, 27
      %v934 = vpop.permute.xlu0 %933
      %935 = vrot.lane.b32.xlu0 %v920, 27
      %v936 = vpop.permute.xlu0 %935
      %vm937 = vcmask 220160
      %v938 = vsel %vm937, %v922, %v924
      %v939 = vsel %vm937, %v924, %v926
      %v940 = vsel %vm937, %v926, %v928
      %v941 = vsel %vm937, %v928, %v930
      %v942 = vsel %vm937, %v930, %v932
      %v943 = vsel %vm937, %v932, %v934
      %v944 = vsel %vm937, %v934, %v936
      %952 = vst [vmem:[#allocation2 + $0x230] sm:$0xf] %v938
      %953 = vst [vmem:[#allocation2 + $0x238] sm:$0xf] %v939
      %954 = vst [vmem:[#allocation2 + $0x240] sm:$0xf] %v940
      %955 = vst [vmem:[#allocation2 + $0x248] sm:$0xf] %v941
      %956 = vst [vmem:[#allocation2 + $0x250] sm:$0xf] %v942
      %957 = vst [vmem:[#allocation2 + $0x258] sm:$0xf] %v943
      %958 = vst.msk [vmem:[#allocation2 + $0x260] sm:$0xf] %vm489, %v944
      %v959 = vld [vmem:[%s273] sm:$0xff]
      %v960 = vld [vmem:[%s273 + $0x8] sm:$0xff]
      %v961 = vld [vmem:[%s273 + $0x10] sm:$0xff]
      %v962 = vld [vmem:[%s273 + $0x18] sm:$0xff]
      %v967 = vcombine.high %v959, %v959
      %v968 = vcombine.high %v960, %v960
      %v969 = vcombine.high %v961, %v961
      %v970 = vcombine.high %v962, %v962
      %971 = vrot.lane.b32.xlu0 %v959, 26
      %v972 = vpop.permute.xlu0 %971
      %973 = vrot.lane.b32.xlu0 %v967, 26
      %v974 = vpop.permute.xlu0 %973
      %975 = vrot.lane.b32.xlu0 %v960, 26
      %v976 = vpop.permute.xlu0 %975
      %977 = vrot.lane.b32.xlu0 %v968, 26
      %v978 = vpop.permute.xlu0 %977
      %979 = vrot.lane.b32.xlu0 %v961, 26
      %v980 = vpop.permute.xlu0 %979
      %981 = vrot.lane.b32.xlu0 %v969, 26
      %v982 = vpop.permute.xlu0 %981
      %983 = vrot.lane.b32.xlu0 %v962, 26
      %v984 = vpop.permute.xlu0 %983
      %985 = vrot.lane.b32.xlu0 %v970, 26
      %v986 = vpop.permute.xlu0 %985
      %vm987 = vcmask 211968
      %v988 = vsel %vm987, %v972, %v974
      %v989 = vsel %vm987, %v974, %v976
      %v990 = vsel %vm987, %v976, %v978
      %v991 = vsel %vm987, %v978, %v980
      %v992 = vsel %vm987, %v980, %v982
      %v993 = vsel %vm987, %v982, %v984
      %v994 = vsel %vm987, %v984, %v986
      %1002 = vst [vmem:[#allocation2 + $0x268] sm:$0xf] %v988
      %1003 = vst [vmem:[#allocation2 + $0x270] sm:$0xf] %v989
      %1004 = vst [vmem:[#allocation2 + $0x278] sm:$0xf] %v990
      %1005 = vst [vmem:[#allocation2 + $0x280] sm:$0xf] %v991
      %1006 = vst [vmem:[#allocation2 + $0x288] sm:$0xf] %v992
      %1007 = vst [vmem:[#allocation2 + $0x290] sm:$0xf] %v993
      %1008 = vst.msk [vmem:[#allocation2 + $0x298] sm:$0xf] %vm489, %v994
      %v1009 = vld [vmem:[%s273] sm:$0xff]
      %v1010 = vld [vmem:[%s273 + $0x8] sm:$0xff]
      %v1011 = vld [vmem:[%s273 + $0x10] sm:$0xff]
      %v1012 = vld [vmem:[%s273 + $0x18] sm:$0xff]
      %v1017 = vcombine.high %v1009, %v1009
      %v1018 = vcombine.high %v1010, %v1010
      %v1019 = vcombine.high %v1011, %v1011
      %v1020 = vcombine.high %v1012, %v1012
      %1021 = vrot.lane.b32.xlu0 %v1009, 18
      %v1022 = vpop.permute.xlu0 %1021
      %1023 = vrot.lane.b32.xlu0 %v1017, 18
      %v1024 = vpop.permute.xlu0 %1023
      %1025 = vrot.lane.b32.xlu0 %v1010, 18
      %v1026 = vpop.permute.xlu0 %1025
      %1027 = vrot.lane.b32.xlu0 %v1018, 18
      %v1028 = vpop.permute.xlu0 %1027
      %1029 = vrot.lane.b32.xlu0 %v1011, 18
      %v1030 = vpop.permute.xlu0 %1029
      %1031 = vrot.lane.b32.xlu0 %v1019, 18
      %v1032 = vpop.permute.xlu0 %1031
      %1033 = vrot.lane.b32.xlu0 %v1012, 18
      %v1034 = vpop.permute.xlu0 %1033
      %1035 = vrot.lane.b32.xlu0 %v1020, 18
      %v1036 = vpop.permute.xlu0 %1035
      %vm1037 = vcmask 146432
      %v1038 = vsel %vm1037, %v1022, %v1024
      %v1039 = vsel %vm1037, %v1024, %v1026
      %v1040 = vsel %vm1037, %v1026, %v1028
      %v1041 = vsel %vm1037, %v1028, %v1030
      %v1042 = vsel %vm1037, %v1030, %v1032
      %v1043 = vsel %vm1037, %v1032, %v1034
      %v1044 = vsel %vm1037, %v1034, %v1036
      %1052 = vst [vmem:[#allocation2 + $0x2a0] sm:$0xf] %v1038
      %1053 = vst [vmem:[#allocation2 + $0x2a8] sm:$0xf] %v1039
      %1054 = vst [vmem:[#allocation2 + $0x2b0] sm:$0xf] %v1040
      %1055 = vst [vmem:[#allocation2 + $0x2b8] sm:$0xf] %v1041
      %1056 = vst [vmem:[#allocation2 + $0x2c0] sm:$0xf] %v1042
      %1057 = vst [vmem:[#allocation2 + $0x2c8] sm:$0xf] %v1043
      %1058 = vst.msk [vmem:[#allocation2 + $0x2d0] sm:$0xf] %vm489, %v1044
      %v1059 = vld [vmem:[%s273] sm:$0xff]
      %v1060 = vld [vmem:[%s273 + $0x8] sm:$0xff]
      %v1061 = vld [vmem:[%s273 + $0x10] sm:$0xff]
      %v1062 = vld [vmem:[%s273 + $0x18] sm:$0xff]
      %v1067 = vcombine.high %v1059, %v1059
      %v1068 = vcombine.high %v1060, %v1060
      %v1069 = vcombine.high %v1061, %v1061
      %v1070 = vcombine.high %v1062, %v1062
      %1071 = vrot.lane.b32.xlu0 %v1059, 17
      %v1072 = vpop.permute.xlu0 %1071
      %1073 = vrot.lane.b32.xlu0 %v1067, 17
      %v1074 = vpop.permute.xlu0 %1073
      %1075 = vrot.lane.b32.xlu0 %v1060, 17
      %v1076 = vpop.permute.xlu0 %1075
      %1077 = vrot.lane.b32.xlu0 %v1068, 17
      %v1078 = vpop.permute.xlu0 %1077
      %1079 = vrot.lane.b32.xlu0 %v1061, 17
      %v1080 = vpop.permute.xlu0 %1079
      %1081 = vrot.lane.b32.xlu0 %v1069, 17
      %v1082 = vpop.permute.xlu0 %1081
      %1083 = vrot.lane.b32.xlu0 %v1062, 17
      %v1084 = vpop.permute.xlu0 %1083
      %1085 = vrot.lane.b32.xlu0 %v1070, 17
      %v1086 = vpop.permute.xlu0 %1085
      %vm1087 = vcmask 138240
      %v1088 = vsel %vm1087, %v1072, %v1074
      %v1089 = vsel %vm1087, %v1074, %v1076
      %v1090 = vsel %vm1087, %v1076, %v1078
      %v1091 = vsel %vm1087, %v1078, %v1080
      %v1092 = vsel %vm1087, %v1080, %v1082
      %v1093 = vsel %vm1087, %v1082, %v1084
      %v1094 = vsel %vm1087, %v1084, %v1086
      %1102 = vst [vmem:[#allocation2 + $0x2d8] sm:$0xf] %v1088
      %1103 = vst [vmem:[#allocation2 + $0x2e0] sm:$0xf] %v1089
      %1104 = vst [vmem:[#allocation2 + $0x2e8] sm:$0xf] %v1090
      %1105 = vst [vmem:[#allocation2 + $0x2f0] sm:$0xf] %v1091
      %1106 = vst [vmem:[#allocation2 + $0x2f8] sm:$0xf] %v1092
      %1107 = vst [vmem:[#allocation2 + $0x300] sm:$0xf] %v1093
      %1108 = vst.msk [vmem:[#allocation2 + $0x308] sm:$0xf] %vm489, %v1094
      %v1109 = vld [vmem:[%s273] sm:$0xff]
      %v1110 = vld [vmem:[%s273 + $0x8] sm:$0xff]
      %v1111 = vld [vmem:[%s273 + $0x10] sm:$0xff]
      %v1112 = vld [vmem:[%s273 + $0x18] sm:$0xff]
      %v1117 = vcombine.high %v1109, %v1109
      %v1118 = vcombine.high %v1110, %v1110
      %v1119 = vcombine.high %v1111, %v1111
      %v1120 = vcombine.high %v1112, %v1112
      %1121 = vrot.lane.b32.xlu0 %v1109, 16
      %v1122 = vpop.permute.xlu0 %1121
      %1123 = vrot.lane.b32.xlu0 %v1117, 16
      %v1124 = vpop.permute.xlu0 %1123
      %1125 = vrot.lane.b32.xlu0 %v1110, 16
      %v1126 = vpop.permute.xlu0 %1125
      %1127 = vrot.lane.b32.xlu0 %v1118, 16
      %v1128 = vpop.permute.xlu0 %1127
      %1129 = vrot.lane.b32.xlu0 %v1111, 16
      %v1130 = vpop.permute.xlu0 %1129
      %1131 = vrot.lane.b32.xlu0 %v1119, 16
      %v1132 = vpop.permute.xlu0 %1131
      %1133 = vrot.lane.b32.xlu0 %v1112, 16
      %v1134 = vpop.permute.xlu0 %1133
      %1135 = vrot.lane.b32.xlu0 %v1120, 16
      %v1136 = vpop.permute.xlu0 %1135
      %vm1137 = vcmask 130048
      %v1138 = vsel %vm1137, %v1122, %v1124
      %v1139 = vsel %vm1137, %v1124, %v1126
      %v1140 = vsel %vm1137, %v1126, %v1128
      %v1141 = vsel %vm1137, %v1128, %v1130
      %v1142 = vsel %vm1137, %v1130, %v1132
      %v1143 = vsel %vm1137, %v1132, %v1134
      %v1144 = vsel %vm1137, %v1134, %v1136
      %1152 = vst [vmem:[#allocation2 + $0x310] sm:$0xf] %v1138
      %1153 = vst [vmem:[#allocation2 + $0x318] sm:$0xf] %v1139
      %1154 = vst [vmem:[#allocation2 + $0x320] sm:$0xf] %v1140
      %1155 = vst [vmem:[#allocation2 + $0x328] sm:$0xf] %v1141
      %1156 = vst [vmem:[#allocation2 + $0x330] sm:$0xf] %v1142
      %1157 = vst [vmem:[#allocation2 + $0x338] sm:$0xf] %v1143
      %1158 = vst.msk [vmem:[#allocation2 + $0x340] sm:$0xf] %vm489, %v1144
      %v1159 = vld [vmem:[%s273] sm:$0xff]
      %v1160 = vld [vmem:[%s273 + $0x8] sm:$0xff]
      %v1161 = vld [vmem:[%s273 + $0x10] sm:$0xff]
      %v1162 = vld [vmem:[%s273 + $0x18] sm:$0xff]
      %v1167 = vcombine.high %v1159, %v1159
      %v1168 = vcombine.high %v1160, %v1160
      %v1169 = vcombine.high %v1161, %v1161
      %v1170 = vcombine.high %v1162, %v1162
      %1171 = vrot.lane.b32.xlu0 %v1159, 8
      %v1172 = vpop.permute.xlu0 %1171
      %1173 = vrot.lane.b32.xlu0 %v1167, 8
      %v1174 = vpop.permute.xlu0 %1173
      %1175 = vrot.lane.b32.xlu0 %v1160, 8
      %v1176 = vpop.permute.xlu0 %1175
      %1177 = vrot.lane.b32.xlu0 %v1168, 8
      %v1178 = vpop.permute.xlu0 %1177
      %1179 = vrot.lane.b32.xlu0 %v1161, 8
      %v1180 = vpop.permute.xlu0 %1179
      %1181 = vrot.lane.b32.xlu0 %v1169, 8
      %v1182 = vpop.permute.xlu0 %1181
      %1183 = vrot.lane.b32.xlu0 %v1162, 8
      %v1184 = vpop.permute.xlu0 %1183
      %1185 = vrot.lane.b32.xlu0 %v1170, 8
      %v1186 = vpop.permute.xlu0 %1185
      %vm1187 = vcmask 64512
      %v1188 = vsel %vm1187, %v1172, %v1174
      %v1189 = vsel %vm1187, %v1174, %v1176
      %v1190 = vsel %vm1187, %v1176, %v1178
      %v1191 = vsel %vm1187, %v1178, %v1180
      %v1192 = vsel %vm1187, %v1180, %v1182
      %v1193 = vsel %vm1187, %v1182, %v1184
      %v1194 = vsel %vm1187, %v1184, %v1186
      %1202 = vst [vmem:[#allocation2 + $0x348] sm:$0xf] %v1188
      %1203 = vst [vmem:[#allocation2 + $0x350] sm:$0xf] %v1189
      %1204 = vst [vmem:[#allocation2 + $0x358] sm:$0xf] %v1190
      %1205 = vst [vmem:[#allocation2 + $0x360] sm:$0xf] %v1191
      %1206 = vst [vmem:[#allocation2 + $0x368] sm:$0xf] %v1192
      %1207 = vst [vmem:[#allocation2 + $0x370] sm:$0xf] %v1193
      %1208 = vst.msk [vmem:[#allocation2 + $0x378] sm:$0xf] %vm489, %v1194
      %v1209 = vld [vmem:[%s273] sm:$0xff]
      %v1210 = vld [vmem:[%s273 + $0x8] sm:$0xff]
      %v1211 = vld [vmem:[%s273 + $0x10] sm:$0xff]
      %v1212 = vld [vmem:[%s273 + $0x18] sm:$0xff]
      %v1217 = vcombine.high %v1209, %v1209
      %v1218 = vcombine.high %v1210, %v1210
      %v1219 = vcombine.high %v1211, %v1211
      %v1220 = vcombine.high %v1212, %v1212
      %1221 = vrot.lane.b32.xlu0 %v1209, 7
      %v1222 = vpop.permute.xlu0 %1221
      %1223 = vrot.lane.b32.xlu0 %v1217, 7
      %v1224 = vpop.permute.xlu0 %1223
      %1225 = vrot.lane.b32.xlu0 %v1210, 7
      %v1226 = vpop.permute.xlu0 %1225
      %1227 = vrot.lane.b32.xlu0 %v1218, 7
      %v1228 = vpop.permute.xlu0 %1227
      %1229 = vrot.lane.b32.xlu0 %v1211, 7
      %v1230 = vpop.permute.xlu0 %1229
      %1231 = vrot.lane.b32.xlu0 %v1219, 7
      %v1232 = vpop.permute.xlu0 %1231
      %1233 = vrot.lane.b32.xlu0 %v1212, 7
      %v1234 = vpop.permute.xlu0 %1233
      %1235 = vrot.lane.b32.xlu0 %v1220, 7
      %v1236 = vpop.permute.xlu0 %1235
      %vm1237 = vcmask 56320
      %v1238 = vsel %vm1237, %v1222, %v1224
      %v1239 = vsel %vm1237, %v1224, %v1226
      %v1240 = vsel %vm1237, %v1226, %v1228
      %v1241 = vsel %vm1237, %v1228, %v1230
      %v1242 = vsel %vm1237, %v1230, %v1232
      %v1243 = vsel %vm1237, %v1232, %v1234
      %v1244 = vsel %vm1237, %v1234, %v1236
      %1252 = vst [vmem:[#allocation2 + $0x380] sm:$0xf] %v1238
      %1253 = vst [vmem:[#allocation2 + $0x388] sm:$0xf] %v1239
      %1254 = vst [vmem:[#allocation2 + $0x390] sm:$0xf] %v1240
      %1255 = vst [vmem:[#allocation2 + $0x398] sm:$0xf] %v1241
      %1256 = vst [vmem:[#allocation2 + $0x3a0] sm:$0xf] %v1242
      %1257 = vst [vmem:[#allocation2 + $0x3a8] sm:$0xf] %v1243
      %1258 = vst.msk [vmem:[#allocation2 + $0x3b0] sm:$0xf] %vm489, %v1244
      %v1259 = vld [vmem:[%s273] sm:$0xff]
      %v1260 = vld [vmem:[%s273 + $0x8] sm:$0xff]
      %v1261 = vld [vmem:[%s273 + $0x10] sm:$0xff]
      %v1262 = vld [vmem:[%s273 + $0x18] sm:$0xff]
      %v1267 = vcombine.high %v1259, %v1259
      %v1268 = vcombine.high %v1260, %v1260
      %v1269 = vcombine.high %v1261, %v1261
      %v1270 = vcombine.high %v1262, %v1262
      %1271 = vrot.lane.b32.xlu0 %v1259, 6
      %v1272 = vpop.permute.xlu0 %1271
      %1273 = vrot.lane.b32.xlu0 %v1267, 6
      %v1274 = vpop.permute.xlu0 %1273
      %1275 = vrot.lane.b32.xlu0 %v1260, 6
      %v1276 = vpop.permute.xlu0 %1275
      %1277 = vrot.lane.b32.xlu0 %v1268, 6
      %v1278 = vpop.permute.xlu0 %1277
      %1279 = vrot.lane.b32.xlu0 %v1261, 6
      %v1280 = vpop.permute.xlu0 %1279
      %1281 = vrot.lane.b32.xlu0 %v1269, 6
      %v1282 = vpop.permute.xlu0 %1281
      %1283 = vrot.lane.b32.xlu0 %v1262, 6
      %v1284 = vpop.permute.xlu0 %1283
      %1285 = vrot.lane.b32.xlu0 %v1270, 6
      %v1286 = vpop.permute.xlu0 %1285
      %vm1287 = vcmask 48128
      %v1288 = vsel %vm1287, %v1272, %v1274
      %v1289 = vsel %vm1287, %v1274, %v1276
      %v1290 = vsel %vm1287, %v1276, %v1278
      %v1291 = vsel %vm1287, %v1278, %v1280
      %v1292 = vsel %vm1287, %v1280, %v1282
      %v1293 = vsel %vm1287, %v1282, %v1284
      %v1294 = vsel %vm1287, %v1284, %v1286
      %1302 = vst [vmem:[#allocation2 + $0x3b8] sm:$0xf] %v1288
      %1303 = vst [vmem:[#allocation2 + $0x3c0] sm:$0xf] %v1289
      %1304 = vst [vmem:[#allocation2 + $0x3c8] sm:$0xf] %v1290
      %1305 = vst [vmem:[#allocation2 + $0x3d0] sm:$0xf] %v1291
      %1306 = vst [vmem:[#allocation2 + $0x3d8] sm:$0xf] %v1292
      %1307 = vst [vmem:[#allocation2 + $0x3e0] sm:$0xf] %v1293
      %1308 = vst.msk [vmem:[#allocation2 + $0x3e8] sm:$0xf] %vm489, %v1294
      %v1309 = vld [vmem:[%s273 + $0x4] sm:$0xff]
      %v1310 = vld [vmem:[%s273 + $0xc] sm:$0xff]
      %v1311 = vld [vmem:[%s273 + $0x14] sm:$0xff]
      %v1312 = vld [vmem:[%s273 + $0x1c] sm:$0xf]
      %v1317 = vcombine.high %v1309, %v1309
      %v1318 = vcombine.high %v1310, %v1310
      %v1319 = vcombine.high %v1311, %v1311
      %1320 = vrot.lane.b32.xlu0 %v1309, 56
      %v1321 = vpop.permute.xlu0 %1320
      %1322 = vrot.lane.b32.xlu0 %v1317, 56
      %v1323 = vpop.permute.xlu0 %1322
      %1324 = vrot.lane.b32.xlu0 %v1310, 56
      %v1325 = vpop.permute.xlu0 %1324
      %1326 = vrot.lane.b32.xlu0 %v1318, 56
      %v1327 = vpop.permute.xlu0 %1326
      %1328 = vrot.lane.b32.xlu0 %v1311, 56
      %v1329 = vpop.permute.xlu0 %1328
      %1330 = vrot.lane.b32.xlu0 %v1319, 56
      %v1331 = vpop.permute.xlu0 %1330
      %1332 = vrot.lane.b32.xlu0 %v1312, 56
      %v1333 = vpop.permute.xlu0 %1332
      %vm1334 = vcmask 457728
      %v1335 = vsel %vm1334, %v1321, %v1323
      %v1336 = vsel %vm1334, %v1323, %v1325
      %v1337 = vsel %vm1334, %v1325, %v1327
      %v1338 = vsel %vm1334, %v1327, %v1329
      %v1339 = vsel %vm1334, %v1329, %v1331
      %v1340 = vsel %vm1334, %v1331, %v1333
      %1348 = vst [vmem:[#allocation2 + $0x3f0] sm:$0xf] %v1335
      %1349 = vst [vmem:[#allocation2 + $0x3f8] sm:$0xf] %v1336
      %1350 = vst [vmem:[#allocation2 + $0x400] sm:$0xf] %v1337
      %1351 = vst [vmem:[#allocation2 + $0x408] sm:$0xf] %v1338
      %1352 = vst [vmem:[#allocation2 + $0x410] sm:$0xf] %v1339
      %1353 = vst [vmem:[#allocation2 + $0x418] sm:$0xf] %v1340
      %1354 = vst.msk [vmem:[#allocation2 + $0x420] sm:$0xf] %vm489, %v1333
      %v1355 = vld [vmem:[%s273 + $0x4] sm:$0xff]
      %v1356 = vld [vmem:[%s273 + $0xc] sm:$0xff]
      %v1357 = vld [vmem:[%s273 + $0x14] sm:$0xff]
      %v1358 = vld [vmem:[%s273 + $0x1c] sm:$0xf]
      %v1363 = vcombine.high %v1355, %v1355
      %v1364 = vcombine.high %v1356, %v1356
      %v1365 = vcombine.high %v1357, %v1357
      %1366 = vrot.lane.b32.xlu0 %v1355, 55
      %v1367 = vpop.permute.xlu0 %1366
      %1368 = vrot.lane.b32.xlu0 %v1363, 55
      %v1369 = vpop.permute.xlu0 %1368
      %1370 = vrot.lane.b32.xlu0 %v1356, 55
      %v1371 = vpop.permute.xlu0 %1370
      %1372 = vrot.lane.b32.xlu0 %v1364, 55
      %v1373 = vpop.permute.xlu0 %1372
      %1374 = vrot.lane.b32.xlu0 %v1357, 55
      %v1375 = vpop.permute.xlu0 %1374
      %1376 = vrot.lane.b32.xlu0 %v1365, 55
      %v1377 = vpop.permute.xlu0 %1376
      %1378 = vrot.lane.b32.xlu0 %v1358, 55
      %v1379 = vpop.permute.xlu0 %1378
      %vm1380 = vcmask 449536
      %v1381 = vsel %vm1380, %v1367, %v1369
      %v1382 = vsel %vm1380, %v1369, %v1371
      %v1383 = vsel %vm1380, %v1371, %v1373
      %v1384 = vsel %vm1380, %v1373, %v1375
      %v1385 = vsel %vm1380, %v1375, %v1377
      %v1386 = vsel %vm1380, %v1377, %v1379
      %1394 = vst [vmem:[#allocation2 + $0x428] sm:$0xf] %v1381
      %1395 = vst [vmem:[#allocation2 + $0x430] sm:$0xf] %v1382
      %1396 = vst [vmem:[#allocation2 + $0x438] sm:$0xf] %v1383
      %1397 = vst [vmem:[#allocation2 + $0x440] sm:$0xf] %v1384
      %1398 = vst [vmem:[#allocation2 + $0x448] sm:$0xf] %v1385
      %1399 = vst [vmem:[#allocation2 + $0x450] sm:$0xf] %v1386
      %1400 = vst.msk [vmem:[#allocation2 + $0x458] sm:$0xf] %vm489, %v1379
      %v1401 = vld [vmem:[%s273 + $0x4] sm:$0xff]
      %v1402 = vld [vmem:[%s273 + $0xc] sm:$0xff]
      %v1403 = vld [vmem:[%s273 + $0x14] sm:$0xff]
      %v1404 = vld [vmem:[%s273 + $0x1c] sm:$0xf]
      %v1409 = vcombine.high %v1401, %v1401
      %v1410 = vcombine.high %v1402, %v1402
      %v1411 = vcombine.high %v1403, %v1403
      %1412 = vrot.lane.b32.xlu0 %v1401, 54
      %v1413 = vpop.permute.xlu0 %1412
      %1414 = vrot.lane.b32.xlu0 %v1409, 54
      %v1415 = vpop.permute.xlu0 %1414
      %1416 = vrot.lane.b32.xlu0 %v1402, 54
      %v1417 = vpop.permute.xlu0 %1416
      %1418 = vrot.lane.b32.xlu0 %v1410, 54
      %v1419 = vpop.permute.xlu0 %1418
      %1420 = vrot.lane.b32.xlu0 %v1403, 54
      %v1421 = vpop.permute.xlu0 %1420
      %1422 = vrot.lane.b32.xlu0 %v1411, 54
      %v1423 = vpop.permute.xlu0 %1422
      %1424 = vrot.lane.b32.xlu0 %v1404, 54
      %v1425 = vpop.permute.xlu0 %1424
      %vm1426 = vcmask 441344
      %v1427 = vsel %vm1426, %v1413, %v1415
      %v1428 = vsel %vm1426, %v1415, %v1417
      %v1429 = vsel %vm1426, %v1417, %v1419
      %v1430 = vsel %vm1426, %v1419, %v1421
      %v1431 = vsel %vm1426, %v1421, %v1423
      %v1432 = vsel %vm1426, %v1423, %v1425
      %1440 = vst [vmem:[#allocation2 + $0x460] sm:$0xf] %v1427
      %1441 = vst [vmem:[#allocation2 + $0x468] sm:$0xf] %v1428
      %1442 = vst [vmem:[#allocation2 + $0x470] sm:$0xf] %v1429
      %1443 = vst [vmem:[#allocation2 + $0x478] sm:$0xf] %v1430
      %1444 = vst [vmem:[#allocation2 + $0x480] sm:$0xf] %v1431
      %1445 = vst [vmem:[#allocation2 + $0x488] sm:$0xf] %v1432
      %1446 = vst.msk [vmem:[#allocation2 + $0x490] sm:$0xf] %vm489, %v1425
      %v1447 = vld [vmem:[%s273 + $0x4] sm:$0xff]
      %v1448 = vld [vmem:[%s273 + $0xc] sm:$0xff]
      %v1449 = vld [vmem:[%s273 + $0x14] sm:$0xff]
      %v1450 = vld [vmem:[%s273 + $0x1c] sm:$0xf]
      %v1455 = vcombine.high %v1447, %v1447
      %v1456 = vcombine.high %v1448, %v1448
      %v1457 = vcombine.high %v1449, %v1449
      %1458 = vrot.lane.b32.xlu0 %v1447, 46
      %v1459 = vpop.permute.xlu0 %1458
      %1460 = vrot.lane.b32.xlu0 %v1455, 46
      %v1461 = vpop.permute.xlu0 %1460
      %1462 = vrot.lane.b32.xlu0 %v1448, 46
      %v1463 = vpop.permute.xlu0 %1462
      %1464 = vrot.lane.b32.xlu0 %v1456, 46
      %v1465 = vpop.permute.xlu0 %1464
      %1466 = vrot.lane.b32.xlu0 %v1449, 46
      %v1467 = vpop.permute.xlu0 %1466
      %1468 = vrot.lane.b32.xlu0 %v1457, 46
      %v1469 = vpop.permute.xlu0 %1468
      %1470 = vrot.lane.b32.xlu0 %v1450, 46
      %v1471 = vpop.permute.xlu0 %1470
      %vm1472 = vcmask 375808
      %v1473 = vsel %vm1472, %v1459, %v1461
      %v1474 = vsel %vm1472, %v1461, %v1463
      %v1475 = vsel %vm1472, %v1463, %v1465
      %v1476 = vsel %vm1472, %v1465, %v1467
      %v1477 = vsel %vm1472, %v1467, %v1469
      %v1478 = vsel %vm1472, %v1469, %v1471
      %1486 = vst [vmem:[#allocation2 + $0x498] sm:$0xf] %v1473
      %1487 = vst [vmem:[#allocation2 + $0x4a0] sm:$0xf] %v1474
      %1488 = vst [vmem:[#allocation2 + $0x4a8] sm:$0xf] %v1475
      %1489 = vst [vmem:[#allocation2 + $0x4b0] sm:$0xf] %v1476
      %1490 = vst [vmem:[#allocation2 + $0x4b8] sm:$0xf] %v1477
      %1491 = vst [vmem:[#allocation2 + $0x4c0] sm:$0xf] %v1478
      %1492 = vst.msk [vmem:[#allocation2 + $0x4c8] sm:$0xf] %vm489, %v1471
      %v1493 = vld [vmem:[%s273 + $0x4] sm:$0xff]
      %v1494 = vld [vmem:[%s273 + $0xc] sm:$0xff]
      %v1495 = vld [vmem:[%s273 + $0x14] sm:$0xff]
      %v1496 = vld [vmem:[%s273 + $0x1c] sm:$0xf]
      %v1501 = vcombine.high %v1493, %v1493
      %v1502 = vcombine.high %v1494, %v1494
      %v1503 = vcombine.high %v1495, %v1495
      %1504 = vrot.lane.b32.xlu0 %v1493, 45
      %v1505 = vpop.permute.xlu0 %1504
      %1506 = vrot.lane.b32.xlu0 %v1501, 45
      %v1507 = vpop.permute.xlu0 %1506
      %1508 = vrot.lane.b32.xlu0 %v1494, 45
      %v1509 = vpop.permute.xlu0 %1508
      %1510 = vrot.lane.b32.xlu0 %v1502, 45
      %v1511 = vpop.permute.xlu0 %1510
      %1512 = vrot.lane.b32.xlu0 %v1495, 45
      %v1513 = vpop.permute.xlu0 %1512
      %1514 = vrot.lane.b32.xlu0 %v1503, 45
      %v1515 = vpop.permute.xlu0 %1514
      %1516 = vrot.lane.b32.xlu0 %v1496, 45
      %v1517 = vpop.permute.xlu0 %1516
      %vm1518 = vcmask 367616
      %v1519 = vsel %vm1518, %v1505, %v1507
      %v1520 = vsel %vm1518, %v1507, %v1509
      %v1521 = vsel %vm1518, %v1509, %v1511
      %v1522 = vsel %vm1518, %v1511, %v1513
      %v1523 = vsel %vm1518, %v1513, %v1515
      %v1524 = vsel %vm1518, %v1515, %v1517
      %1532 = vst [vmem:[#allocation2 + $0x4d0] sm:$0xf] %v1519
      %1533 = vst [vmem:[#allocation2 + $0x4d8] sm:$0xf] %v1520
      %1534 = vst [vmem:[#allocation2 + $0x4e0] sm:$0xf] %v1521
      %1535 = vst [vmem:[#allocation2 + $0x4e8] sm:$0xf] %v1522
      %1536 = vst [vmem:[#allocation2 + $0x4f0] sm:$0xf] %v1523
      %1537 = vst [vmem:[#allocation2 + $0x4f8] sm:$0xf] %v1524
      %1538 = vst.msk [vmem:[#allocation2 + $0x500] sm:$0xf] %vm489, %v1517
      %v1539 = vld [vmem:[%s273 + $0x4] sm:$0xff]
      %v1540 = vld [vmem:[%s273 + $0xc] sm:$0xff]
      %v1541 = vld [vmem:[%s273 + $0x14] sm:$0xff]
      %v1542 = vld [vmem:[%s273 + $0x1c] sm:$0xf]
      %v1547 = vcombine.high %v1539, %v1539
      %v1548 = vcombine.high %v1540, %v1540
      %v1549 = vcombine.high %v1541, %v1541
      %1550 = vrot.lane.b32.xlu0 %v1539, 44
      %v1551 = vpop.permute.xlu0 %1550
      %1552 = vrot.lane.b32.xlu0 %v1547, 44
      %v1553 = vpop.permute.xlu0 %1552
      %1554 = vrot.lane.b32.xlu0 %v1540, 44
      %v1555 = vpop.permute.xlu0 %1554
      %1556 = vrot.lane.b32.xlu0 %v1548, 44
      %v1557 = vpop.permute.xlu0 %1556
      %1558 = vrot.lane.b32.xlu0 %v1541, 44
      %v1559 = vpop.permute.xlu0 %1558
      %1560 = vrot.lane.b32.xlu0 %v1549, 44
      %v1561 = vpop.permute.xlu0 %1560
      %1562 = vrot.lane.b32.xlu0 %v1542, 44
      %v1563 = vpop.permute.xlu0 %1562
      %vm1564 = vcmask 359424
      %v1565 = vsel %vm1564, %v1551, %v1553
      %v1566 = vsel %vm1564, %v1553, %v1555
      %v1567 = vsel %vm1564, %v1555, %v1557
      %v1568 = vsel %vm1564, %v1557, %v1559
      %v1569 = vsel %vm1564, %v1559, %v1561
      %v1570 = vsel %vm1564, %v1561, %v1563
      %1578 = vst [vmem:[#allocation2 + $0x508] sm:$0xf] %v1565
      %1579 = vst [vmem:[#allocation2 + $0x510] sm:$0xf] %v1566
      %1580 = vst [vmem:[#allocation2 + $0x518] sm:$0xf] %v1567
      %1581 = vst [vmem:[#allocation2 + $0x520] sm:$0xf] %v1568
      %1582 = vst [vmem:[#allocation2 + $0x528] sm:$0xf] %v1569
      %1583 = vst [vmem:[#allocation2 + $0x530] sm:$0xf] %v1570
      %1584 = vst.msk [vmem:[#allocation2 + $0x538] sm:$0xf] %vm489, %v1563
      %v1585 = vld [vmem:[%s273 + $0x4] sm:$0xff]
      %v1586 = vld [vmem:[%s273 + $0xc] sm:$0xff]
      %v1587 = vld [vmem:[%s273 + $0x14] sm:$0xff]
      %v1588 = vld [vmem:[%s273 + $0x1c] sm:$0xf]
      %v1593 = vcombine.high %v1585, %v1585
      %v1594 = vcombine.high %v1586, %v1586
      %v1595 = vcombine.high %v1587, %v1587
      %1596 = vrot.lane.b32.xlu0 %v1585, 36
      %v1597 = vpop.permute.xlu0 %1596
      %1598 = vrot.lane.b32.xlu0 %v1593, 36
      %v1599 = vpop.permute.xlu0 %1598
      %1600 = vrot.lane.b32.xlu0 %v1586, 36
      %v1601 = vpop.permute.xlu0 %1600
      %1602 = vrot.lane.b32.xlu0 %v1594, 36
      %v1603 = vpop.permute.xlu0 %1602
      %1604 = vrot.lane.b32.xlu0 %v1587, 36
      %v1605 = vpop.permute.xlu0 %1604
      %1606 = vrot.lane.b32.xlu0 %v1595, 36
      %v1607 = vpop.permute.xlu0 %1606
      %1608 = vrot.lane.b32.xlu0 %v1588, 36
      %v1609 = vpop.permute.xlu0 %1608
      %vm1610 = vcmask 293888
      %v1611 = vsel %vm1610, %v1597, %v1599
      %v1612 = vsel %vm1610, %v1599, %v1601
      %v1613 = vsel %vm1610, %v1601, %v1603
      %v1614 = vsel %vm1610, %v1603, %v1605
      %v1615 = vsel %vm1610, %v1605, %v1607
      %v1616 = vsel %vm1610, %v1607, %v1609
      %1624 = vst [vmem:[#allocation2 + $0x540] sm:$0xf] %v1611
      %1625 = vst [vmem:[#allocation2 + $0x548] sm:$0xf] %v1612
      %1626 = vst [vmem:[#allocation2 + $0x550] sm:$0xf] %v1613
      %1627 = vst [vmem:[#allocation2 + $0x558] sm:$0xf] %v1614
      %1628 = vst [vmem:[#allocation2 + $0x560] sm:$0xf] %v1615
      %1629 = vst [vmem:[#allocation2 + $0x568] sm:$0xf] %v1616
      %1630 = vst.msk [vmem:[#allocation2 + $0x570] sm:$0xf] %vm489, %v1609
      %v1631 = vld [vmem:[%s273 + $0x4] sm:$0xff]
      %v1632 = vld [vmem:[%s273 + $0xc] sm:$0xff]
      %v1633 = vld [vmem:[%s273 + $0x14] sm:$0xff]
      %v1634 = vld [vmem:[%s273 + $0x1c] sm:$0xf]
      %v1639 = vcombine.high %v1631, %v1631
      %v1640 = vcombine.high %v1632, %v1632
      %v1641 = vcombine.high %v1633, %v1633
      %1642 = vrot.lane.b32.xlu0 %v1631, 35
      %v1643 = vpop.permute.xlu0 %1642
      %1644 = vrot.lane.b32.xlu0 %v1639, 35
      %v1645 = vpop.permute.xlu0 %1644
      %1646 = vrot.lane.b32.xlu0 %v1632, 35
      %v1647 = vpop.permute.xlu0 %1646
      %1648 = vrot.lane.b32.xlu0 %v1640, 35
      %v1649 = vpop.permute.xlu0 %1648
      %1650 = vrot.lane.b32.xlu0 %v1633, 35
      %v1651 = vpop.permute.xlu0 %1650
      %1652 = vrot.lane.b32.xlu0 %v1641, 35
      %v1653 = vpop.permute.xlu0 %1652
      %1654 = vrot.lane.b32.xlu0 %v1634, 35
      %v1655 = vpop.permute.xlu0 %1654
      %vm1656 = vcmask 285696
      %v1657 = vsel %vm1656, %v1643, %v1645
      %v1658 = vsel %vm1656, %v1645, %v1647
      %v1659 = vsel %vm1656, %v1647, %v1649
      %v1660 = vsel %vm1656, %v1649, %v1651
      %v1661 = vsel %vm1656, %v1651, %v1653
      %v1662 = vsel %vm1656, %v1653, %v1655
      %1670 = vst [vmem:[#allocation2 + $0x578] sm:$0xf] %v1657
      %1671 = vst [vmem:[#allocation2 + $0x580] sm:$0xf] %v1658
      %1672 = vst [vmem:[#allocation2 + $0x588] sm:$0xf] %v1659
      %1673 = vst [vmem:[#allocation2 + $0x590] sm:$0xf] %v1660
      %1674 = vst [vmem:[#allocation2 + $0x598] sm:$0xf] %v1661
      %1675 = vst [vmem:[#allocation2 + $0x5a0] sm:$0xf] %v1662
      %1676 = vst.msk [vmem:[#allocation2 + $0x5a8] sm:$0xf] %vm489, %v1655
      %v1677 = vld [vmem:[%s273 + $0x4] sm:$0xff]
      %v1678 = vld [vmem:[%s273 + $0xc] sm:$0xff]
      %v1679 = vld [vmem:[%s273 + $0x14] sm:$0xff]
      %v1680 = vld [vmem:[%s273 + $0x1c] sm:$0xf]
      %v1685 = vcombine.high %v1677, %v1677
      %v1686 = vcombine.high %v1678, %v1678
      %v1687 = vcombine.high %v1679, %v1679
      %1688 = vrot.lane.b32.xlu0 %v1677, 34
      %v1689 = vpop.permute.xlu0 %1688
      %1690 = vrot.lane.b32.xlu0 %v1685, 34
      %v1691 = vpop.permute.xlu0 %1690
      %1692 = vrot.lane.b32.xlu0 %v1678, 34
      %v1693 = vpop.permute.xlu0 %1692
      %1694 = vrot.lane.b32.xlu0 %v1686, 34
      %v1695 = vpop.permute.xlu0 %1694
      %1696 = vrot.lane.b32.xlu0 %v1679, 34
      %v1697 = vpop.permute.xlu0 %1696
      %1698 = vrot.lane.b32.xlu0 %v1687, 34
      %v1699 = vpop.permute.xlu0 %1698
      %1700 = vrot.lane.b32.xlu0 %v1680, 34
      %v1701 = vpop.permute.xlu0 %1700
      %vm1702 = vcmask 277504
      %v1703 = vsel %vm1702, %v1689, %v1691
      %v1704 = vsel %vm1702, %v1691, %v1693
      %v1705 = vsel %vm1702, %v1693, %v1695
      %v1706 = vsel %vm1702, %v1695, %v1697
      %v1707 = vsel %vm1702, %v1697, %v1699
      %v1708 = vsel %vm1702, %v1699, %v1701
      %1716 = vst [vmem:[#allocation2 + $0x5b0] sm:$0xf] %v1703
      %1717 = vst [vmem:[#allocation2 + $0x5b8] sm:$0xf] %v1704
      %1718 = vst [vmem:[#allocation2 + $0x5c0] sm:$0xf] %v1705
      %1719 = vst [vmem:[#allocation2 + $0x5c8] sm:$0xf] %v1706
      %1720 = vst [vmem:[#allocation2 + $0x5d0] sm:$0xf] %v1707
      %1721 = vst [vmem:[#allocation2 + $0x5d8] sm:$0xf] %v1708
      %1722 = vst.msk [vmem:[#allocation2 + $0x5e0] sm:$0xf] %vm489, %v1701
      %v1723 = vld [vmem:[%s2] sm:$0xff]
      %v1724 = vld [vmem:[%s2 + $0x8] sm:$0xff]
      %v1725 = vld [vmem:[#allocation2] sm:$0xff]
      %v1726 = vld [vmem:[#allocation2 + $0x8] sm:$0xff]
      %v1727 = vld [vmem:[#allocation2 + $0x10] sm:$0xff]
      %v1728 = vld [vmem:[#allocation2 + $0x18] sm:$0xff]
      %v1729 = vld [vmem:[#allocation2 + $0x20] sm:$0xff]
      %v1730 = vld [vmem:[#allocation2 + $0x28] sm:$0xff]
      %v1731 = vld [vmem:[#allocation2 + $0x30] sm:$0xff]
      %v1732 = vld [vmem:[#allocation2 + $0x38] sm:$0xff]
      %v1733 = vld [vmem:[#allocation2 + $0x40] sm:$0xff]
      %v1734 = vld [vmem:[#allocation2 + $0x48] sm:$0xff]
      %v1735 = vld [vmem:[#allocation2 + $0x50] sm:$0xff]
      %v1736 = vld [vmem:[#allocation2 + $0x58] sm:$0xff]
      %v1737 = vld [vmem:[#allocation2 + $0x60] sm:$0xff]
      %v1738 = vld [vmem:[#allocation2 + $0x68] sm:$0xff]
      %v1739 = vld [vmem:[#allocation2 + $0x70] sm:$0xff]
      %v1740 = vld [vmem:[#allocation2 + $0x78] sm:$0xff]
      %v1741 = vld [vmem:[#allocation2 + $0x80] sm:$0xff]
      %v1742 = vld [vmem:[#allocation2 + $0x88] sm:$0xff]
      %v1743 = vld [vmem:[#allocation2 + $0x90] sm:$0xff]
      %v1744 = vld [vmem:[#allocation2 + $0x98] sm:$0xff]
      %v1745 = vld [vmem:[#allocation2 + $0xa0] sm:$0xff]
      %v1746 = vld [vmem:[#allocation2 + $0xa8] sm:$0xff]
      %v1747 = vld [vmem:[#allocation2 + $0xb0] sm:$0xff]
      %v1748 = vld [vmem:[#allocation2 + $0xb8] sm:$0xff]
      %v1749 = vld [vmem:[#allocation2 + $0xc0] sm:$0xff]
      %v1750 = vld [vmem:[#allocation2 + $0xc8] sm:$0xff]
      %v1751 = vld [vmem:[#allocation2 + $0xd0] sm:$0xff]
      %v1752 = vld [vmem:[#allocation2 + $0xd8] sm:$0xff]
      %v1753 = vld [vmem:[#allocation2 + $0xe0] sm:$0xff]
      %v1754 = vld [vmem:[#allocation2 + $0xe8] sm:$0xff]
      %v1755 = vld [vmem:[#allocation2 + $0xf0] sm:$0xff]
      %v1756 = vld [vmem:[#allocation2 + $0xf8] sm:$0xff]
      %v1757 = vld [vmem:[#allocation2 + $0x100] sm:$0xff]
      %v1758 = vld [vmem:[#allocation2 + $0x108] sm:$0xff]
      %v1759 = vld [vmem:[#allocation2 + $0x110] sm:$0xff]
      %v1760 = vld [vmem:[#allocation2 + $0x118] sm:$0xff]
      %v1761 = vld [vmem:[#allocation2 + $0x120] sm:$0xff]
      %v1762 = vld [vmem:[#allocation2 + $0x128] sm:$0xff]
      %v1763 = vld [vmem:[#allocation2 + $0x130] sm:$0xff]
      %v1764 = vld [vmem:[#allocation2 + $0x138] sm:$0xff]
      %v1765 = vld [vmem:[#allocation2 + $0x140] sm:$0xff]
      %v1766 = vld [vmem:[#allocation2 + $0x148] sm:$0xff]
      %v1767 = vld [vmem:[#allocation2 + $0x150] sm:$0xff]
      %v1768 = vld [vmem:[#allocation2 + $0x158] sm:$0xff]
      %v1769 = vld [vmem:[#allocation2 + $0x160] sm:$0xff]
      %v1770 = vld [vmem:[#allocation2 + $0x168] sm:$0xff]
      %v1771 = vld [vmem:[#allocation2 + $0x170] sm:$0xff]
      %v1772 = vld [vmem:[#allocation2 + $0x178] sm:$0xff]
      %v1773 = vld [vmem:[#allocation2 + $0x180] sm:$0xff]
      %v1774 = vld [vmem:[#allocation2 + $0x188] sm:$0xff]
      %v1775 = vld [vmem:[#allocation2 + $0x190] sm:$0xff]
      %v1776 = vld [vmem:[#allocation2 + $0x198] sm:$0xff]
      %v1777 = vld [vmem:[#allocation2 + $0x1a0] sm:$0xff]
      %v1778 = vld [vmem:[#allocation2 + $0x1a8] sm:$0xff]
      %v1779 = vld [vmem:[#allocation2 + $0x1b0] sm:$0xff]
      %v1780 = vld [vmem:[#allocation2 + $0x1b8] sm:$0xff]
      %v1781 = vld [vmem:[#allocation2 + $0x1c0] sm:$0xff]
      %v1782 = vld [vmem:[#allocation2 + $0x1c8] sm:$0xff]
      %v1783 = vld [vmem:[#allocation2 + $0x1d0] sm:$0xff]
      %v1784 = vld [vmem:[#allocation2 + $0x1d8] sm:$0xff]
      %v1785 = vld [vmem:[#allocation2 + $0x1e0] sm:$0xff]
      %v1786 = vld [vmem:[#allocation2 + $0x1e8] sm:$0xff]
      %v1787 = vld [vmem:[#allocation2 + $0x1f0] sm:$0xff]
      %v1788 = vld [vmem:[#allocation2 + $0x1f8] sm:$0xff]
      %v1789 = vld [vmem:[#allocation2 + $0x200] sm:$0xff]
      %v1790 = vld [vmem:[#allocation2 + $0x208] sm:$0xff]
      %v1791 = vld [vmem:[#allocation2 + $0x210] sm:$0xff]
      %v1792 = vld [vmem:[#allocation2 + $0x218] sm:$0xff]
      %v1793 = vld [vmem:[#allocation2 + $0x220] sm:$0xff]
      %v1794 = vld [vmem:[#allocation2 + $0x228] sm:$0xff]
      %v1795 = vld [vmem:[#allocation2 + $0x230] sm:$0xff]
      %v1796 = vld [vmem:[#allocation2 + $0x238] sm:$0xff]
      %v1797 = vld [vmem:[#allocation2 + $0x240] sm:$0xff]
      %v1798 = vld [vmem:[#allocation2 + $0x248] sm:$0xff]
      %v1799 = vld [vmem:[#allocation2 + $0x250] sm:$0xff]
      %v1800 = vld [vmem:[#allocation2 + $0x258] sm:$0xff]
      %v1801 = vld [vmem:[#allocation2 + $0x260] sm:$0xff]
      %v1802 = vld [vmem:[#allocation2 + $0x268] sm:$0xff]
      %v1803 = vld [vmem:[#allocation2 + $0x270] sm:$0xff]
      %v1804 = vld [vmem:[#allocation2 + $0x278] sm:$0xff]
      %v1805 = vld [vmem:[#allocation2 + $0x280] sm:$0xff]
      %v1806 = vld [vmem:[#allocation2 + $0x288] sm:$0xff]
      %v1807 = vld [vmem:[#allocation2 + $0x290] sm:$0xff]
      %v1808 = vld [vmem:[#allocation2 + $0x298] sm:$0xff]
      %v1809 = vld [vmem:[#allocation2 + $0x2a0] sm:$0xff]
      %v1810 = vld [vmem:[#allocation2 + $0x2a8] sm:$0xff]
      %v1811 = vld [vmem:[#allocation2 + $0x2b0] sm:$0xff]
      %v1812 = vld [vmem:[#allocation2 + $0x2b8] sm:$0xff]
      %v1813 = vld [vmem:[#allocation2 + $0x2c0] sm:$0xff]
      %v1814 = vld [vmem:[#allocation2 + $0x2c8] sm:$0xff]
      %v1815 = vld [vmem:[#allocation2 + $0x2d0] sm:$0xff]
      %v1816 = vld [vmem:[#allocation2 + $0x2d8] sm:$0xff]
      %v1817 = vld [vmem:[#allocation2 + $0x2e0] sm:$0xff]
      %v1818 = vld [vmem:[#allocation2 + $0x2e8] sm:$0xff]
      %v1819 = vld [vmem:[#allocation2 + $0x2f0] sm:$0xff]
      %v1820 = vld [vmem:[#allocation2 + $0x2f8] sm:$0xff]
      %v1821 = vld [vmem:[#allocation2 + $0x300] sm:$0xff]
      %v1822 = vld [vmem:[#allocation2 + $0x308] sm:$0xff]
      %v1823 = vld [vmem:[#allocation2 + $0x310] sm:$0xff]
      %v1824 = vld [vmem:[#allocation2 + $0x318] sm:$0xff]
      %v1825 = vld [vmem:[#allocation2 + $0x320] sm:$0xff]
      %v1826 = vld [vmem:[#allocation2 + $0x328] sm:$0xff]
      %v1827 = vld [vmem:[#allocation2 + $0x330] sm:$0xff]
      %v1828 = vld [vmem:[#allocation2 + $0x338] sm:$0xff]
      %v1829 = vld [vmem:[#allocation2 + $0x340] sm:$0xff]
      %v1830 = vld [vmem:[#allocation2 + $0x348] sm:$0xff]
      %v1831 = vld [vmem:[#allocation2 + $0x350] sm:$0xff]
      %v1832 = vld [vmem:[#allocation2 + $0x358] sm:$0xff]
      %v1833 = vld [vmem:[#allocation2 + $0x360] sm:$0xff]
      %v1834 = vld [vmem:[#allocation2 + $0x368] sm:$0xff]
      %v1835 = vld [vmem:[#allocation2 + $0x370] sm:$0xff]
      %v1836 = vld [vmem:[#allocation2 + $0x378] sm:$0xff]
      %v1837 = vld [vmem:[#allocation2 + $0x380] sm:$0xff]
      %v1838 = vld [vmem:[#allocation2 + $0x388] sm:$0xff]
      %v1839 = vld [vmem:[#allocation2 + $0x390] sm:$0xff]
      %v1840 = vld [vmem:[#allocation2 + $0x398] sm:$0xff]
      %v1841 = vld [vmem:[#allocation2 + $0x3a0] sm:$0xff]
      %v1842 = vld [vmem:[#allocation2 + $0x3a8] sm:$0xff]
      %v1843 = vld [vmem:[#allocation2 + $0x3b0] sm:$0xff]
      %v1844 = vld [vmem:[#allocation2 + $0x3b8] sm:$0xff]
      %v1845 = vld [vmem:[#allocation2 + $0x3c0] sm:$0xff]
      %v1846 = vld [vmem:[#allocation2 + $0x3c8] sm:$0xff]
      %v1847 = vld [vmem:[#allocation2 + $0x3d0] sm:$0xff]
      %v1848 = vld [vmem:[#allocation2 + $0x3d8] sm:$0xff]
      %v1849 = vld [vmem:[#allocation2 + $0x3e0] sm:$0xff]
      %v1850 = vld [vmem:[#allocation2 + $0x3e8] sm:$0xff]
      %v1851 = vld [vmem:[#allocation2 + $0x3f0] sm:$0xff]
      %v1852 = vld [vmem:[#allocation2 + $0x3f8] sm:$0xff]
      %v1853 = vld [vmem:[#allocation2 + $0x400] sm:$0xff]
      %v1854 = vld [vmem:[#allocation2 + $0x408] sm:$0xff]
      %v1855 = vld [vmem:[#allocation2 + $0x410] sm:$0xff]
      %v1856 = vld [vmem:[#allocation2 + $0x418] sm:$0xff]
      %v1857 = vld [vmem:[#allocation2 + $0x420] sm:$0xff]
      %v1858 = vld [vmem:[#allocation2 + $0x428] sm:$0xff]
      %v1859 = vld [vmem:[#allocation2 + $0x430] sm:$0xff]
      %v1860 = vld [vmem:[#allocation2 + $0x438] sm:$0xff]
      %v1861 = vld [vmem:[#allocation2 + $0x440] sm:$0xff]
      %v1862 = vld [vmem:[#allocation2 + $0x448] sm:$0xff]
      %v1863 = vld [vmem:[#allocation2 + $0x450] sm:$0xff]
      %v1864 = vld [vmem:[#allocation2 + $0x458] sm:$0xff]
      %v1865 = vld [vmem:[#allocation2 + $0x460] sm:$0xff]
      %v1866 = vld [vmem:[#allocation2 + $0x468] sm:$0xff]
      %v1867 = vld [vmem:[#allocation2 + $0x470] sm:$0xff]
      %v1868 = vld [vmem:[#allocation2 + $0x478] sm:$0xff]
      %v1869 = vld [vmem:[#allocation2 + $0x480] sm:$0xff]
      %v1870 = vld [vmem:[#allocation2 + $0x488] sm:$0xff]
      %v1871 = vld [vmem:[#allocation2 + $0x490] sm:$0xff]
      %v1872 = vld [vmem:[#allocation2 + $0x498] sm:$0xff]
      %v1873 = vld [vmem:[#allocation2 + $0x4a0] sm:$0xff]
      %v1874 = vld [vmem:[#allocation2 + $0x4a8] sm:$0xff]
      %v1875 = vld [vmem:[#allocation2 + $0x4b0] sm:$0xff]
      %v1876 = vld [vmem:[#allocation2 + $0x4b8] sm:$0xff]
      %v1877 = vld [vmem:[#allocation2 + $0x4c0] sm:$0xff]
      %v1878 = vld [vmem:[#allocation2 + $0x4c8] sm:$0xff]
      %v1879 = vld [vmem:[#allocation2 + $0x4d0] sm:$0xff]
      %v1880 = vld [vmem:[#allocation2 + $0x4d8] sm:$0xff]
      %v1881 = vld [vmem:[#allocation2 + $0x4e0] sm:$0xff]
      %v1882 = vld [vmem:[#allocation2 + $0x4e8] sm:$0xff]
      %v1883 = vld [vmem:[#allocation2 + $0x4f0] sm:$0xff]
      %v1884 = vld [vmem:[#allocation2 + $0x4f8] sm:$0xff]
      %v1885 = vld [vmem:[#allocation2 + $0x500] sm:$0xff]
      %v1886 = vld [vmem:[#allocation2 + $0x508] sm:$0xff]
      %v1887 = vld [vmem:[#allocation2 + $0x510] sm:$0xff]
      %v1888 = vld [vmem:[#allocation2 + $0x518] sm:$0xff]
      %v1889 = vld [vmem:[#allocation2 + $0x520] sm:$0xff]
      %v1890 = vld [vmem:[#allocation2 + $0x528] sm:$0xff]
      %v1891 = vld [vmem:[#allocation2 + $0x530] sm:$0xff]
      %v1892 = vld [vmem:[#allocation2 + $0x538] sm:$0xff]
      %v1893 = vld [vmem:[#allocation2 + $0x540] sm:$0xff]
      %v1894 = vld [vmem:[#allocation2 + $0x548] sm:$0xff]
      %v1895 = vld [vmem:[#allocation2 + $0x550] sm:$0xff]
      %v1896 = vld [vmem:[#allocation2 + $0x558] sm:$0xff]
      %v1897 = vld [vmem:[#allocation2 + $0x560] sm:$0xff]
      %v1898 = vld [vmem:[#allocation2 + $0x568] sm:$0xff]
      %v1899 = vld [vmem:[#allocation2 + $0x570] sm:$0xff]
      %v1900 = vld [vmem:[#allocation2 + $0x578] sm:$0xff]
      %v1901 = vld [vmem:[#allocation2 + $0x580] sm:$0xff]
      %v1902 = vld [vmem:[#allocation2 + $0x588] sm:$0xff]
      %v1903 = vld [vmem:[#allocation2 + $0x590] sm:$0xff]
      %v1904 = vld [vmem:[#allocation2 + $0x598] sm:$0xff]
      %v1905 = vld [vmem:[#allocation2 + $0x5a0] sm:$0xff]
      %v1906 = vld [vmem:[#allocation2 + $0x5a8] sm:$0xff]
      %v1907 = vld [vmem:[#allocation2 + $0x5b0] sm:$0xff]
      %v1908 = vld [vmem:[#allocation2 + $0x5b8] sm:$0xff]
      %v1909 = vld [vmem:[#allocation2 + $0x5c0] sm:$0xff]
      %v1910 = vld [vmem:[#allocation2 + $0x5c8] sm:$0xff]
      %v1911 = vld [vmem:[#allocation2 + $0x5d0] sm:$0xff]
      %v1912 = vld [vmem:[#allocation2 + $0x5d8] sm:$0xff]
      %v1913 = vld [vmem:[#allocation2 + $0x5e0] sm:$0xff]
      %vm1914 = vcmask 719872
      %v1916 = vsel %vm1914, %v1724, 0
      %1918 = vmatprep.subr.mxu0 %v1726
      %1919 = vmatpush1.msra.mxu0 %v1725
      %1920 = vmatprep.subr.mxu0 %v1733
      %1921 = vmatpush1.msra.mxu0 %v1732
      %1922 = vmatprep.subr.mxu0 %v1740
      %1923 = vmatpush1.msra.mxu0 %v1739
      %1924 = vmatprep.subr.mxu0 %v1747
      %1925 = vmatpush1.msra.mxu0 %v1746
      %1926 = vmatprep.subr.mxu0 %v1754
      %1927 = vmatpush1.msra.mxu0 %v1753
      %1928 = vmatprep.subr.mxu0 %v1761
      %1929 = vmatpush1.msra.mxu0 %v1760
      %1930 = vmatprep.subr.mxu0 %v1768
      %1931 = vmatpush1.msra.mxu0 %v1767
      %1932 = vmatprep.subr.mxu0 %v1775
      %1933 = vmatpush1.msra.mxu0 %v1774
      %1934 = vmatprep.subr.mxu0 %v1782
      %1935 = vmatpush1.msra.mxu0 %v1781
      %1936 = vmatprep.subr.mxu0 %v1789
      %1937 = vmatpush1.msra.mxu0 %v1788
      %1938 = vmatprep.subr.mxu0 %v1796
      %1939 = vmatpush1.msra.mxu0 %v1795
      %1940 = vmatprep.subr.mxu0 %v1803
      %1941 = vmatpush1.msra.mxu0 %v1802
      %1942 = vmatprep.subr.mxu0 %v1810
      %1943 = vmatpush1.msra.mxu0 %v1809
      %1944 = vmatprep.subr.mxu0 %v1817
      %1945 = vmatpush1.msra.mxu0 %v1816
      %1946 = vmatprep.subr.mxu0 %v1824
      %1947 = vmatpush1.msra.mxu0 %v1823
      %1948 = vmatprep.subr.mxu0 %v1831
      %1949 = vmatpush1.msra.mxu0 %v1830
      %1950 = vmatprep.subr.mxu0 %v1838
      %1951 = vmatpush1.msra.mxu0 %v1837
      %1952 = vmatprep.subr.mxu0 %v1845
      %1953 = vmatpush1.msra.mxu0 %v1844
      %1954 = vmatprep.subr.mxu0 %v1852
      %1955 = vmatpush1.msra.mxu0 %v1851
      %1956 = vmatprep.subr.mxu0 %v1859
      %1957 = vmatpush1.msra.mxu0 %v1858
      %1958 = vmatprep.subr.mxu0 %v1866
      %1959 = vmatpush1.msra.mxu0 %v1865
      %1960 = vmatprep.subr.mxu0 %v1873
      %1961 = vmatpush1.msra.mxu0 %v1872
      %1962 = vmatprep.subr.mxu0 %v1880
      %1963 = vmatpush1.msra.mxu0 %v1879
      %1964 = vmatprep.subr.mxu0 %v1887
      %1965 = vmatpush1.msra.mxu0 %v1886
      %1966 = vmatprep.subr.mxu0 %v1894
      %1967 = vmatpush1.msra.mxu0 %v1893
      %1968 = vmatprep.subr.mxu0 %v1901
      %1969 = vmatpush1.msra.mxu0 %v1900
      %1970 = vmatprep.subr.mxu0 %v1908
      %1971 = vmatpush1.msra.mxu0 %v1907
      %1972 = vmatprep.subr.mxu0 0.0
      %1973 = vmatpush1.msra.mxu0 0.0
      %1974 = vmatprep.subr.mxu0 0.0
      %1975 = vmatpush1.msra.mxu0 0.0
      %1976 = vmatprep.subr.mxu0 0.0
      %1977 = vmatpush1.msra.mxu0 0.0
      %1978 = vmatprep.subr.mxu0 0.0
      %1979 = vmatpush1.msra.mxu0 0.0
      %1980 = vmatprep.subr.mxu0 0.0
      %1981 = vmatpush1.msra.mxu0 0.0
      %1982 = vmatprep.mubr.f32.mxu0 %v1916
      %1983 = vmatmul.mubr.f32.gmra.mrb[0].mxu0 %v1723
      %v1984 = vpop.f32.mrb[0].mxu0
      %v1985 = vadd.f32 0.0, %v1984
      %v1986 = vpop.f32.mrb[0].mxu0
      %v1987 = vadd.f32 0.0, %v1986
      %1988 = vdwg.mxu0
      %1989 = vmatprep.subr.mxu0 %v1728
      %1990 = vmatpush1.msra.mxu0 %v1727
      %1991 = vmatprep.subr.mxu0 %v1735
      %1992 = vmatpush1.msra.mxu0 %v1734
      %1993 = vmatprep.subr.mxu0 %v1742
      %1994 = vmatpush1.msra.mxu0 %v1741
      %1995 = vmatprep.subr.mxu0 %v1749
      %1996 = vmatpush1.msra.mxu0 %v1748
      %1997 = vmatprep.subr.mxu0 %v1756
      %1998 = vmatpush1.msra.mxu0 %v1755
      %1999 = vmatprep.subr.mxu0 %v1763
      %2000 = vmatpush1.msra.mxu0 %v1762
      %2001 = vmatprep.subr.mxu0 %v1770
      %2002 = vmatpush1.msra.mxu0 %v1769
      %2003 = vmatprep.subr.mxu0 %v1777
      %2004 = vmatpush1.msra.mxu0 %v1776
      %2005 = vmatprep.subr.mxu0 %v1784
      %2006 = vmatpush1.msra.mxu0 %v1783
      %2007 = vmatprep.subr.mxu0 %v1791
      %2008 = vmatpush1.msra.mxu0 %v1790
      %2009 = vmatprep.subr.mxu0 %v1798
      %2010 = vmatpush1.msra.mxu0 %v1797
      %2011 = vmatprep.subr.mxu0 %v1805
      %2012 = vmatpush1.msra.mxu0 %v1804
      %2013 = vmatprep.subr.mxu0 %v1812
      %2014 = vmatpush1.msra.mxu0 %v1811
      %2015 = vmatprep.subr.mxu0 %v1819
      %2016 = vmatpush1.msra.mxu0 %v1818
      %2017 = vmatprep.subr.mxu0 %v1826
      %2018 = vmatpush1.msra.mxu0 %v1825
      %2019 = vmatprep.subr.mxu0 %v1833
      %2020 = vmatpush1.msra.mxu0 %v1832
      %2021 = vmatprep.subr.mxu0 %v1840
      %2022 = vmatpush1.msra.mxu0 %v1839
      %2023 = vmatprep.subr.mxu0 %v1847
      %2024 = vmatpush1.msra.mxu0 %v1846
      %2025 = vmatprep.subr.mxu0 %v1854
      %2026 = vmatpush1.msra.mxu0 %v1853
      %2027 = vmatprep.subr.mxu0 %v1861
      %2028 = vmatpush1.msra.mxu0 %v1860
      %2029 = vmatprep.subr.mxu0 %v1868
      %2030 = vmatpush1.msra.mxu0 %v1867
      %2031 = vmatprep.subr.mxu0 %v1875
      %2032 = vmatpush1.msra.mxu0 %v1874
      %2033 = vmatprep.subr.mxu0 %v1882
      %2034 = vmatpush1.msra.mxu0 %v1881
      %2035 = vmatprep.subr.mxu0 %v1889
      %2036 = vmatpush1.msra.mxu0 %v1888
      %2037 = vmatprep.subr.mxu0 %v1896
      %2038 = vmatpush1.msra.mxu0 %v1895
      %2039 = vmatprep.subr.mxu0 %v1903
      %2040 = vmatpush1.msra.mxu0 %v1902
      %2041 = vmatprep.subr.mxu0 %v1910
      %2042 = vmatpush1.msra.mxu0 %v1909
      %2043 = vmatprep.subr.mxu0 0.0
      %2044 = vmatpush1.msra.mxu0 0.0
      %2045 = vmatprep.subr.mxu0 0.0
      %2046 = vmatpush1.msra.mxu0 0.0
      %2047 = vmatprep.subr.mxu0 0.0
      %2048 = vmatpush1.msra.mxu0 0.0
      %2049 = vmatprep.subr.mxu0 0.0
      %2050 = vmatpush1.msra.mxu0 0.0
      %2051 = vmatprep.subr.mxu0 0.0
      %2052 = vmatpush1.msra.mxu0 0.0
      %2053 = vmatprep.mubr.f32.mxu0 %v1916
      %2054 = vmatmul.mubr.f32.gmra.mrb[0].mxu0 %v1723
      %v2055 = vpop.f32.mrb[0].mxu0
      %v2056 = vadd.f32 0.0, %v2055
      %v2057 = vpop.f32.mrb[0].mxu0
      %v2058 = vadd.f32 0.0, %v2057
      %2059 = vdwg.mxu0
      %2060 = vmatprep.subr.mxu0 %v1730
      %2061 = vmatpush1.msra.mxu0 %v1729
      %2062 = vmatprep.subr.mxu0 %v1737
      %2063 = vmatpush1.msra.mxu0 %v1736
      %2064 = vmatprep.subr.mxu0 %v1744
      %2065 = vmatpush1.msra.mxu0 %v1743
      %2066 = vmatprep.subr.mxu0 %v1751
      %2067 = vmatpush1.msra.mxu0 %v1750
      %2068 = vmatprep.subr.mxu0 %v1758
      %2069 = vmatpush1.msra.mxu0 %v1757
      %2070 = vmatprep.subr.mxu0 %v1765
      %2071 = vmatpush1.msra.mxu0 %v1764
      %2072 = vmatprep.subr.mxu0 %v1772
      %2073 = vmatpush1.msra.mxu0 %v1771
      %2074 = vmatprep.subr.mxu0 %v1779
      %2075 = vmatpush1.msra.mxu0 %v1778
      %2076 = vmatprep.subr.mxu0 %v1786
      %2077 = vmatpush1.msra.mxu0 %v1785
      %2078 = vmatprep.subr.mxu0 %v1793
      %2079 = vmatpush1.msra.mxu0 %v1792
      %2080 = vmatprep.subr.mxu0 %v1800
      %2081 = vmatpush1.msra.mxu0 %v1799
      %2082 = vmatprep.subr.mxu0 %v1807
      %2083 = vmatpush1.msra.mxu0 %v1806
      %2084 = vmatprep.subr.mxu0 %v1814
      %2085 = vmatpush1.msra.mxu0 %v1813
      %2086 = vmatprep.subr.mxu0 %v1821
      %2087 = vmatpush1.msra.mxu0 %v1820
      %2088 = vmatprep.subr.mxu0 %v1828
      %2089 = vmatpush1.msra.mxu0 %v1827
      %2090 = vmatprep.subr.mxu0 %v1835
      %2091 = vmatpush1.msra.mxu0 %v1834
      %2092 = vmatprep.subr.mxu0 %v1842
      %2093 = vmatpush1.msra.mxu0 %v1841
      %2094 = vmatprep.subr.mxu0 %v1849
      %2095 = vmatpush1.msra.mxu0 %v1848
      %2096 = vmatprep.subr.mxu0 %v1856
      %2097 = vmatpush1.msra.mxu0 %v1855
      %2098 = vmatprep.subr.mxu0 %v1863
      %2099 = vmatpush1.msra.mxu0 %v1862
      %2100 = vmatprep.subr.mxu0 %v1870
      %2101 = vmatpush1.msra.mxu0 %v1869
      %2102 = vmatprep.subr.mxu0 %v1877
      %2103 = vmatpush1.msra.mxu0 %v1876
      %2104 = vmatprep.subr.mxu0 %v1884
      %2105 = vmatpush1.msra.mxu0 %v1883
      %2106 = vmatprep.subr.mxu0 %v1891
      %2107 = vmatpush1.msra.mxu0 %v1890
      %2108 = vmatprep.subr.mxu0 %v1898
      %2109 = vmatpush1.msra.mxu0 %v1897
      %2110 = vmatprep.subr.mxu0 %v1905
      %2111 = vmatpush1.msra.mxu0 %v1904
      %2112 = vmatprep.subr.mxu0 %v1912
      %2113 = vmatpush1.msra.mxu0 %v1911
      %2114 = vmatprep.subr.mxu0 0.0
      %2115 = vmatpush1.msra.mxu0 0.0
      %2116 = vmatprep.subr.mxu0 0.0
      %2117 = vmatpush1.msra.mxu0 0.0
      %2118 = vmatprep.subr.mxu0 0.0
      %2119 = vmatpush1.msra.mxu0 0.0
      %2120 = vmatprep.subr.mxu0 0.0
      %2121 = vmatpush1.msra.mxu0 0.0
      %2122 = vmatprep.subr.mxu0 0.0
      %2123 = vmatpush1.msra.mxu0 0.0
      %2124 = vmatprep.mubr.f32.mxu0 %v1916
      %2125 = vmatmul.mubr.f32.gmra.mrb[0].mxu0 %v1723
      %v2126 = vpop.f32.mrb[0].mxu0
      %v2127 = vadd.f32 0.0, %v2126
      %v2128 = vpop.f32.mrb[0].mxu0
      %v2129 = vadd.f32 0.0, %v2128
      %2130 = vdwg.mxu0
      %2131 = vmatprep.subr.mxu0 0.0
      %2132 = vmatpush1.msra.mxu0 %v1731
      %2133 = vmatprep.subr.mxu0 0.0
      %2134 = vmatpush1.msra.mxu0 %v1738
      %2135 = vmatprep.subr.mxu0 0.0
      %2136 = vmatpush1.msra.mxu0 %v1745
      %2137 = vmatprep.subr.mxu0 0.0
      %2138 = vmatpush1.msra.mxu0 %v1752
      %2139 = vmatprep.subr.mxu0 0.0
      %2140 = vmatpush1.msra.mxu0 %v1759
      %2141 = vmatprep.subr.mxu0 0.0
      %2142 = vmatpush1.msra.mxu0 %v1766
      %2143 = vmatprep.subr.mxu0 0.0
      %2144 = vmatpush1.msra.mxu0 %v1773
      %2145 = vmatprep.subr.mxu0 0.0
      %2146 = vmatpush1.msra.mxu0 %v1780
      %2147 = vmatprep.subr.mxu0 0.0
      %2148 = vmatpush1.msra.mxu0 %v1787
      %2149 = vmatprep.subr.mxu0 0.0
      %2150 = vmatpush1.msra.mxu0 %v1794
      %2151 = vmatprep.subr.mxu0 0.0
      %2152 = vmatpush1.msra.mxu0 %v1801
      %2153 = vmatprep.subr.mxu0 0.0
      %2154 = vmatpush1.msra.mxu0 %v1808
      %2155 = vmatprep.subr.mxu0 0.0
      %2156 = vmatpush1.msra.mxu0 %v1815
      %2157 = vmatprep.subr.mxu0 0.0
      %2158 = vmatpush1.msra.mxu0 %v1822
      %2159 = vmatprep.subr.mxu0 0.0
      %2160 = vmatpush1.msra.mxu0 %v1829
      %2161 = vmatprep.subr.mxu0 0.0
      %2162 = vmatpush1.msra.mxu0 %v1836
      %2163 = vmatprep.subr.mxu0 0.0
      %2164 = vmatpush1.msra.mxu0 %v1843
      %2165 = vmatprep.subr.mxu0 0.0
      %2166 = vmatpush1.msra.mxu0 %v1850
      %2167 = vmatprep.subr.mxu0 0.0
      %2168 = vmatpush1.msra.mxu0 %v1857
      %2169 = vmatprep.subr.mxu0 0.0
      %2170 = vmatpush1.msra.mxu0 %v1864
      %2171 = vmatprep.subr.mxu0 0.0
      %2172 = vmatpush1.msra.mxu0 %v1871
      %2173 = vmatprep.subr.mxu0 0.0
      %2174 = vmatpush1.msra.mxu0 %v1878
      %2175 = vmatprep.subr.mxu0 0.0
      %2176 = vmatpush1.msra.mxu0 %v1885
      %2177 = vmatprep.subr.mxu0 0.0
      %2178 = vmatpush1.msra.mxu0 %v1892
      %2179 = vmatprep.subr.mxu0 0.0
      %2180 = vmatpush1.msra.mxu0 %v1899
      %2181 = vmatprep.subr.mxu0 0.0
      %2182 = vmatpush1.msra.mxu0 %v1906
      %2183 = vmatprep.subr.mxu0 0.0
      %2184 = vmatpush1.msra.mxu0 %v1913
      %2185 = vmatprep.subr.mxu0 0.0
      %2186 = vmatpush1.msra.mxu0 0.0
      %2187 = vmatprep.subr.mxu0 0.0
      %2188 = vmatpush1.msra.mxu0 0.0
      %2189 = vmatprep.subr.mxu0 0.0
      %2190 = vmatpush1.msra.mxu0 0.0
      %2191 = vmatprep.subr.mxu0 0.0
      %2192 = vmatpush1.msra.mxu0 0.0
      %2193 = vmatprep.subr.mxu0 0.0
      %2194 = vmatpush1.msra.mxu0 0.0
      %2195 = vmatprep.mubr.f32.mxu0 %v1916
      %2196 = vmatmul.mubr.f32.gmra.mrb[0].mxu0 %v1723
      %v2197 = vpop.f32.mrb[0].mxu0
      %v2198 = vadd.f32 0.0, %v2197
      %v2199 = vpop.f32.mrb[0].mxu0
      %2200 = vdwg.mxu0
      %v2201 = vld [vmem:[%s5] sm:$0xff]
      %2203 = vset.pattern.permute.xlu0 0
      %2204 = vperm.xlu0 %2203, %v2201
      %v2205 = vpop.permute.xlu0 %2204
      %v2207 = vmul.f32 %v1985, %v2205
      %v2208 = vmul.f32 %v1987, %v2205
      %v2209 = vmul.f32 %v2056, %v2205
      %v2210 = vmul.f32 %v2058, %v2205
      %v2211 = vmul.f32 %v2127, %v2205
      %v2212 = vmul.f32 %v2129, %v2205
      %v2213 = vmul.f32 %v2198, %v2205
      %v2214 = vld [vmem:[%s6] sm:$0xff]
      %2216 = vset.pattern.permute.xlu0 0
      %2217 = vperm.xlu0 %2216, %v2214
      %v2218 = vpop.permute.xlu0 %2217
      %v2220 = vadd.f32 %v2207, %v2218
      %v2221 = vadd.f32 %v2208, %v2218
      %v2222 = vadd.f32 %v2209, %v2218
      %v2223 = vadd.f32 %v2210, %v2218
      %v2224 = vadd.f32 %v2211, %v2218
      %v2225 = vadd.f32 %v2212, %v2218
      %v2226 = vadd.f32 %v2213, %v2218
      %v2227 = vmax.f32 %v2220, 0.0
      %v2228 = vmax.f32 %v2221, 0.0
      %v2229 = vmax.f32 %v2222, 0.0
      %v2230 = vmax.f32 %v2223, 0.0
      %v2231 = vmax.f32 %v2224, 0.0
      %v2232 = vmax.f32 %v2225, 0.0
      %v2233 = vmax.f32 %v2226, 0.0
      %v2235 = vlaneseq
      %v2236 = vshrl.u32 %v2235, 7
      %v2237 = vsub.s32 0, %v2236
      %v2238 = vrot.slane %v279, %v2237
      %v2239 = vlaneseq
      %v2240 = vshrl.u32 %v2239, 7
      %v2241 = vsub.s32 1, %v2240
      %v2242 = vrot.slane %v279, %v2241
      %v2243 = vlaneseq
      %v2244 = vshrl.u32 %v2243, 7
      %v2245 = vsub.s32 2, %v2244
      %v2246 = vrot.slane %v279, %v2245
      %v2247 = vlaneseq
      %v2248 = vshrl.u32 %v2247, 7
      %v2249 = vsub.s32 3, %v2248
      %v2250 = vrot.slane %v279, %v2249
      %v2251 = vlaneseq
      %v2252 = vshrl.u32 %v2251, 7
      %v2253 = vsub.s32 4, %v2252
      %v2254 = vrot.slane %v279, %v2253
      %v2255 = vlaneseq
      %v2256 = vshrl.u32 %v2255, 7
      %v2257 = vsub.s32 5, %v2256
      %v2258 = vrot.slane %v279, %v2257
      %v2259 = vlaneseq
      %v2260 = vshrl.u32 %v2259, 7
      %v2261 = vsub.s32 6, %v2260
      %v2262 = vrot.slane %v279, %v2261
      %v2270 = vmul.f32 %v2227, %v2238
      %v2271 = vmul.f32 %v2228, %v2242
      %v2272 = vmul.f32 %v2229, %v2246
      %v2273 = vmul.f32 %v2230, %v2250
      %v2274 = vmul.f32 %v2231, %v2254
      %v2275 = vmul.f32 %v2232, %v2258
      %v2276 = vmul.f32 %v2233, %v2262
      %2277 = vst [vmem:[#allocation3] sm:$0xff] 0.0
      %2278 = vst [vmem:[#allocation3 + $0x8] sm:$0xff] 0.0
      %2279 = vst [vmem:[#allocation3 + $0x10] sm:$0xff] 0.0
      %2280 = vst [vmem:[#allocation3 + $0x18] sm:$0xff] 0.0
      %2281 = vst [vmem:[#allocation3 + $0x20] sm:$0xff] 0.0
      %2282 = vst [vmem:[#allocation3 + $0x28] sm:$0xff] 0.0
      %2283 = vst [vmem:[#allocation3 + $0x30] sm:$0xff] 0.0
      %2284 = vst [vmem:[#allocation3 + $0x38] sm:$0xff] 0.0
      %2285 = vst [vmem:[#allocation3 + $0x40] sm:$0xff] 0.0
      %2286 = vst [vmem:[#allocation3 + $0x8] sm:$0xff] %v2270
      %2287 = vst [vmem:[#allocation3 + $0x10] sm:$0xff] %v2271
      %2288 = vst [vmem:[#allocation3 + $0x18] sm:$0xff] %v2272
      %2289 = vst [vmem:[#allocation3 + $0x20] sm:$0xff] %v2273
      %2290 = vst [vmem:[#allocation3 + $0x28] sm:$0xff] %v2274
      %2291 = vst [vmem:[#allocation3 + $0x30] sm:$0xff] %v2275
      %2292 = vst.msk [vmem:[#allocation3 + $0x38] sm:$0xff] %vm286, %v2276
      %v2293 = vld [vmem:[#allocation3] sm:$0xff]
      %v2294 = vld [vmem:[#allocation3 + $0x8] sm:$0xff]
      %v2295 = vld [vmem:[#allocation3 + $0x10] sm:$0xff]
      %v2296 = vld [vmem:[#allocation3 + $0x18] sm:$0xff]
      %v2297 = vld [vmem:[#allocation3 + $0x20] sm:$0xff]
      %v2298 = vld [vmem:[#allocation3 + $0x28] sm:$0xff]
      %v2299 = vld [vmem:[#allocation3 + $0x30] sm:$0xff]
      %2307 = vrot.lane.b32.xlu0 %v2293, 111
      %v2308 = vpop.permute.xlu0 %2307
      %2309 = vrot.lane.b32.xlu0 %v2294, 111
      %v2310 = vpop.permute.xlu0 %2309
      %2311 = vrot.lane.b32.xlu0 %v2295, 111
      %v2312 = vpop.permute.xlu0 %2311
      %2313 = vrot.lane.b32.xlu0 %v2296, 111
      %v2314 = vpop.permute.xlu0 %2313
      %2315 = vrot.lane.b32.xlu0 %v2297, 111
      %v2316 = vpop.permute.xlu0 %2315
      %2317 = vrot.lane.b32.xlu0 %v2298, 111
      %v2318 = vpop.permute.xlu0 %2317
      %2319 = vrot.lane.b32.xlu0 %v2299, 111
      %v2320 = vpop.permute.xlu0 %2319
      %vm2321 = vcmask 908288
      %v2322 = vsel %vm2321, %v2308, %v2310
      %v2323 = vsel %vm2321, %v2310, %v2312
      %v2324 = vsel %vm2321, %v2312, %v2314
      %v2325 = vsel %vm2321, %v2314, %v2316
      %v2326 = vsel %vm2321, %v2316, %v2318
      %v2327 = vsel %vm2321, %v2318, %v2320
      %2335 = vst [vmem:[#allocation2] sm:$0xff] %v2322
      %2336 = vst [vmem:[#allocation2 + $0x8] sm:$0xff] %v2323
      %2337 = vst [vmem:[#allocation2 + $0x10] sm:$0xff] %v2324
      %2338 = vst [vmem:[#allocation2 + $0x18] sm:$0xff] %v2325
      %2339 = vst [vmem:[#allocation2 + $0x20] sm:$0xff] %v2326
      %2340 = vst [vmem:[#allocation2 + $0x28] sm:$0xff] %v2327
      %2341 = vst.msk [vmem:[#allocation2 + $0x30] sm:$0xff] %vm286, %v2320
      %v2342 = vld [vmem:[#allocation3] sm:$0xff]
      %v2343 = vld [vmem:[#allocation3 + $0x8] sm:$0xff]
      %v2344 = vld [vmem:[#allocation3 + $0x10] sm:$0xff]
      %v2345 = vld [vmem:[#allocation3 + $0x18] sm:$0xff]
      %v2346 = vld [vmem:[#allocation3 + $0x20] sm:$0xff]
      %v2347 = vld [vmem:[#allocation3 + $0x28] sm:$0xff]
      %v2348 = vld [vmem:[#allocation3 + $0x30] sm:$0xff]
      %2356 = vrot.lane.b32.xlu0 %v2342, 110
      %v2357 = vpop.permute.xlu0 %2356
      %2358 = vrot.lane.b32.xlu0 %v2343, 110
      %v2359 = vpop.permute.xlu0 %2358
      %2360 = vrot.lane.b32.xlu0 %v2344, 110
      %v2361 = vpop.permute.xlu0 %2360
      %2362 = vrot.lane.b32.xlu0 %v2345, 110
      %v2363 = vpop.permute.xlu0 %2362
      %2364 = vrot.lane.b32.xlu0 %v2346, 110
      %v2365 = vpop.permute.xlu0 %2364
      %2366 = vrot.lane.b32.xlu0 %v2347, 110
      %v2367 = vpop.permute.xlu0 %2366
      %2368 = vrot.lane.b32.xlu0 %v2348, 110
      %v2369 = vpop.permute.xlu0 %2368
      %vm2370 = vcmask 900096
      %v2371 = vsel %vm2370, %v2357, %v2359
      %v2372 = vsel %vm2370, %v2359, %v2361
      %v2373 = vsel %vm2370, %v2361, %v2363
      %v2374 = vsel %vm2370, %v2363, %v2365
      %v2375 = vsel %vm2370, %v2365, %v2367
      %v2376 = vsel %vm2370, %v2367, %v2369
      %2384 = vst [vmem:[#allocation2 + $0x38] sm:$0xff] %v2371
      %2385 = vst [vmem:[#allocation2 + $0x40] sm:$0xff] %v2372
      %2386 = vst [vmem:[#allocation2 + $0x48] sm:$0xff] %v2373
      %2387 = vst [vmem:[#allocation2 + $0x50] sm:$0xff] %v2374
      %2388 = vst [vmem:[#allocation2 + $0x58] sm:$0xff] %v2375
      %2389 = vst [vmem:[#allocation2 + $0x60] sm:$0xff] %v2376
      %2390 = vst.msk [vmem:[#allocation2 + $0x68] sm:$0xff] %vm286, %v2369
      %v2391 = vld [vmem:[#allocation3] sm:$0xff]
      %v2392 = vld [vmem:[#allocation3 + $0x8] sm:$0xff]
      %v2393 = vld [vmem:[#allocation3 + $0x10] sm:$0xff]
      %v2394 = vld [vmem:[#allocation3 + $0x18] sm:$0xff]
      %v2395 = vld [vmem:[#allocation3 + $0x20] sm:$0xff]
      %v2396 = vld [vmem:[#allocation3 + $0x28] sm:$0xff]
      %v2397 = vld [vmem:[#allocation3 + $0x30] sm:$0xff]
      %2405 = vrot.lane.b32.xlu0 %v2391, 109
      %v2406 = vpop.permute.xlu0 %2405
      %2407 = vrot.lane.b32.xlu0 %v2392, 109
      %v2408 = vpop.permute.xlu0 %2407
      %2409 = vrot.lane.b32.xlu0 %v2393, 109
      %v2410 = vpop.permute.xlu0 %2409
      %2411 = vrot.lane.b32.xlu0 %v2394, 109
      %v2412 = vpop.permute.xlu0 %2411
      %2413 = vrot.lane.b32.xlu0 %v2395, 109
      %v2414 = vpop.permute.xlu0 %2413
      %2415 = vrot.lane.b32.xlu0 %v2396, 109
      %v2416 = vpop.permute.xlu0 %2415
      %2417 = vrot.lane.b32.xlu0 %v2397, 109
      %v2418 = vpop.permute.xlu0 %2417
      %vm2419 = vcmask 891904
      %v2420 = vsel %vm2419, %v2406, %v2408
      %v2421 = vsel %vm2419, %v2408, %v2410
      %v2422 = vsel %vm2419, %v2410, %v2412
      %v2423 = vsel %vm2419, %v2412, %v2414
      %v2424 = vsel %vm2419, %v2414, %v2416
      %v2425 = vsel %vm2419, %v2416, %v2418
      %2433 = vst [vmem:[#allocation2 + $0x70] sm:$0xff] %v2420
      %2434 = vst [vmem:[#allocation2 + $0x78] sm:$0xff] %v2421
      %2435 = vst [vmem:[#allocation2 + $0x80] sm:$0xff] %v2422
      %2436 = vst [vmem:[#allocation2 + $0x88] sm:$0xff] %v2423
      %2437 = vst [vmem:[#allocation2 + $0x90] sm:$0xff] %v2424
      %2438 = vst [vmem:[#allocation2 + $0x98] sm:$0xff] %v2425
      %2439 = vst.msk [vmem:[#allocation2 + $0xa0] sm:$0xff] %vm286, %v2418
      %v2440 = vld [vmem:[#allocation3] sm:$0xff]
      %v2441 = vld [vmem:[#allocation3 + $0x8] sm:$0xff]
      %v2442 = vld [vmem:[#allocation3 + $0x10] sm:$0xff]
      %v2443 = vld [vmem:[#allocation3 + $0x18] sm:$0xff]
      %v2444 = vld [vmem:[#allocation3 + $0x20] sm:$0xff]
      %v2445 = vld [vmem:[#allocation3 + $0x28] sm:$0xff]
      %v2446 = vld [vmem:[#allocation3 + $0x30] sm:$0xff]
      %2454 = vrot.lane.b32.xlu0 %v2440, 101
      %v2455 = vpop.permute.xlu0 %2454
      %2456 = vrot.lane.b32.xlu0 %v2441, 101
      %v2457 = vpop.permute.xlu0 %2456
      %2458 = vrot.lane.b32.xlu0 %v2442, 101
      %v2459 = vpop.permute.xlu0 %2458
      %2460 = vrot.lane.b32.xlu0 %v2443, 101
      %v2461 = vpop.permute.xlu0 %2460
      %2462 = vrot.lane.b32.xlu0 %v2444, 101
      %v2463 = vpop.permute.xlu0 %2462
      %2464 = vrot.lane.b32.xlu0 %v2445, 101
      %v2465 = vpop.permute.xlu0 %2464
      %2466 = vrot.lane.b32.xlu0 %v2446, 101
      %v2467 = vpop.permute.xlu0 %2466
      %vm2468 = vcmask 826368
      %v2469 = vsel %vm2468, %v2455, %v2457
      %v2470 = vsel %vm2468, %v2457, %v2459
      %v2471 = vsel %vm2468, %v2459, %v2461
      %v2472 = vsel %vm2468, %v2461, %v2463
      %v2473 = vsel %vm2468, %v2463, %v2465
      %v2474 = vsel %vm2468, %v2465, %v2467
      %2482 = vst [vmem:[#allocation2 + $0xa8] sm:$0xff] %v2469
      %2483 = vst [vmem:[#allocation2 + $0xb0] sm:$0xff] %v2470
      %2484 = vst [vmem:[#allocation2 + $0xb8] sm:$0xff] %v2471
      %2485 = vst [vmem:[#allocation2 + $0xc0] sm:$0xff] %v2472
      %2486 = vst [vmem:[#allocation2 + $0xc8] sm:$0xff] %v2473
      %2487 = vst [vmem:[#allocation2 + $0xd0] sm:$0xff] %v2474
      %2488 = vst.msk [vmem:[#allocation2 + $0xd8] sm:$0xff] %vm286, %v2467
      %v2489 = vld [vmem:[#allocation3] sm:$0xff]
      %v2490 = vld [vmem:[#allocation3 + $0x8] sm:$0xff]
      %v2491 = vld [vmem:[#allocation3 + $0x10] sm:$0xff]
      %v2492 = vld [vmem:[#allocation3 + $0x18] sm:$0xff]
      %v2493 = vld [vmem:[#allocation3 + $0x20] sm:$0xff]
      %v2494 = vld [vmem:[#allocation3 + $0x28] sm:$0xff]
      %v2495 = vld [vmem:[#allocation3 + $0x30] sm:$0xff]
      %2503 = vrot.lane.b32.xlu0 %v2489, 100
      %v2504 = vpop.permute.xlu0 %2503
      %2505 = vrot.lane.b32.xlu0 %v2490, 100
      %v2506 = vpop.permute.xlu0 %2505
      %2507 = vrot.lane.b32.xlu0 %v2491, 100
      %v2508 = vpop.permute.xlu0 %2507
      %2509 = vrot.lane.b32.xlu0 %v2492, 100
      %v2510 = vpop.permute.xlu0 %2509
      %2511 = vrot.lane.b32.xlu0 %v2493, 100
      %v2512 = vpop.permute.xlu0 %2511
      %2513 = vrot.lane.b32.xlu0 %v2494, 100
      %v2514 = vpop.permute.xlu0 %2513
      %2515 = vrot.lane.b32.xlu0 %v2495, 100
      %v2516 = vpop.permute.xlu0 %2515
      %vm2517 = vcmask 818176
      %v2518 = vsel %vm2517, %v2504, %v2506
      %v2519 = vsel %vm2517, %v2506, %v2508
      %v2520 = vsel %vm2517, %v2508, %v2510
      %v2521 = vsel %vm2517, %v2510, %v2512
      %v2522 = vsel %vm2517, %v2512, %v2514
      %v2523 = vsel %vm2517, %v2514, %v2516
      %2531 = vst [vmem:[#allocation2 + $0xe0] sm:$0xff] %v2518
      %2532 = vst [vmem:[#allocation2 + $0xe8] sm:$0xff] %v2519
      %2533 = vst [vmem:[#allocation2 + $0xf0] sm:$0xff] %v2520
      %2534 = vst [vmem:[#allocation2 + $0xf8] sm:$0xff] %v2521
      %2535 = vst [vmem:[#allocation2 + $0x100] sm:$0xff] %v2522
      %2536 = vst [vmem:[#allocation2 + $0x108] sm:$0xff] %v2523
      %2537 = vst.msk [vmem:[#allocation2 + $0x110] sm:$0xff] %vm286, %v2516
      %v2538 = vld [vmem:[#allocation3] sm:$0xff]
      %v2539 = vld [vmem:[#allocation3 + $0x8] sm:$0xff]
      %v2540 = vld [vmem:[#allocation3 + $0x10] sm:$0xff]
      %v2541 = vld [vmem:[#allocation3 + $0x18] sm:$0xff]
      %v2542 = vld [vmem:[#allocation3 + $0x20] sm:$0xff]
      %v2543 = vld [vmem:[#allocation3 + $0x28] sm:$0xff]
      %v2544 = vld [vmem:[#allocation3 + $0x30] sm:$0xff]
      %2552 = vrot.lane.b32.xlu0 %v2538, 99
      %v2553 = vpop.permute.xlu0 %2552
      %2554 = vrot.lane.b32.xlu0 %v2539, 99
      %v2555 = vpop.permute.xlu0 %2554
      %2556 = vrot.lane.b32.xlu0 %v2540, 99
      %v2557 = vpop.permute.xlu0 %2556
      %2558 = vrot.lane.b32.xlu0 %v2541, 99
      %v2559 = vpop.permute.xlu0 %2558
      %2560 = vrot.lane.b32.xlu0 %v2542, 99
      %v2561 = vpop.permute.xlu0 %2560
      %2562 = vrot.lane.b32.xlu0 %v2543, 99
      %v2563 = vpop.permute.xlu0 %2562
      %2564 = vrot.lane.b32.xlu0 %v2544, 99
      %v2565 = vpop.permute.xlu0 %2564
      %vm2566 = vcmask 809984
      %v2567 = vsel %vm2566, %v2553, %v2555
      %v2568 = vsel %vm2566, %v2555, %v2557
      %v2569 = vsel %vm2566, %v2557, %v2559
      %v2570 = vsel %vm2566, %v2559, %v2561
      %v2571 = vsel %vm2566, %v2561, %v2563
      %v2572 = vsel %vm2566, %v2563, %v2565
      %2580 = vst [vmem:[#allocation2 + $0x118] sm:$0xff] %v2567
      %2581 = vst [vmem:[#allocation2 + $0x120] sm:$0xff] %v2568
      %2582 = vst [vmem:[#allocation2 + $0x128] sm:$0xff] %v2569
      %2583 = vst [vmem:[#allocation2 + $0x130] sm:$0xff] %v2570
      %2584 = vst [vmem:[#allocation2 + $0x138] sm:$0xff] %v2571
      %2585 = vst [vmem:[#allocation2 + $0x140] sm:$0xff] %v2572
      %2586 = vst.msk [vmem:[#allocation2 + $0x148] sm:$0xff] %vm286, %v2565
      %v2587 = vld [vmem:[#allocation3] sm:$0xff]
      %v2588 = vld [vmem:[#allocation3 + $0x8] sm:$0xff]
      %v2589 = vld [vmem:[#allocation3 + $0x10] sm:$0xff]
      %v2590 = vld [vmem:[#allocation3 + $0x18] sm:$0xff]
      %v2591 = vld [vmem:[#allocation3 + $0x20] sm:$0xff]
      %v2592 = vld [vmem:[#allocation3 + $0x28] sm:$0xff]
      %v2593 = vld [vmem:[#allocation3 + $0x30] sm:$0xff]
      %2601 = vrot.lane.b32.xlu0 %v2587, 91
      %v2602 = vpop.permute.xlu0 %2601
      %2603 = vrot.lane.b32.xlu0 %v2588, 91
      %v2604 = vpop.permute.xlu0 %2603
      %2605 = vrot.lane.b32.xlu0 %v2589, 91
      %v2606 = vpop.permute.xlu0 %2605
      %2607 = vrot.lane.b32.xlu0 %v2590, 91
      %v2608 = vpop.permute.xlu0 %2607
      %2609 = vrot.lane.b32.xlu0 %v2591, 91
      %v2610 = vpop.permute.xlu0 %2609
      %2611 = vrot.lane.b32.xlu0 %v2592, 91
      %v2612 = vpop.permute.xlu0 %2611
      %2613 = vrot.lane.b32.xlu0 %v2593, 91
      %v2614 = vpop.permute.xlu0 %2613
      %vm2615 = vcmask 744448
      %v2616 = vsel %vm2615, %v2602, %v2604
      %v2617 = vsel %vm2615, %v2604, %v2606
      %v2618 = vsel %vm2615, %v2606, %v2608
      %v2619 = vsel %vm2615, %v2608, %v2610
      %v2620 = vsel %vm2615, %v2610, %v2612
      %v2621 = vsel %vm2615, %v2612, %v2614
      %2629 = vst [vmem:[#allocation2 + $0x150] sm:$0xff] %v2616
      %2630 = vst [vmem:[#allocation2 + $0x158] sm:$0xff] %v2617
      %2631 = vst [vmem:[#allocation2 + $0x160] sm:$0xff] %v2618
      %2632 = vst [vmem:[#allocation2 + $0x168] sm:$0xff] %v2619
      %2633 = vst [vmem:[#allocation2 + $0x170] sm:$0xff] %v2620
      %2634 = vst [vmem:[#allocation2 + $0x178] sm:$0xff] %v2621
      %2635 = vst.msk [vmem:[#allocation2 + $0x180] sm:$0xff] %vm286, %v2614
      %v2636 = vld [vmem:[#allocation3] sm:$0xff]
      %v2637 = vld [vmem:[#allocation3 + $0x8] sm:$0xff]
      %v2638 = vld [vmem:[#allocation3 + $0x10] sm:$0xff]
      %v2639 = vld [vmem:[#allocation3 + $0x18] sm:$0xff]
      %v2640 = vld [vmem:[#allocation3 + $0x20] sm:$0xff]
      %v2641 = vld [vmem:[#allocation3 + $0x28] sm:$0xff]
      %v2642 = vld [vmem:[#allocation3 + $0x30] sm:$0xff]
      %2650 = vrot.lane.b32.xlu0 %v2636, 90
      %v2651 = vpop.permute.xlu0 %2650
      %2652 = vrot.lane.b32.xlu0 %v2637, 90
      %v2653 = vpop.permute.xlu0 %2652
      %2654 = vrot.lane.b32.xlu0 %v2638, 90
      %v2655 = vpop.permute.xlu0 %2654
      %2656 = vrot.lane.b32.xlu0 %v2639, 90
      %v2657 = vpop.permute.xlu0 %2656
      %2658 = vrot.lane.b32.xlu0 %v2640, 90
      %v2659 = vpop.permute.xlu0 %2658
      %2660 = vrot.lane.b32.xlu0 %v2641, 90
      %v2661 = vpop.permute.xlu0 %2660
      %2662 = vrot.lane.b32.xlu0 %v2642, 90
      %v2663 = vpop.permute.xlu0 %2662
      %vm2664 = vcmask 736256
      %v2665 = vsel %vm2664, %v2651, %v2653
      %v2666 = vsel %vm2664, %v2653, %v2655
      %v2667 = vsel %vm2664, %v2655, %v2657
      %v2668 = vsel %vm2664, %v2657, %v2659
      %v2669 = vsel %vm2664, %v2659, %v2661
      %v2670 = vsel %vm2664, %v2661, %v2663
      %2678 = vst [vmem:[#allocation2 + $0x188] sm:$0xff] %v2665
      %2679 = vst [vmem:[#allocation2 + $0x190] sm:$0xff] %v2666
      %2680 = vst [vmem:[#allocation2 + $0x198] sm:$0xff] %v2667
      %2681 = vst [vmem:[#allocation2 + $0x1a0] sm:$0xff] %v2668
      %2682 = vst [vmem:[#allocation2 + $0x1a8] sm:$0xff] %v2669
      %2683 = vst [vmem:[#allocation2 + $0x1b0] sm:$0xff] %v2670
      %2684 = vst.msk [vmem:[#allocation2 + $0x1b8] sm:$0xff] %vm286, %v2663
      %v2685 = vld [vmem:[#allocation3] sm:$0xff]
      %v2686 = vld [vmem:[#allocation3 + $0x8] sm:$0xff]
      %v2687 = vld [vmem:[#allocation3 + $0x10] sm:$0xff]
      %v2688 = vld [vmem:[#allocation3 + $0x18] sm:$0xff]
      %v2689 = vld [vmem:[#allocation3 + $0x20] sm:$0xff]
      %v2690 = vld [vmem:[#allocation3 + $0x28] sm:$0xff]
      %v2691 = vld [vmem:[#allocation3 + $0x30] sm:$0xff]
      %2699 = vrot.lane.b32.xlu0 %v2685, 89
      %v2700 = vpop.permute.xlu0 %2699
      %2701 = vrot.lane.b32.xlu0 %v2686, 89
      %v2702 = vpop.permute.xlu0 %2701
      %2703 = vrot.lane.b32.xlu0 %v2687, 89
      %v2704 = vpop.permute.xlu0 %2703
      %2705 = vrot.lane.b32.xlu0 %v2688, 89
      %v2706 = vpop.permute.xlu0 %2705
      %2707 = vrot.lane.b32.xlu0 %v2689, 89
      %v2708 = vpop.permute.xlu0 %2707
      %2709 = vrot.lane.b32.xlu0 %v2690, 89
      %v2710 = vpop.permute.xlu0 %2709
      %2711 = vrot.lane.b32.xlu0 %v2691, 89
      %v2712 = vpop.permute.xlu0 %2711
      %vm2713 = vcmask 728064
      %v2714 = vsel %vm2713, %v2700, %v2702
      %v2715 = vsel %vm2713, %v2702, %v2704
      %v2716 = vsel %vm2713, %v2704, %v2706
      %v2717 = vsel %vm2713, %v2706, %v2708
      %v2718 = vsel %vm2713, %v2708, %v2710
      %v2719 = vsel %vm2713, %v2710, %v2712
      %2727 = vst [vmem:[#allocation2 + $0x1c0] sm:$0xff] %v2714
      %2728 = vst [vmem:[#allocation2 + $0x1c8] sm:$0xff] %v2715
      %2729 = vst [vmem:[#allocation2 + $0x1d0] sm:$0xff] %v2716
      %2730 = vst [vmem:[#allocation2 + $0x1d8] sm:$0xff] %v2717
      %2731 = vst [vmem:[#allocation2 + $0x1e0] sm:$0xff] %v2718
      %2732 = vst [vmem:[#allocation2 + $0x1e8] sm:$0xff] %v2719
      %2733 = vst.msk [vmem:[#allocation2 + $0x1f0] sm:$0xff] %vm286, %v2712
      %v2734 = vld [vmem:[#allocation3] sm:$0xff]
      %v2735 = vld [vmem:[#allocation3 + $0x8] sm:$0xff]
      %v2736 = vld [vmem:[#allocation3 + $0x10] sm:$0xff]
      %v2737 = vld [vmem:[#allocation3 + $0x18] sm:$0xff]
      %v2738 = vld [vmem:[#allocation3 + $0x20] sm:$0xff]
      %v2739 = vld [vmem:[#allocation3 + $0x28] sm:$0xff]
      %v2740 = vld [vmem:[#allocation3 + $0x30] sm:$0xff]
      %v2741 = vld [vmem:[#allocation3 + $0x38] sm:$0xff]
      %2750 = vrot.lane.b32.xlu0 %v2734, 11
      %v2751 = vpop.permute.xlu0 %2750
      %2752 = vrot.lane.b32.xlu0 %v2735, 11
      %v2753 = vpop.permute.xlu0 %2752
      %2754 = vrot.lane.b32.xlu0 %v2736, 11
      %v2755 = vpop.permute.xlu0 %2754
      %2756 = vrot.lane.b32.xlu0 %v2737, 11
      %v2757 = vpop.permute.xlu0 %2756
      %2758 = vrot.lane.b32.xlu0 %v2738, 11
      %v2759 = vpop.permute.xlu0 %2758
      %2760 = vrot.lane.b32.xlu0 %v2739, 11
      %v2761 = vpop.permute.xlu0 %2760
      %2762 = vrot.lane.b32.xlu0 %v2740, 11
      %v2763 = vpop.permute.xlu0 %2762
      %2764 = vrot.lane.b32.xlu0 %v2741, 11
      %v2765 = vpop.permute.xlu0 %2764
      %vm2766 = vcmask 89088
      %v2767 = vsel %vm2766, %v2751, %v2753
      %v2768 = vsel %vm2766, %v2753, %v2755
      %v2769 = vsel %vm2766, %v2755, %v2757
      %v2770 = vsel %vm2766, %v2757, %v2759
      %v2771 = vsel %vm2766, %v2759, %v2761
      %v2772 = vsel %vm2766, %v2761, %v2763
      %v2773 = vsel %vm2766, %v2763, %v2765
      %2781 = vst [vmem:[#allocation2 + $0x1f8] sm:$0xff] %v2767
      %2782 = vst [vmem:[#allocation2 + $0x200] sm:$0xff] %v2768
      %2783 = vst [vmem:[#allocation2 + $0x208] sm:$0xff] %v2769
      %2784 = vst [vmem:[#allocation2 + $0x210] sm:$0xff] %v2770
      %2785 = vst [vmem:[#allocation2 + $0x218] sm:$0xff] %v2771
      %2786 = vst [vmem:[#allocation2 + $0x220] sm:$0xff] %v2772
      %2787 = vst.msk [vmem:[#allocation2 + $0x228] sm:$0xff] %vm286, %v2773
      %v2788 = vld [vmem:[#allocation3] sm:$0xff]
      %v2789 = vld [vmem:[#allocation3 + $0x8] sm:$0xff]
      %v2790 = vld [vmem:[#allocation3 + $0x10] sm:$0xff]
      %v2791 = vld [vmem:[#allocation3 + $0x18] sm:$0xff]
      %v2792 = vld [vmem:[#allocation3 + $0x20] sm:$0xff]
      %v2793 = vld [vmem:[#allocation3 + $0x28] sm:$0xff]
      %v2794 = vld [vmem:[#allocation3 + $0x30] sm:$0xff]
      %v2795 = vld [vmem:[#allocation3 + $0x38] sm:$0xff]
      %2804 = vrot.lane.b32.xlu0 %v2788, 10
      %v2805 = vpop.permute.xlu0 %2804
      %2806 = vrot.lane.b32.xlu0 %v2789, 10
      %v2807 = vpop.permute.xlu0 %2806
      %2808 = vrot.lane.b32.xlu0 %v2790, 10
      %v2809 = vpop.permute.xlu0 %2808
      %2810 = vrot.lane.b32.xlu0 %v2791, 10
      %v2811 = vpop.permute.xlu0 %2810
      %2812 = vrot.lane.b32.xlu0 %v2792, 10
      %v2813 = vpop.permute.xlu0 %2812
      %2814 = vrot.lane.b32.xlu0 %v2793, 10
      %v2815 = vpop.permute.xlu0 %2814
      %2816 = vrot.lane.b32.xlu0 %v2794, 10
      %v2817 = vpop.permute.xlu0 %2816
      %2818 = vrot.lane.b32.xlu0 %v2795, 10
      %v2819 = vpop.permute.xlu0 %2818
      %vm2820 = vcmask 80896
      %v2821 = vsel %vm2820, %v2805, %v2807
      %v2822 = vsel %vm2820, %v2807, %v2809
      %v2823 = vsel %vm2820, %v2809, %v2811
      %v2824 = vsel %vm2820, %v2811, %v2813
      %v2825 = vsel %vm2820, %v2813, %v2815
      %v2826 = vsel %vm2820, %v2815, %v2817
      %v2827 = vsel %vm2820, %v2817, %v2819
      %2835 = vst [vmem:[#allocation2 + $0x230] sm:$0xff] %v2821
      %2836 = vst [vmem:[#allocation2 + $0x238] sm:$0xff] %v2822
      %2837 = vst [vmem:[#allocation2 + $0x240] sm:$0xff] %v2823
      %2838 = vst [vmem:[#allocation2 + $0x248] sm:$0xff] %v2824
      %2839 = vst [vmem:[#allocation2 + $0x250] sm:$0xff] %v2825
      %2840 = vst [vmem:[#allocation2 + $0x258] sm:$0xff] %v2826
      %2841 = vst.msk [vmem:[#allocation2 + $0x260] sm:$0xff] %vm286, %v2827
      %v2842 = vld [vmem:[#allocation3] sm:$0xff]
      %v2843 = vld [vmem:[#allocation3 + $0x8] sm:$0xff]
      %v2844 = vld [vmem:[#allocation3 + $0x10] sm:$0xff]
      %v2845 = vld [vmem:[#allocation3 + $0x18] sm:$0xff]
      %v2846 = vld [vmem:[#allocation3 + $0x20] sm:$0xff]
      %v2847 = vld [vmem:[#allocation3 + $0x28] sm:$0xff]
      %v2848 = vld [vmem:[#allocation3 + $0x30] sm:$0xff]
      %v2849 = vld [vmem:[#allocation3 + $0x38] sm:$0xff]
      %2858 = vrot.lane.b32.xlu0 %v2842, 9
      %v2859 = vpop.permute.xlu0 %2858
      %2860 = vrot.lane.b32.xlu0 %v2843, 9
      %v2861 = vpop.permute.xlu0 %2860
      %2862 = vrot.lane.b32.xlu0 %v2844, 9
      %v2863 = vpop.permute.xlu0 %2862
      %2864 = vrot.lane.b32.xlu0 %v2845, 9
      %v2865 = vpop.permute.xlu0 %2864
      %2866 = vrot.lane.b32.xlu0 %v2846, 9
      %v2867 = vpop.permute.xlu0 %2866
      %2868 = vrot.lane.b32.xlu0 %v2847, 9
      %v2869 = vpop.permute.xlu0 %2868
      %2870 = vrot.lane.b32.xlu0 %v2848, 9
      %v2871 = vpop.permute.xlu0 %2870
      %2872 = vrot.lane.b32.xlu0 %v2849, 9
      %v2873 = vpop.permute.xlu0 %2872
      %vm2874 = vcmask 72704
      %v2875 = vsel %vm2874, %v2859, %v2861
      %v2876 = vsel %vm2874, %v2861, %v2863
      %v2877 = vsel %vm2874, %v2863, %v2865
      %v2878 = vsel %vm2874, %v2865, %v2867
      %v2879 = vsel %vm2874, %v2867, %v2869
      %v2880 = vsel %vm2874, %v2869, %v2871
      %v2881 = vsel %vm2874, %v2871, %v2873
      %2889 = vst [vmem:[#allocation2 + $0x268] sm:$0xff] %v2875
      %2890 = vst [vmem:[#allocation2 + $0x270] sm:$0xff] %v2876
      %2891 = vst [vmem:[#allocation2 + $0x278] sm:$0xff] %v2877
      %2892 = vst [vmem:[#allocation2 + $0x280] sm:$0xff] %v2878
      %2893 = vst [vmem:[#allocation2 + $0x288] sm:$0xff] %v2879
      %2894 = vst [vmem:[#allocation2 + $0x290] sm:$0xff] %v2880
      %2895 = vst.msk [vmem:[#allocation2 + $0x298] sm:$0xff] %vm286, %v2881
      %v2896 = vld [vmem:[#allocation3] sm:$0xff]
      %v2897 = vld [vmem:[#allocation3 + $0x8] sm:$0xff]
      %v2898 = vld [vmem:[#allocation3 + $0x10] sm:$0xff]
      %v2899 = vld [vmem:[#allocation3 + $0x18] sm:$0xff]
      %v2900 = vld [vmem:[#allocation3 + $0x20] sm:$0xff]
      %v2901 = vld [vmem:[#allocation3 + $0x28] sm:$0xff]
      %v2902 = vld [vmem:[#allocation3 + $0x30] sm:$0xff]
      %v2903 = vld [vmem:[#allocation3 + $0x38] sm:$0xff]
      %2912 = vrot.lane.b32.xlu0 %v2896, 1
      %v2913 = vpop.permute.xlu0 %2912
      %2914 = vrot.lane.b32.xlu0 %v2897, 1
      %v2915 = vpop.permute.xlu0 %2914
      %2916 = vrot.lane.b32.xlu0 %v2898, 1
      %v2917 = vpop.permute.xlu0 %2916
      %2918 = vrot.lane.b32.xlu0 %v2899, 1
      %v2919 = vpop.permute.xlu0 %2918
      %2920 = vrot.lane.b32.xlu0 %v2900, 1
      %v2921 = vpop.permute.xlu0 %2920
      %2922 = vrot.lane.b32.xlu0 %v2901, 1
      %v2923 = vpop.permute.xlu0 %2922
      %2924 = vrot.lane.b32.xlu0 %v2902, 1
      %v2925 = vpop.permute.xlu0 %2924
      %2926 = vrot.lane.b32.xlu0 %v2903, 1
      %v2927 = vpop.permute.xlu0 %2926
      %vm2928 = vcmask 7168
      %v2929 = vsel %vm2928, %v2913, %v2915
      %v2930 = vsel %vm2928, %v2915, %v2917
      %v2931 = vsel %vm2928, %v2917, %v2919
      %v2932 = vsel %vm2928, %v2919, %v2921
      %v2933 = vsel %vm2928, %v2921, %v2923
      %v2934 = vsel %vm2928, %v2923, %v2925
      %v2935 = vsel %vm2928, %v2925, %v2927
      %2943 = vst [vmem:[#allocation2 + $0x2a0] sm:$0xff] %v2929
      %2944 = vst [vmem:[#allocation2 + $0x2a8] sm:$0xff] %v2930
      %2945 = vst [vmem:[#allocation2 + $0x2b0] sm:$0xff] %v2931
      %2946 = vst [vmem:[#allocation2 + $0x2b8] sm:$0xff] %v2932
      %2947 = vst [vmem:[#allocation2 + $0x2c0] sm:$0xff] %v2933
      %2948 = vst [vmem:[#allocation2 + $0x2c8] sm:$0xff] %v2934
      %2949 = vst.msk [vmem:[#allocation2 + $0x2d0] sm:$0xff] %vm286, %v2935
      %v2950 = vld [vmem:[#allocation3 + $0x8] sm:$0xff]
      %v2951 = vld [vmem:[#allocation3 + $0x10] sm:$0xff]
      %v2952 = vld [vmem:[#allocation3 + $0x18] sm:$0xff]
      %v2953 = vld [vmem:[#allocation3 + $0x20] sm:$0xff]
      %v2954 = vld [vmem:[#allocation3 + $0x28] sm:$0xff]
      %v2955 = vld [vmem:[#allocation3 + $0x30] sm:$0xff]
      %v2956 = vld [vmem:[#allocation3 + $0x38] sm:$0xff]
      %2957 = vst [vmem:[#allocation2 + $0x2d8] sm:$0xff] %v2950
      %2958 = vst [vmem:[#allocation2 + $0x2e0] sm:$0xff] %v2951
      %2959 = vst [vmem:[#allocation2 + $0x2e8] sm:$0xff] %v2952
      %2960 = vst [vmem:[#allocation2 + $0x2f0] sm:$0xff] %v2953
      %2961 = vst [vmem:[#allocation2 + $0x2f8] sm:$0xff] %v2954
      %2962 = vst [vmem:[#allocation2 + $0x300] sm:$0xff] %v2955
      %2963 = vst.msk [vmem:[#allocation2 + $0x308] sm:$0xff] %vm286, %v2956
      %v2964 = vld [vmem:[#allocation3 + $0x8] sm:$0xff]
      %v2965 = vld [vmem:[#allocation3 + $0x10] sm:$0xff]
      %v2966 = vld [vmem:[#allocation3 + $0x18] sm:$0xff]
      %v2967 = vld [vmem:[#allocation3 + $0x20] sm:$0xff]
      %v2968 = vld [vmem:[#allocation3 + $0x28] sm:$0xff]
      %v2969 = vld [vmem:[#allocation3 + $0x30] sm:$0xff]
      %v2970 = vld [vmem:[#allocation3 + $0x38] sm:$0xff]
      %2978 = vrot.lane.b32.xlu0 %v2964, 127
      %v2979 = vpop.permute.xlu0 %2978
      %2980 = vrot.lane.b32.xlu0 %v2965, 127
      %v2981 = vpop.permute.xlu0 %2980
      %2982 = vrot.lane.b32.xlu0 %v2966, 127
      %v2983 = vpop.permute.xlu0 %2982
      %2984 = vrot.lane.b32.xlu0 %v2967, 127
      %v2985 = vpop.permute.xlu0 %2984
      %2986 = vrot.lane.b32.xlu0 %v2968, 127
      %v2987 = vpop.permute.xlu0 %2986
      %2988 = vrot.lane.b32.xlu0 %v2969, 127
      %v2989 = vpop.permute.xlu0 %2988
      %2990 = vrot.lane.b32.xlu0 %v2970, 127
      %v2991 = vpop.permute.xlu0 %2990
      %v2992 = vsel %vm516, %v2979, %v2981
      %v2993 = vsel %vm516, %v2981, %v2983
      %v2994 = vsel %vm516, %v2983, %v2985
      %v2995 = vsel %vm516, %v2985, %v2987
      %v2996 = vsel %vm516, %v2987, %v2989
      %v2997 = vsel %vm516, %v2989, %v2991
      %3005 = vst [vmem:[#allocation2 + $0x310] sm:$0xff] %v2992
      %3006 = vst [vmem:[#allocation2 + $0x318] sm:$0xff] %v2993
      %3007 = vst [vmem:[#allocation2 + $0x320] sm:$0xff] %v2994
      %3008 = vst [vmem:[#allocation2 + $0x328] sm:$0xff] %v2995
      %3009 = vst [vmem:[#allocation2 + $0x330] sm:$0xff] %v2996
      %3010 = vst [vmem:[#allocation2 + $0x338] sm:$0xff] %v2997
      %3011 = vst.msk [vmem:[#allocation2 + $0x340] sm:$0xff] %vm286, %v2991
      %v3012 = vld [vmem:[#allocation3 + $0x8] sm:$0xff]
      %v3013 = vld [vmem:[#allocation3 + $0x10] sm:$0xff]
      %v3014 = vld [vmem:[#allocation3 + $0x18] sm:$0xff]
      %v3015 = vld [vmem:[#allocation3 + $0x20] sm:$0xff]
      %v3016 = vld [vmem:[#allocation3 + $0x28] sm:$0xff]
      %v3017 = vld [vmem:[#allocation3 + $0x30] sm:$0xff]
      %v3018 = vld [vmem:[#allocation3 + $0x38] sm:$0xff]
      %3026 = vrot.lane.b32.xlu0 %v3012, 119
      %v3027 = vpop.permute.xlu0 %3026
      %3028 = vrot.lane.b32.xlu0 %v3013, 119
      %v3029 = vpop.permute.xlu0 %3028
      %3030 = vrot.lane.b32.xlu0 %v3014, 119
      %v3031 = vpop.permute.xlu0 %3030
      %3032 = vrot.lane.b32.xlu0 %v3015, 119
      %v3033 = vpop.permute.xlu0 %3032
      %3034 = vrot.lane.b32.xlu0 %v3016, 119
      %v3035 = vpop.permute.xlu0 %3034
      %3036 = vrot.lane.b32.xlu0 %v3017, 119
      %v3037 = vpop.permute.xlu0 %3036
      %3038 = vrot.lane.b32.xlu0 %v3018, 119
      %v3039 = vpop.permute.xlu0 %3038
      %vm3040 = vcmask 973824
      %v3041 = vsel %vm3040, %v3027, %v3029
      %v3042 = vsel %vm3040, %v3029, %v3031
      %v3043 = vsel %vm3040, %v3031, %v3033
      %v3044 = vsel %vm3040, %v3033, %v3035
      %v3045 = vsel %vm3040, %v3035, %v3037
      %v3046 = vsel %vm3040, %v3037, %v3039
      %3054 = vst [vmem:[#allocation2 + $0x348] sm:$0xff] %v3041
      %3055 = vst [vmem:[#allocation2 + $0x350] sm:$0xff] %v3042
      %3056 = vst [vmem:[#allocation2 + $0x358] sm:$0xff] %v3043
      %3057 = vst [vmem:[#allocation2 + $0x360] sm:$0xff] %v3044
      %3058 = vst [vmem:[#allocation2 + $0x368] sm:$0xff] %v3045
      %3059 = vst [vmem:[#allocation2 + $0x370] sm:$0xff] %v3046
      %3060 = vst.msk [vmem:[#allocation2 + $0x378] sm:$0xff] %vm286, %v3039
      %v3061 = vld [vmem:[#allocation3 + $0x8] sm:$0xff]
      %v3062 = vld [vmem:[#allocation3 + $0x10] sm:$0xff]
      %v3063 = vld [vmem:[#allocation3 + $0x18] sm:$0xff]
      %v3064 = vld [vmem:[#allocation3 + $0x20] sm:$0xff]
      %v3065 = vld [vmem:[#allocation3 + $0x28] sm:$0xff]
      %v3066 = vld [vmem:[#allocation3 + $0x30] sm:$0xff]
      %v3067 = vld [vmem:[#allocation3 + $0x38] sm:$0xff]
      %3075 = vrot.lane.b32.xlu0 %v3061, 118
      %v3076 = vpop.permute.xlu0 %3075
      %3077 = vrot.lane.b32.xlu0 %v3062, 118
      %v3078 = vpop.permute.xlu0 %3077
      %3079 = vrot.lane.b32.xlu0 %v3063, 118
      %v3080 = vpop.permute.xlu0 %3079
      %3081 = vrot.lane.b32.xlu0 %v3064, 118
      %v3082 = vpop.permute.xlu0 %3081
      %3083 = vrot.lane.b32.xlu0 %v3065, 118
      %v3084 = vpop.permute.xlu0 %3083
      %3085 = vrot.lane.b32.xlu0 %v3066, 118
      %v3086 = vpop.permute.xlu0 %3085
      %3087 = vrot.lane.b32.xlu0 %v3067, 118
      %v3088 = vpop.permute.xlu0 %3087
      %v3089 = vsel %vm608, %v3076, %v3078
      %v3090 = vsel %vm608, %v3078, %v3080
      %v3091 = vsel %vm608, %v3080, %v3082
      %v3092 = vsel %vm608, %v3082, %v3084
      %v3093 = vsel %vm608, %v3084, %v3086
      %v3094 = vsel %vm608, %v3086, %v3088
      %3102 = vst [vmem:[#allocation2 + $0x380] sm:$0xff] %v3089
      %3103 = vst [vmem:[#allocation2 + $0x388] sm:$0xff] %v3090
      %3104 = vst [vmem:[#allocation2 + $0x390] sm:$0xff] %v3091
      %3105 = vst [vmem:[#allocation2 + $0x398] sm:$0xff] %v3092
      %3106 = vst [vmem:[#allocation2 + $0x3a0] sm:$0xff] %v3093
      %3107 = vst [vmem:[#allocation2 + $0x3a8] sm:$0xff] %v3094
      %3108 = vst.msk [vmem:[#allocation2 + $0x3b0] sm:$0xff] %vm286, %v3088
      %v3109 = vld [vmem:[#allocation3 + $0x8] sm:$0xff]
      %v3110 = vld [vmem:[#allocation3 + $0x10] sm:$0xff]
      %v3111 = vld [vmem:[#allocation3 + $0x18] sm:$0xff]
      %v3112 = vld [vmem:[#allocation3 + $0x20] sm:$0xff]
      %v3113 = vld [vmem:[#allocation3 + $0x28] sm:$0xff]
      %v3114 = vld [vmem:[#allocation3 + $0x30] sm:$0xff]
      %v3115 = vld [vmem:[#allocation3 + $0x38] sm:$0xff]
      %3123 = vrot.lane.b32.xlu0 %v3109, 117
      %v3124 = vpop.permute.xlu0 %3123
      %3125 = vrot.lane.b32.xlu0 %v3110, 117
      %v3126 = vpop.permute.xlu0 %3125
      %3127 = vrot.lane.b32.xlu0 %v3111, 117
      %v3128 = vpop.permute.xlu0 %3127
      %3129 = vrot.lane.b32.xlu0 %v3112, 117
      %v3130 = vpop.permute.xlu0 %3129
      %3131 = vrot.lane.b32.xlu0 %v3113, 117
      %v3132 = vpop.permute.xlu0 %3131
      %3133 = vrot.lane.b32.xlu0 %v3114, 117
      %v3134 = vpop.permute.xlu0 %3133
      %3135 = vrot.lane.b32.xlu0 %v3115, 117
      %v3136 = vpop.permute.xlu0 %3135
      %v3137 = vsel %vm654, %v3124, %v3126
      %v3138 = vsel %vm654, %v3126, %v3128
      %v3139 = vsel %vm654, %v3128, %v3130
      %v3140 = vsel %vm654, %v3130, %v3132
      %v3141 = vsel %vm654, %v3132, %v3134
      %v3142 = vsel %vm654, %v3134, %v3136
      %3150 = vst [vmem:[#allocation2 + $0x3b8] sm:$0xff] %v3137
      %3151 = vst [vmem:[#allocation2 + $0x3c0] sm:$0xff] %v3138
      %3152 = vst [vmem:[#allocation2 + $0x3c8] sm:$0xff] %v3139
      %3153 = vst [vmem:[#allocation2 + $0x3d0] sm:$0xff] %v3140
      %3154 = vst [vmem:[#allocation2 + $0x3d8] sm:$0xff] %v3141
      %3155 = vst [vmem:[#allocation2 + $0x3e0] sm:$0xff] %v3142
      %3156 = vst.msk [vmem:[#allocation2 + $0x3e8] sm:$0xff] %vm286, %v3136
      %v3157 = vld [vmem:[#allocation3 + $0x8] sm:$0xff]
      %v3158 = vld [vmem:[#allocation3 + $0x10] sm:$0xff]
      %v3159 = vld [vmem:[#allocation3 + $0x18] sm:$0xff]
      %v3160 = vld [vmem:[#allocation3 + $0x20] sm:$0xff]
      %v3161 = vld [vmem:[#allocation3 + $0x28] sm:$0xff]
      %v3162 = vld [vmem:[#allocation3 + $0x30] sm:$0xff]
      %v3163 = vld [vmem:[#allocation3 + $0x38] sm:$0xff]
      %3171 = vrot.lane.b32.xlu0 %v3157, 39
      %v3172 = vpop.permute.xlu0 %3171
      %3173 = vrot.lane.b32.xlu0 %v3158, 39
      %v3174 = vpop.permute.xlu0 %3173
      %3175 = vrot.lane.b32.xlu0 %v3159, 39
      %v3176 = vpop.permute.xlu0 %3175
      %3177 = vrot.lane.b32.xlu0 %v3160, 39
      %v3178 = vpop.permute.xlu0 %3177
      %3179 = vrot.lane.b32.xlu0 %v3161, 39
      %v3180 = vpop.permute.xlu0 %3179
      %3181 = vrot.lane.b32.xlu0 %v3162, 39
      %v3182 = vpop.permute.xlu0 %3181
      %3183 = vrot.lane.b32.xlu0 %v3163, 39
      %v3184 = vpop.permute.xlu0 %3183
      %vm3185 = vcmask 318464
      %v3186 = vsel %vm3185, %v3172, %v3174
      %v3187 = vsel %vm3185, %v3174, %v3176
      %v3188 = vsel %vm3185, %v3176, %v3178
      %v3189 = vsel %vm3185, %v3178, %v3180
      %v3190 = vsel %vm3185, %v3180, %v3182
      %v3191 = vsel %vm3185, %v3182, %v3184
      %3199 = vst [vmem:[#allocation2 + $0x3f0] sm:$0xff] %v3186
      %3200 = vst [vmem:[#allocation2 + $0x3f8] sm:$0xff] %v3187
      %3201 = vst [vmem:[#allocation2 + $0x400] sm:$0xff] %v3188
      %3202 = vst [vmem:[#allocation2 + $0x408] sm:$0xff] %v3189
      %3203 = vst [vmem:[#allocation2 + $0x410] sm:$0xff] %v3190
      %3204 = vst [vmem:[#allocation2 + $0x418] sm:$0xff] %v3191
      %3205 = vst.msk [vmem:[#allocation2 + $0x420] sm:$0xff] %vm286, %v3184
      %v3206 = vld [vmem:[#allocation3 + $0x8] sm:$0xff]
      %v3207 = vld [vmem:[#allocation3 + $0x10] sm:$0xff]
      %v3208 = vld [vmem:[#allocation3 + $0x18] sm:$0xff]
      %v3209 = vld [vmem:[#allocation3 + $0x20] sm:$0xff]
      %v3210 = vld [vmem:[#allocation3 + $0x28] sm:$0xff]
      %v3211 = vld [vmem:[#allocation3 + $0x30] sm:$0xff]
      %v3212 = vld [vmem:[#allocation3 + $0x38] sm:$0xff]
      %3220 = vrot.lane.b32.xlu0 %v3206, 38
      %v3221 = vpop.permute.xlu0 %3220
      %3222 = vrot.lane.b32.xlu0 %v3207, 38
      %v3223 = vpop.permute.xlu0 %3222
      %3224 = vrot.lane.b32.xlu0 %v3208, 38
      %v3225 = vpop.permute.xlu0 %3224
      %3226 = vrot.lane.b32.xlu0 %v3209, 38
      %v3227 = vpop.permute.xlu0 %3226
      %3228 = vrot.lane.b32.xlu0 %v3210, 38
      %v3229 = vpop.permute.xlu0 %3228
      %3230 = vrot.lane.b32.xlu0 %v3211, 38
      %v3231 = vpop.permute.xlu0 %3230
      %3232 = vrot.lane.b32.xlu0 %v3212, 38
      %v3233 = vpop.permute.xlu0 %3232
      %vm3234 = vcmask 310272
      %v3235 = vsel %vm3234, %v3221, %v3223
      %v3236 = vsel %vm3234, %v3223, %v3225
      %v3237 = vsel %vm3234, %v3225, %v3227
      %v3238 = vsel %vm3234, %v3227, %v3229
      %v3239 = vsel %vm3234, %v3229, %v3231
      %v3240 = vsel %vm3234, %v3231, %v3233
      %3248 = vst [vmem:[#allocation2 + $0x428] sm:$0xff] %v3235
      %3249 = vst [vmem:[#allocation2 + $0x430] sm:$0xff] %v3236
      %3250 = vst [vmem:[#allocation2 + $0x438] sm:$0xff] %v3237
      %3251 = vst [vmem:[#allocation2 + $0x440] sm:$0xff] %v3238
      %3252 = vst [vmem:[#allocation2 + $0x448] sm:$0xff] %v3239
      %3253 = vst [vmem:[#allocation2 + $0x450] sm:$0xff] %v3240
      %3254 = vst.msk [vmem:[#allocation2 + $0x458] sm:$0xff] %vm286, %v3233
      %v3255 = vld [vmem:[#allocation3 + $0x8] sm:$0xff]
      %v3256 = vld [vmem:[#allocation3 + $0x10] sm:$0xff]
      %v3257 = vld [vmem:[#allocation3 + $0x18] sm:$0xff]
      %v3258 = vld [vmem:[#allocation3 + $0x20] sm:$0xff]
      %v3259 = vld [vmem:[#allocation3 + $0x28] sm:$0xff]
      %v3260 = vld [vmem:[#allocation3 + $0x30] sm:$0xff]
      %v3261 = vld [vmem:[#allocation3 + $0x38] sm:$0xff]
      %3269 = vrot.lane.b32.xlu0 %v3255, 37
      %v3270 = vpop.permute.xlu0 %3269
      %3271 = vrot.lane.b32.xlu0 %v3256, 37
      %v3272 = vpop.permute.xlu0 %3271
      %3273 = vrot.lane.b32.xlu0 %v3257, 37
      %v3274 = vpop.permute.xlu0 %3273
      %3275 = vrot.lane.b32.xlu0 %v3258, 37
      %v3276 = vpop.permute.xlu0 %3275
      %3277 = vrot.lane.b32.xlu0 %v3259, 37
      %v3278 = vpop.permute.xlu0 %3277
      %3279 = vrot.lane.b32.xlu0 %v3260, 37
      %v3280 = vpop.permute.xlu0 %3279
      %3281 = vrot.lane.b32.xlu0 %v3261, 37
      %v3282 = vpop.permute.xlu0 %3281
      %vm3283 = vcmask 302080
      %v3284 = vsel %vm3283, %v3270, %v3272
      %v3285 = vsel %vm3283, %v3272, %v3274
      %v3286 = vsel %vm3283, %v3274, %v3276
      %v3287 = vsel %vm3283, %v3276, %v3278
      %v3288 = vsel %vm3283, %v3278, %v3280
      %v3289 = vsel %vm3283, %v3280, %v3282
      %3297 = vst [vmem:[#allocation2 + $0x460] sm:$0xff] %v3284
      %3298 = vst [vmem:[#allocation2 + $0x468] sm:$0xff] %v3285
      %3299 = vst [vmem:[#allocation2 + $0x470] sm:$0xff] %v3286
      %3300 = vst [vmem:[#allocation2 + $0x478] sm:$0xff] %v3287
      %3301 = vst [vmem:[#allocation2 + $0x480] sm:$0xff] %v3288
      %3302 = vst [vmem:[#allocation2 + $0x488] sm:$0xff] %v3289
      %3303 = vst.msk [vmem:[#allocation2 + $0x490] sm:$0xff] %vm286, %v3282
      %v3304 = vld [vmem:[#allocation3 + $0x8] sm:$0xff]
      %v3305 = vld [vmem:[#allocation3 + $0x10] sm:$0xff]
      %v3306 = vld [vmem:[#allocation3 + $0x18] sm:$0xff]
      %v3307 = vld [vmem:[#allocation3 + $0x20] sm:$0xff]
      %v3308 = vld [vmem:[#allocation3 + $0x28] sm:$0xff]
      %v3309 = vld [vmem:[#allocation3 + $0x30] sm:$0xff]
      %v3310 = vld [vmem:[#allocation3 + $0x38] sm:$0xff]
      %v3311 = vld [vmem:[#allocation3 + $0x40] sm:$0xff]
      %3320 = vrot.lane.b32.xlu0 %v3304, 29
      %v3321 = vpop.permute.xlu0 %3320
      %3322 = vrot.lane.b32.xlu0 %v3305, 29
      %v3323 = vpop.permute.xlu0 %3322
      %3324 = vrot.lane.b32.xlu0 %v3306, 29
      %v3325 = vpop.permute.xlu0 %3324
      %3326 = vrot.lane.b32.xlu0 %v3307, 29
      %v3327 = vpop.permute.xlu0 %3326
      %3328 = vrot.lane.b32.xlu0 %v3308, 29
      %v3329 = vpop.permute.xlu0 %3328
      %3330 = vrot.lane.b32.xlu0 %v3309, 29
      %v3331 = vpop.permute.xlu0 %3330
      %3332 = vrot.lane.b32.xlu0 %v3310, 29
      %v3333 = vpop.permute.xlu0 %3332
      %3334 = vrot.lane.b32.xlu0 %v3311, 29
      %v3335 = vpop.permute.xlu0 %3334
      %vm3336 = vcmask 236544
      %v3337 = vsel %vm3336, %v3321, %v3323
      %v3338 = vsel %vm3336, %v3323, %v3325
      %v3339 = vsel %vm3336, %v3325, %v3327
      %v3340 = vsel %vm3336, %v3327, %v3329
      %v3341 = vsel %vm3336, %v3329, %v3331
      %v3342 = vsel %vm3336, %v3331, %v3333
      %v3343 = vsel %vm3336, %v3333, %v3335
      %3351 = vst [vmem:[#allocation2 + $0x498] sm:$0xff] %v3337
      %3352 = vst [vmem:[#allocation2 + $0x4a0] sm:$0xff] %v3338
      %3353 = vst [vmem:[#allocation2 + $0x4a8] sm:$0xff] %v3339
      %3354 = vst [vmem:[#allocation2 + $0x4b0] sm:$0xff] %v3340
      %3355 = vst [vmem:[#allocation2 + $0x4b8] sm:$0xff] %v3341
      %3356 = vst [vmem:[#allocation2 + $0x4c0] sm:$0xff] %v3342
      %3357 = vst.msk [vmem:[#allocation2 + $0x4c8] sm:$0xff] %vm286, %v3343
      %v3358 = vld [vmem:[#allocation3 + $0x8] sm:$0xff]
      %v3359 = vld [vmem:[#allocation3 + $0x10] sm:$0xff]
      %v3360 = vld [vmem:[#allocation3 + $0x18] sm:$0xff]
      %v3361 = vld [vmem:[#allocation3 + $0x20] sm:$0xff]
      %v3362 = vld [vmem:[#allocation3 + $0x28] sm:$0xff]
      %v3363 = vld [vmem:[#allocation3 + $0x30] sm:$0xff]
      %v3364 = vld [vmem:[#allocation3 + $0x38] sm:$0xff]
      %v3365 = vld [vmem:[#allocation3 + $0x40] sm:$0xff]
      %3374 = vrot.lane.b32.xlu0 %v3358, 28
      %v3375 = vpop.permute.xlu0 %3374
      %3376 = vrot.lane.b32.xlu0 %v3359, 28
      %v3377 = vpop.permute.xlu0 %3376
      %3378 = vrot.lane.b32.xlu0 %v3360, 28
      %v3379 = vpop.permute.xlu0 %3378
      %3380 = vrot.lane.b32.xlu0 %v3361, 28
      %v3381 = vpop.permute.xlu0 %3380
      %3382 = vrot.lane.b32.xlu0 %v3362, 28
      %v3383 = vpop.permute.xlu0 %3382
      %3384 = vrot.lane.b32.xlu0 %v3363, 28
      %v3385 = vpop.permute.xlu0 %3384
      %3386 = vrot.lane.b32.xlu0 %v3364, 28
      %v3387 = vpop.permute.xlu0 %3386
      %3388 = vrot.lane.b32.xlu0 %v3365, 28
      %v3389 = vpop.permute.xlu0 %3388
      %v3390 = vsel %vm887, %v3375, %v3377
      %v3391 = vsel %vm887, %v3377, %v3379
      %v3392 = vsel %vm887, %v3379, %v3381
      %v3393 = vsel %vm887, %v3381, %v3383
      %v3394 = vsel %vm887, %v3383, %v3385
      %v3395 = vsel %vm887, %v3385, %v3387
      %v3396 = vsel %vm887, %v3387, %v3389
      %3404 = vst [vmem:[#allocation2 + $0x4d0] sm:$0xff] %v3390
      %3405 = vst [vmem:[#allocation2 + $0x4d8] sm:$0xff] %v3391
      %3406 = vst [vmem:[#allocation2 + $0x4e0] sm:$0xff] %v3392
      %3407 = vst [vmem:[#allocation2 + $0x4e8] sm:$0xff] %v3393
      %3408 = vst [vmem:[#allocation2 + $0x4f0] sm:$0xff] %v3394
      %3409 = vst [vmem:[#allocation2 + $0x4f8] sm:$0xff] %v3395
      %3410 = vst.msk [vmem:[#allocation2 + $0x500] sm:$0xff] %vm286, %v3396
      %v3411 = vld [vmem:[#allocation3 + $0x8] sm:$0xff]
      %v3412 = vld [vmem:[#allocation3 + $0x10] sm:$0xff]
      %v3413 = vld [vmem:[#allocation3 + $0x18] sm:$0xff]
      %v3414 = vld [vmem:[#allocation3 + $0x20] sm:$0xff]
      %v3415 = vld [vmem:[#allocation3 + $0x28] sm:$0xff]
      %v3416 = vld [vmem:[#allocation3 + $0x30] sm:$0xff]
      %v3417 = vld [vmem:[#allocation3 + $0x38] sm:$0xff]
      %v3418 = vld [vmem:[#allocation3 + $0x40] sm:$0xff]
      %3427 = vrot.lane.b32.xlu0 %v3411, 27
      %v3428 = vpop.permute.xlu0 %3427
      %3429 = vrot.lane.b32.xlu0 %v3412, 27
      %v3430 = vpop.permute.xlu0 %3429
      %3431 = vrot.lane.b32.xlu0 %v3413, 27
      %v3432 = vpop.permute.xlu0 %3431
      %3433 = vrot.lane.b32.xlu0 %v3414, 27
      %v3434 = vpop.permute.xlu0 %3433
      %3435 = vrot.lane.b32.xlu0 %v3415, 27
      %v3436 = vpop.permute.xlu0 %3435
      %3437 = vrot.lane.b32.xlu0 %v3416, 27
      %v3438 = vpop.permute.xlu0 %3437
      %3439 = vrot.lane.b32.xlu0 %v3417, 27
      %v3440 = vpop.permute.xlu0 %3439
      %3441 = vrot.lane.b32.xlu0 %v3418, 27
      %v3442 = vpop.permute.xlu0 %3441
      %v3443 = vsel %vm937, %v3428, %v3430
      %v3444 = vsel %vm937, %v3430, %v3432
      %v3445 = vsel %vm937, %v3432, %v3434
      %v3446 = vsel %vm937, %v3434, %v3436
      %v3447 = vsel %vm937, %v3436, %v3438
      %v3448 = vsel %vm937, %v3438, %v3440
      %v3449 = vsel %vm937, %v3440, %v3442
      %3457 = vst [vmem:[#allocation2 + $0x508] sm:$0xff] %v3443
      %3458 = vst [vmem:[#allocation2 + $0x510] sm:$0xff] %v3444
      %3459 = vst [vmem:[#allocation2 + $0x518] sm:$0xff] %v3445
      %3460 = vst [vmem:[#allocation2 + $0x520] sm:$0xff] %v3446
      %3461 = vst [vmem:[#allocation2 + $0x528] sm:$0xff] %v3447
      %3462 = vst [vmem:[#allocation2 + $0x530] sm:$0xff] %v3448
      %3463 = vst.msk [vmem:[#allocation2 + $0x538] sm:$0xff] %vm286, %v3449
      %v3464 = vld [vmem:[#allocation3 + $0x8] sm:$0xff]
      %v3465 = vld [vmem:[#allocation3 + $0x10] sm:$0xff]
      %v3466 = vld [vmem:[#allocation3 + $0x18] sm:$0xff]
      %v3467 = vld [vmem:[#allocation3 + $0x20] sm:$0xff]
      %v3468 = vld [vmem:[#allocation3 + $0x28] sm:$0xff]
      %v3469 = vld [vmem:[#allocation3 + $0x30] sm:$0xff]
      %v3470 = vld [vmem:[#allocation3 + $0x38] sm:$0xff]
      %v3471 = vld [vmem:[#allocation3 + $0x40] sm:$0xff]
      %3480 = vrot.lane.b32.xlu0 %v3464, 19
      %v3481 = vpop.permute.xlu0 %3480
      %3482 = vrot.lane.b32.xlu0 %v3465, 19
      %v3483 = vpop.permute.xlu0 %3482
      %3484 = vrot.lane.b32.xlu0 %v3466, 19
      %v3485 = vpop.permute.xlu0 %3484
      %3486 = vrot.lane.b32.xlu0 %v3467, 19
      %v3487 = vpop.permute.xlu0 %3486
      %3488 = vrot.lane.b32.xlu0 %v3468, 19
      %v3489 = vpop.permute.xlu0 %3488
      %3490 = vrot.lane.b32.xlu0 %v3469, 19
      %v3491 = vpop.permute.xlu0 %3490
      %3492 = vrot.lane.b32.xlu0 %v3470, 19
      %v3493 = vpop.permute.xlu0 %3492
      %3494 = vrot.lane.b32.xlu0 %v3471, 19
      %v3495 = vpop.permute.xlu0 %3494
      %vm3496 = vcmask 154624
      %v3497 = vsel %vm3496, %v3481, %v3483
      %v3498 = vsel %vm3496, %v3483, %v3485
      %v3499 = vsel %vm3496, %v3485, %v3487
      %v3500 = vsel %vm3496, %v3487, %v3489
      %v3501 = vsel %vm3496, %v3489, %v3491
      %v3502 = vsel %vm3496, %v3491, %v3493
      %v3503 = vsel %vm3496, %v3493, %v3495
      %3511 = vst [vmem:[#allocation2 + $0x540] sm:$0xff] %v3497
      %3512 = vst [vmem:[#allocation2 + $0x548] sm:$0xff] %v3498
      %3513 = vst [vmem:[#allocation2 + $0x550] sm:$0xff] %v3499
      %3514 = vst [vmem:[#allocation2 + $0x558] sm:$0xff] %v3500
      %3515 = vst [vmem:[#allocation2 + $0x560] sm:$0xff] %v3501
      %3516 = vst [vmem:[#allocation2 + $0x568] sm:$0xff] %v3502
      %3517 = vst.msk [vmem:[#allocation2 + $0x570] sm:$0xff] %vm286, %v3503
      %v3518 = vld [vmem:[#allocation3 + $0x8] sm:$0xff]
      %v3519 = vld [vmem:[#allocation3 + $0x10] sm:$0xff]
      %v3520 = vld [vmem:[#allocation3 + $0x18] sm:$0xff]
      %v3521 = vld [vmem:[#allocation3 + $0x20] sm:$0xff]
      %v3522 = vld [vmem:[#allocation3 + $0x28] sm:$0xff]
      %v3523 = vld [vmem:[#allocation3 + $0x30] sm:$0xff]
      %v3524 = vld [vmem:[#allocation3 + $0x38] sm:$0xff]
      %v3525 = vld [vmem:[#allocation3 + $0x40] sm:$0xff]
      %3534 = vrot.lane.b32.xlu0 %v3518, 18
      %v3535 = vpop.permute.xlu0 %3534
      %3536 = vrot.lane.b32.xlu0 %v3519, 18
      %v3537 = vpop.permute.xlu0 %3536
      %3538 = vrot.lane.b32.xlu0 %v3520, 18
      %v3539 = vpop.permute.xlu0 %3538
      %3540 = vrot.lane.b32.xlu0 %v3521, 18
      %v3541 = vpop.permute.xlu0 %3540
      %3542 = vrot.lane.b32.xlu0 %v3522, 18
      %v3543 = vpop.permute.xlu0 %3542
      %3544 = vrot.lane.b32.xlu0 %v3523, 18
      %v3545 = vpop.permute.xlu0 %3544
      %3546 = vrot.lane.b32.xlu0 %v3524, 18
      %v3547 = vpop.permute.xlu0 %3546
      %3548 = vrot.lane.b32.xlu0 %v3525, 18
      %v3549 = vpop.permute.xlu0 %3548
      %v3550 = vsel %vm1037, %v3535, %v3537
      %v3551 = vsel %vm1037, %v3537, %v3539
      %v3552 = vsel %vm1037, %v3539, %v3541
      %v3553 = vsel %vm1037, %v3541, %v3543
      %v3554 = vsel %vm1037, %v3543, %v3545
      %v3555 = vsel %vm1037, %v3545, %v3547
      %v3556 = vsel %vm1037, %v3547, %v3549
      %3564 = vst [vmem:[#allocation2 + $0x578] sm:$0xff] %v3550
      %3565 = vst [vmem:[#allocation2 + $0x580] sm:$0xff] %v3551
      %3566 = vst [vmem:[#allocation2 + $0x588] sm:$0xff] %v3552
      %3567 = vst [vmem:[#allocation2 + $0x590] sm:$0xff] %v3553
      %3568 = vst [vmem:[#allocation2 + $0x598] sm:$0xff] %v3554
      %3569 = vst [vmem:[#allocation2 + $0x5a0] sm:$0xff] %v3555
      %3570 = vst.msk [vmem:[#allocation2 + $0x5a8] sm:$0xff] %vm286, %v3556
      %v3571 = vld [vmem:[#allocation3 + $0x8] sm:$0xff]
      %v3572 = vld [vmem:[#allocation3 + $0x10] sm:$0xff]
      %v3573 = vld [vmem:[#allocation3 + $0x18] sm:$0xff]
      %v3574 = vld [vmem:[#allocation3 + $0x20] sm:$0xff]
      %v3575 = vld [vmem:[#allocation3 + $0x28] sm:$0xff]
      %v3576 = vld [vmem:[#allocation3 + $0x30] sm:$0xff]
      %v3577 = vld [vmem:[#allocation3 + $0x38] sm:$0xff]
      %v3578 = vld [vmem:[#allocation3 + $0x40] sm:$0xff]
      %3587 = vrot.lane.b32.xlu0 %v3571, 17
      %v3588 = vpop.permute.xlu0 %3587
      %3589 = vrot.lane.b32.xlu0 %v3572, 17
      %v3590 = vpop.permute.xlu0 %3589
      %3591 = vrot.lane.b32.xlu0 %v3573, 17
      %v3592 = vpop.permute.xlu0 %3591
      %3593 = vrot.lane.b32.xlu0 %v3574, 17
      %v3594 = vpop.permute.xlu0 %3593
      %3595 = vrot.lane.b32.xlu0 %v3575, 17
      %v3596 = vpop.permute.xlu0 %3595
      %3597 = vrot.lane.b32.xlu0 %v3576, 17
      %v3598 = vpop.permute.xlu0 %3597
      %3599 = vrot.lane.b32.xlu0 %v3577, 17
      %v3600 = vpop.permute.xlu0 %3599
      %3601 = vrot.lane.b32.xlu0 %v3578, 17
      %v3602 = vpop.permute.xlu0 %3601
      %v3603 = vsel %vm1087, %v3588, %v3590
      %v3604 = vsel %vm1087, %v3590, %v3592
      %v3605 = vsel %vm1087, %v3592, %v3594
      %v3606 = vsel %vm1087, %v3594, %v3596
      %v3607 = vsel %vm1087, %v3596, %v3598
      %v3608 = vsel %vm1087, %v3598, %v3600
      %v3609 = vsel %vm1087, %v3600, %v3602
      %3617 = vst [vmem:[#allocation2 + $0x5b0] sm:$0xff] %v3603
      %3618 = vst [vmem:[#allocation2 + $0x5b8] sm:$0xff] %v3604
      %3619 = vst [vmem:[#allocation2 + $0x5c0] sm:$0xff] %v3605
      %3620 = vst [vmem:[#allocation2 + $0x5c8] sm:$0xff] %v3606
      %3621 = vst [vmem:[#allocation2 + $0x5d0] sm:$0xff] %v3607
      %3622 = vst [vmem:[#allocation2 + $0x5d8] sm:$0xff] %v3608
      %3623 = vst.msk [vmem:[#allocation2 + $0x5e0] sm:$0xff] %vm286, %v3609
      %v3624 = vld [vmem:[%s3] sm:$0xff]
      %v3625 = vld [vmem:[%s3 + $0x8] sm:$0xff]
      %v3626 = vld [vmem:[#allocation2] sm:$0xff]
      %v3627 = vld [vmem:[#allocation2 + $0x8] sm:$0xff]
      %v3628 = vld [vmem:[#allocation2 + $0x10] sm:$0xff]
      %v3629 = vld [vmem:[#allocation2 + $0x18] sm:$0xff]
      %v3630 = vld [vmem:[#allocation2 + $0x20] sm:$0xff]
      %v3631 = vld [vmem:[#allocation2 + $0x28] sm:$0xff]
      %v3632 = vld [vmem:[#allocation2 + $0x30] sm:$0xff]
      %v3633 = vld [vmem:[#allocation2 + $0x38] sm:$0xff]
      %v3634 = vld [vmem:[#allocation2 + $0x40] sm:$0xff]
      %v3635 = vld [vmem:[#allocation2 + $0x48] sm:$0xff]
      %v3636 = vld [vmem:[#allocation2 + $0x50] sm:$0xff]
      %v3637 = vld [vmem:[#allocation2 + $0x58] sm:$0xff]
      %v3638 = vld [vmem:[#allocation2 + $0x60] sm:$0xff]
      %v3639 = vld [vmem:[#allocation2 + $0x68] sm:$0xff]
      %v3640 = vld [vmem:[#allocation2 + $0x70] sm:$0xff]
      %v3641 = vld [vmem:[#allocation2 + $0x78] sm:$0xff]
      %v3642 = vld [vmem:[#allocation2 + $0x80] sm:$0xff]
      %v3643 = vld [vmem:[#allocation2 + $0x88] sm:$0xff]
      %v3644 = vld [vmem:[#allocation2 + $0x90] sm:$0xff]
      %v3645 = vld [vmem:[#allocation2 + $0x98] sm:$0xff]
      %v3646 = vld [vmem:[#allocation2 + $0xa0] sm:$0xff]
      %v3647 = vld [vmem:[#allocation2 + $0xa8] sm:$0xff]
      %v3648 = vld [vmem:[#allocation2 + $0xb0] sm:$0xff]
      %v3649 = vld [vmem:[#allocation2 + $0xb8] sm:$0xff]
      %v3650 = vld [vmem:[#allocation2 + $0xc0] sm:$0xff]
      %v3651 = vld [vmem:[#allocation2 + $0xc8] sm:$0xff]
      %v3652 = vld [vmem:[#allocation2 + $0xd0] sm:$0xff]
      %v3653 = vld [vmem:[#allocation2 + $0xd8] sm:$0xff]
      %v3654 = vld [vmem:[#allocation2 + $0xe0] sm:$0xff]
      %v3655 = vld [vmem:[#allocation2 + $0xe8] sm:$0xff]
      %v3656 = vld [vmem:[#allocation2 + $0xf0] sm:$0xff]
      %v3657 = vld [vmem:[#allocation2 + $0xf8] sm:$0xff]
      %v3658 = vld [vmem:[#allocation2 + $0x100] sm:$0xff]
      %v3659 = vld [vmem:[#allocation2 + $0x108] sm:$0xff]
      %v3660 = vld [vmem:[#allocation2 + $0x110] sm:$0xff]
      %v3661 = vld [vmem:[#allocation2 + $0x118] sm:$0xff]
      %v3662 = vld [vmem:[#allocation2 + $0x120] sm:$0xff]
      %v3663 = vld [vmem:[#allocation2 + $0x128] sm:$0xff]
      %v3664 = vld [vmem:[#allocation2 + $0x130] sm:$0xff]
      %v3665 = vld [vmem:[#allocation2 + $0x138] sm:$0xff]
      %v3666 = vld [vmem:[#allocation2 + $0x140] sm:$0xff]
      %v3667 = vld [vmem:[#allocation2 + $0x148] sm:$0xff]
      %v3668 = vld [vmem:[#allocation2 + $0x150] sm:$0xff]
      %v3669 = vld [vmem:[#allocation2 + $0x158] sm:$0xff]
      %v3670 = vld [vmem:[#allocation2 + $0x160] sm:$0xff]
      %v3671 = vld [vmem:[#allocation2 + $0x168] sm:$0xff]
      %v3672 = vld [vmem:[#allocation2 + $0x170] sm:$0xff]
      %v3673 = vld [vmem:[#allocation2 + $0x178] sm:$0xff]
      %v3674 = vld [vmem:[#allocation2 + $0x180] sm:$0xff]
      %v3675 = vld [vmem:[#allocation2 + $0x188] sm:$0xff]
      %v3676 = vld [vmem:[#allocation2 + $0x190] sm:$0xff]
      %v3677 = vld [vmem:[#allocation2 + $0x198] sm:$0xff]
      %v3678 = vld [vmem:[#allocation2 + $0x1a0] sm:$0xff]
      %v3679 = vld [vmem:[#allocation2 + $0x1a8] sm:$0xff]
      %v3680 = vld [vmem:[#allocation2 + $0x1b0] sm:$0xff]
      %v3681 = vld [vmem:[#allocation2 + $0x1b8] sm:$0xff]
      %v3682 = vld [vmem:[#allocation2 + $0x1c0] sm:$0xff]
      %v3683 = vld [vmem:[#allocation2 + $0x1c8] sm:$0xff]
      %v3684 = vld [vmem:[#allocation2 + $0x1d0] sm:$0xff]
      %v3685 = vld [vmem:[#allocation2 + $0x1d8] sm:$0xff]
      %v3686 = vld [vmem:[#allocation2 + $0x1e0] sm:$0xff]
      %v3687 = vld [vmem:[#allocation2 + $0x1e8] sm:$0xff]
      %v3688 = vld [vmem:[#allocation2 + $0x1f0] sm:$0xff]
      %v3689 = vld [vmem:[#allocation2 + $0x1f8] sm:$0xff]
      %v3690 = vld [vmem:[#allocation2 + $0x200] sm:$0xff]
      %v3691 = vld [vmem:[#allocation2 + $0x208] sm:$0xff]
      %v3692 = vld [vmem:[#allocation2 + $0x210] sm:$0xff]
      %v3693 = vld [vmem:[#allocation2 + $0x218] sm:$0xff]
      %v3694 = vld [vmem:[#allocation2 + $0x220] sm:$0xff]
      %v3695 = vld [vmem:[#allocation2 + $0x228] sm:$0xff]
      %v3696 = vld [vmem:[#allocation2 + $0x230] sm:$0xff]
      %v3697 = vld [vmem:[#allocation2 + $0x238] sm:$0xff]
      %v3698 = vld [vmem:[#allocation2 + $0x240] sm:$0xff]
      %v3699 = vld [vmem:[#allocation2 + $0x248] sm:$0xff]
      %v3700 = vld [vmem:[#allocation2 + $0x250] sm:$0xff]
      %v3701 = vld [vmem:[#allocation2 + $0x258] sm:$0xff]
      %v3702 = vld [vmem:[#allocation2 + $0x260] sm:$0xff]
      %v3703 = vld [vmem:[#allocation2 + $0x268] sm:$0xff]
      %v3704 = vld [vmem:[#allocation2 + $0x270] sm:$0xff]
      %v3705 = vld [vmem:[#allocation2 + $0x278] sm:$0xff]
      %v3706 = vld [vmem:[#allocation2 + $0x280] sm:$0xff]
      %v3707 = vld [vmem:[#allocation2 + $0x288] sm:$0xff]
      %v3708 = vld [vmem:[#allocation2 + $0x290] sm:$0xff]
      %v3709 = vld [vmem:[#allocation2 + $0x298] sm:$0xff]
      %v3710 = vld [vmem:[#allocation2 + $0x2a0] sm:$0xff]
      %v3711 = vld [vmem:[#allocation2 + $0x2a8] sm:$0xff]
      %v3712 = vld [vmem:[#allocation2 + $0x2b0] sm:$0xff]
      %v3713 = vld [vmem:[#allocation2 + $0x2b8] sm:$0xff]
      %v3714 = vld [vmem:[#allocation2 + $0x2c0] sm:$0xff]
      %v3715 = vld [vmem:[#allocation2 + $0x2c8] sm:$0xff]
      %v3716 = vld [vmem:[#allocation2 + $0x2d0] sm:$0xff]
      %v3717 = vld [vmem:[#allocation2 + $0x2d8] sm:$0xff]
      %v3718 = vld [vmem:[#allocation2 + $0x2e0] sm:$0xff]
      %v3719 = vld [vmem:[#allocation2 + $0x2e8] sm:$0xff]
      %v3720 = vld [vmem:[#allocation2 + $0x2f0] sm:$0xff]
      %v3721 = vld [vmem:[#allocation2 + $0x2f8] sm:$0xff]
      %v3722 = vld [vmem:[#allocation2 + $0x300] sm:$0xff]
      %v3723 = vld [vmem:[#allocation2 + $0x308] sm:$0xff]
      %v3724 = vld [vmem:[#allocation2 + $0x310] sm:$0xff]
      %v3725 = vld [vmem:[#allocation2 + $0x318] sm:$0xff]
      %v3726 = vld [vmem:[#allocation2 + $0x320] sm:$0xff]
      %v3727 = vld [vmem:[#allocation2 + $0x328] sm:$0xff]
      %v3728 = vld [vmem:[#allocation2 + $0x330] sm:$0xff]
      %v3729 = vld [vmem:[#allocation2 + $0x338] sm:$0xff]
      %v3730 = vld [vmem:[#allocation2 + $0x340] sm:$0xff]
      %v3731 = vld [vmem:[#allocation2 + $0x348] sm:$0xff]
      %v3732 = vld [vmem:[#allocation2 + $0x350] sm:$0xff]
      %v3733 = vld [vmem:[#allocation2 + $0x358] sm:$0xff]
      %v3734 = vld [vmem:[#allocation2 + $0x360] sm:$0xff]
      %v3735 = vld [vmem:[#allocation2 + $0x368] sm:$0xff]
      %v3736 = vld [vmem:[#allocation2 + $0x370] sm:$0xff]
      %v3737 = vld [vmem:[#allocation2 + $0x378] sm:$0xff]
      %v3738 = vld [vmem:[#allocation2 + $0x380] sm:$0xff]
      %v3739 = vld [vmem:[#allocation2 + $0x388] sm:$0xff]
      %v3740 = vld [vmem:[#allocation2 + $0x390] sm:$0xff]
      %v3741 = vld [vmem:[#allocation2 + $0x398] sm:$0xff]
      %v3742 = vld [vmem:[#allocation2 + $0x3a0] sm:$0xff]
      %v3743 = vld [vmem:[#allocation2 + $0x3a8] sm:$0xff]
      %v3744 = vld [vmem:[#allocation2 + $0x3b0] sm:$0xff]
      %v3745 = vld [vmem:[#allocation2 + $0x3b8] sm:$0xff]
      %v3746 = vld [vmem:[#allocation2 + $0x3c0] sm:$0xff]
      %v3747 = vld [vmem:[#allocation2 + $0x3c8] sm:$0xff]
      %v3748 = vld [vmem:[#allocation2 + $0x3d0] sm:$0xff]
      %v3749 = vld [vmem:[#allocation2 + $0x3d8] sm:$0xff]
      %v3750 = vld [vmem:[#allocation2 + $0x3e0] sm:$0xff]
      %v3751 = vld [vmem:[#allocation2 + $0x3e8] sm:$0xff]
      %v3752 = vld [vmem:[#allocation2 + $0x3f0] sm:$0xff]
      %v3753 = vld [vmem:[#allocation2 + $0x3f8] sm:$0xff]
      %v3754 = vld [vmem:[#allocation2 + $0x400] sm:$0xff]
      %v3755 = vld [vmem:[#allocation2 + $0x408] sm:$0xff]
      %v3756 = vld [vmem:[#allocation2 + $0x410] sm:$0xff]
      %v3757 = vld [vmem:[#allocation2 + $0x418] sm:$0xff]
      %v3758 = vld [vmem:[#allocation2 + $0x420] sm:$0xff]
      %v3759 = vld [vmem:[#allocation2 + $0x428] sm:$0xff]
      %v3760 = vld [vmem:[#allocation2 + $0x430] sm:$0xff]
      %v3761 = vld [vmem:[#allocation2 + $0x438] sm:$0xff]
      %v3762 = vld [vmem:[#allocation2 + $0x440] sm:$0xff]
      %v3763 = vld [vmem:[#allocation2 + $0x448] sm:$0xff]
      %v3764 = vld [vmem:[#allocation2 + $0x450] sm:$0xff]
      %v3765 = vld [vmem:[#allocation2 + $0x458] sm:$0xff]
      %v3766 = vld [vmem:[#allocation2 + $0x460] sm:$0xff]
      %v3767 = vld [vmem:[#allocation2 + $0x468] sm:$0xff]
      %v3768 = vld [vmem:[#allocation2 + $0x470] sm:$0xff]
      %v3769 = vld [vmem:[#allocation2 + $0x478] sm:$0xff]
      %v3770 = vld [vmem:[#allocation2 + $0x480] sm:$0xff]
      %v3771 = vld [vmem:[#allocation2 + $0x488] sm:$0xff]
      %v3772 = vld [vmem:[#allocation2 + $0x490] sm:$0xff]
      %v3773 = vld [vmem:[#allocation2 + $0x498] sm:$0xff]
      %v3774 = vld [vmem:[#allocation2 + $0x4a0] sm:$0xff]
      %v3775 = vld [vmem:[#allocation2 + $0x4a8] sm:$0xff]
      %v3776 = vld [vmem:[#allocation2 + $0x4b0] sm:$0xff]
      %v3777 = vld [vmem:[#allocation2 + $0x4b8] sm:$0xff]
      %v3778 = vld [vmem:[#allocation2 + $0x4c0] sm:$0xff]
      %v3779 = vld [vmem:[#allocation2 + $0x4c8] sm:$0xff]
      %v3780 = vld [vmem:[#allocation2 + $0x4d0] sm:$0xff]
      %v3781 = vld [vmem:[#allocation2 + $0x4d8] sm:$0xff]
      %v3782 = vld [vmem:[#allocation2 + $0x4e0] sm:$0xff]
      %v3783 = vld [vmem:[#allocation2 + $0x4e8] sm:$0xff]
      %v3784 = vld [vmem:[#allocation2 + $0x4f0] sm:$0xff]
      %v3785 = vld [vmem:[#allocation2 + $0x4f8] sm:$0xff]
      %v3786 = vld [vmem:[#allocation2 + $0x500] sm:$0xff]
      %v3787 = vld [vmem:[#allocation2 + $0x508] sm:$0xff]
      %v3788 = vld [vmem:[#allocation2 + $0x510] sm:$0xff]
      %v3789 = vld [vmem:[#allocation2 + $0x518] sm:$0xff]
      %v3790 = vld [vmem:[#allocation2 + $0x520] sm:$0xff]
      %v3791 = vld [vmem:[#allocation2 + $0x528] sm:$0xff]
      %v3792 = vld [vmem:[#allocation2 + $0x530] sm:$0xff]
      %v3793 = vld [vmem:[#allocation2 + $0x538] sm:$0xff]
      %v3794 = vld [vmem:[#allocation2 + $0x540] sm:$0xff]
      %v3795 = vld [vmem:[#allocation2 + $0x548] sm:$0xff]
      %v3796 = vld [vmem:[#allocation2 + $0x550] sm:$0xff]
      %v3797 = vld [vmem:[#allocation2 + $0x558] sm:$0xff]
      %v3798 = vld [vmem:[#allocation2 + $0x560] sm:$0xff]
      %v3799 = vld [vmem:[#allocation2 + $0x568] sm:$0xff]
      %v3800 = vld [vmem:[#allocation2 + $0x570] sm:$0xff]
      %v3801 = vld [vmem:[#allocation2 + $0x578] sm:$0xff]
      %v3802 = vld [vmem:[#allocation2 + $0x580] sm:$0xff]
      %v3803 = vld [vmem:[#allocation2 + $0x588] sm:$0xff]
      %v3804 = vld [vmem:[#allocation2 + $0x590] sm:$0xff]
      %v3805 = vld [vmem:[#allocation2 + $0x598] sm:$0xff]
      %v3806 = vld [vmem:[#allocation2 + $0x5a0] sm:$0xff]
      %v3807 = vld [vmem:[#allocation2 + $0x5a8] sm:$0xff]
      %v3808 = vld [vmem:[#allocation2 + $0x5b0] sm:$0xff]
      %v3809 = vld [vmem:[#allocation2 + $0x5b8] sm:$0xff]
      %v3810 = vld [vmem:[#allocation2 + $0x5c0] sm:$0xff]
      %v3811 = vld [vmem:[#allocation2 + $0x5c8] sm:$0xff]
      %v3812 = vld [vmem:[#allocation2 + $0x5d0] sm:$0xff]
      %v3813 = vld [vmem:[#allocation2 + $0x5d8] sm:$0xff]
      %v3814 = vld [vmem:[#allocation2 + $0x5e0] sm:$0xff]
      %v3816 = vsel %vm1914, %v3625, 0
      %3818 = vmatprep.subr.mxu0 %v3627
      %3819 = vmatpush1.msra.mxu0 %v3626
      %3820 = vmatprep.subr.mxu0 %v3634
      %3821 = vmatpush1.msra.mxu0 %v3633
      %3822 = vmatprep.subr.mxu0 %v3641
      %3823 = vmatpush1.msra.mxu0 %v3640
      %3824 = vmatprep.subr.mxu0 %v3648
      %3825 = vmatpush1.msra.mxu0 %v3647
      %3826 = vmatprep.subr.mxu0 %v3655
      %3827 = vmatpush1.msra.mxu0 %v3654
      %3828 = vmatprep.subr.mxu0 %v3662
      %3829 = vmatpush1.msra.mxu0 %v3661
      %3830 = vmatprep.subr.mxu0 %v3669
      %3831 = vmatpush1.msra.mxu0 %v3668
      %3832 = vmatprep.subr.mxu0 %v3676
      %3833 = vmatpush1.msra.mxu0 %v3675
      %3834 = vmatprep.subr.mxu0 %v3683
      %3835 = vmatpush1.msra.mxu0 %v3682
      %3836 = vmatprep.subr.mxu0 %v3690
      %3837 = vmatpush1.msra.mxu0 %v3689
      %3838 = vmatprep.subr.mxu0 %v3697
      %3839 = vmatpush1.msra.mxu0 %v3696
      %3840 = vmatprep.subr.mxu0 %v3704
      %3841 = vmatpush1.msra.mxu0 %v3703
      %3842 = vmatprep.subr.mxu0 %v3711
      %3843 = vmatpush1.msra.mxu0 %v3710
      %3844 = vmatprep.subr.mxu0 %v3718
      %3845 = vmatpush1.msra.mxu0 %v3717
      %3846 = vmatprep.subr.mxu0 %v3725
      %3847 = vmatpush1.msra.mxu0 %v3724
      %3848 = vmatprep.subr.mxu0 %v3732
      %3849 = vmatpush1.msra.mxu0 %v3731
      %3850 = vmatprep.subr.mxu0 %v3739
      %3851 = vmatpush1.msra.mxu0 %v3738
      %3852 = vmatprep.subr.mxu0 %v3746
      %3853 = vmatpush1.msra.mxu0 %v3745
      %3854 = vmatprep.subr.mxu0 %v3753
      %3855 = vmatpush1.msra.mxu0 %v3752
      %3856 = vmatprep.subr.mxu0 %v3760
      %3857 = vmatpush1.msra.mxu0 %v3759
      %3858 = vmatprep.subr.mxu0 %v3767
      %3859 = vmatpush1.msra.mxu0 %v3766
      %3860 = vmatprep.subr.mxu0 %v3774
      %3861 = vmatpush1.msra.mxu0 %v3773
      %3862 = vmatprep.subr.mxu0 %v3781
      %3863 = vmatpush1.msra.mxu0 %v3780
      %3864 = vmatprep.subr.mxu0 %v3788
      %3865 = vmatpush1.msra.mxu0 %v3787
      %3866 = vmatprep.subr.mxu0 %v3795
      %3867 = vmatpush1.msra.mxu0 %v3794
      %3868 = vmatprep.subr.mxu0 %v3802
      %3869 = vmatpush1.msra.mxu0 %v3801
      %3870 = vmatprep.subr.mxu0 %v3809
      %3871 = vmatpush1.msra.mxu0 %v3808
      %3872 = vmatprep.subr.mxu0 0.0
      %3873 = vmatpush1.msra.mxu0 0.0
      %3874 = vmatprep.subr.mxu0 0.0
      %3875 = vmatpush1.msra.mxu0 0.0
      %3876 = vmatprep.subr.mxu0 0.0
      %3877 = vmatpush1.msra.mxu0 0.0
      %3878 = vmatprep.subr.mxu0 0.0
      %3879 = vmatpush1.msra.mxu0 0.0
      %3880 = vmatprep.subr.mxu0 0.0
      %3881 = vmatpush1.msra.mxu0 0.0
      %3882 = vmatprep.mubr.f32.mxu0 %v3816
      %3883 = vmatmul.mubr.f32.gmra.mrb[0].mxu0 %v3624
      %v3884 = vpop.f32.mrb[0].mxu0
      %v3885 = vadd.f32 0.0, %v3884
      %v3886 = vpop.f32.mrb[0].mxu0
      %v3887 = vadd.f32 0.0, %v3886
      %3888 = vdwg.mxu0
      %3889 = vmatprep.subr.mxu0 %v3629
      %3890 = vmatpush1.msra.mxu0 %v3628
      %3891 = vmatprep.subr.mxu0 %v3636
      %3892 = vmatpush1.msra.mxu0 %v3635
      %3893 = vmatprep.subr.mxu0 %v3643
      %3894 = vmatpush1.msra.mxu0 %v3642
      %3895 = vmatprep.subr.mxu0 %v3650
      %3896 = vmatpush1.msra.mxu0 %v3649
      %3897 = vmatprep.subr.mxu0 %v3657
      %3898 = vmatpush1.msra.mxu0 %v3656
      %3899 = vmatprep.subr.mxu0 %v3664
      %3900 = vmatpush1.msra.mxu0 %v3663
      %3901 = vmatprep.subr.mxu0 %v3671
      %3902 = vmatpush1.msra.mxu0 %v3670
      %3903 = vmatprep.subr.mxu0 %v3678
      %3904 = vmatpush1.msra.mxu0 %v3677
      %3905 = vmatprep.subr.mxu0 %v3685
      %3906 = vmatpush1.msra.mxu0 %v3684
      %3907 = vmatprep.subr.mxu0 %v3692
      %3908 = vmatpush1.msra.mxu0 %v3691
      %3909 = vmatprep.subr.mxu0 %v3699
      %3910 = vmatpush1.msra.mxu0 %v3698
      %3911 = vmatprep.subr.mxu0 %v3706
      %3912 = vmatpush1.msra.mxu0 %v3705
      %3913 = vmatprep.subr.mxu0 %v3713
      %3914 = vmatpush1.msra.mxu0 %v3712
      %3915 = vmatprep.subr.mxu0 %v3720
      %3916 = vmatpush1.msra.mxu0 %v3719
      %3917 = vmatprep.subr.mxu0 %v3727
      %3918 = vmatpush1.msra.mxu0 %v3726
      %3919 = vmatprep.subr.mxu0 %v3734
      %3920 = vmatpush1.msra.mxu0 %v3733
      %3921 = vmatprep.subr.mxu0 %v3741
      %3922 = vmatpush1.msra.mxu0 %v3740
      %3923 = vmatprep.subr.mxu0 %v3748
      %3924 = vmatpush1.msra.mxu0 %v3747
      %3925 = vmatprep.subr.mxu0 %v3755
      %3926 = vmatpush1.msra.mxu0 %v3754
      %3927 = vmatprep.subr.mxu0 %v3762
      %3928 = vmatpush1.msra.mxu0 %v3761
      %3929 = vmatprep.subr.mxu0 %v3769
      %3930 = vmatpush1.msra.mxu0 %v3768
      %3931 = vmatprep.subr.mxu0 %v3776
      %3932 = vmatpush1.msra.mxu0 %v3775
      %3933 = vmatprep.subr.mxu0 %v3783
      %3934 = vmatpush1.msra.mxu0 %v3782
      %3935 = vmatprep.subr.mxu0 %v3790
      %3936 = vmatpush1.msra.mxu0 %v3789
      %3937 = vmatprep.subr.mxu0 %v3797
      %3938 = vmatpush1.msra.mxu0 %v3796
      %3939 = vmatprep.subr.mxu0 %v3804
      %3940 = vmatpush1.msra.mxu0 %v3803
      %3941 = vmatprep.subr.mxu0 %v3811
      %3942 = vmatpush1.msra.mxu0 %v3810
      %3943 = vmatprep.subr.mxu0 0.0
      %3944 = vmatpush1.msra.mxu0 0.0
      %3945 = vmatprep.subr.mxu0 0.0
      %3946 = vmatpush1.msra.mxu0 0.0
      %3947 = vmatprep.subr.mxu0 0.0
      %3948 = vmatpush1.msra.mxu0 0.0
      %3949 = vmatprep.subr.mxu0 0.0
      %3950 = vmatpush1.msra.mxu0 0.0
      %3951 = vmatprep.subr.mxu0 0.0
      %3952 = vmatpush1.msra.mxu0 0.0
      %3953 = vmatprep.mubr.f32.mxu0 %v3816
      %3954 = vmatmul.mubr.f32.gmra.mrb[0].mxu0 %v3624
      %v3955 = vpop.f32.mrb[0].mxu0
      %v3956 = vadd.f32 0.0, %v3955
      %v3957 = vpop.f32.mrb[0].mxu0
      %v3958 = vadd.f32 0.0, %v3957
      %3959 = vdwg.mxu0
      %3960 = vmatprep.subr.mxu0 %v3631
      %3961 = vmatpush1.msra.mxu0 %v3630
      %3962 = vmatprep.subr.mxu0 %v3638
      %3963 = vmatpush1.msra.mxu0 %v3637
      %3964 = vmatprep.subr.mxu0 %v3645
      %3965 = vmatpush1.msra.mxu0 %v3644
      %3966 = vmatprep.subr.mxu0 %v3652
      %3967 = vmatpush1.msra.mxu0 %v3651
      %3968 = vmatprep.subr.mxu0 %v3659
      %3969 = vmatpush1.msra.mxu0 %v3658
      %3970 = vmatprep.subr.mxu0 %v3666
      %3971 = vmatpush1.msra.mxu0 %v3665
      %3972 = vmatprep.subr.mxu0 %v3673
      %3973 = vmatpush1.msra.mxu0 %v3672
      %3974 = vmatprep.subr.mxu0 %v3680
      %3975 = vmatpush1.msra.mxu0 %v3679
      %3976 = vmatprep.subr.mxu0 %v3687
      %3977 = vmatpush1.msra.mxu0 %v3686
      %3978 = vmatprep.subr.mxu0 %v3694
      %3979 = vmatpush1.msra.mxu0 %v3693
      %3980 = vmatprep.subr.mxu0 %v3701
      %3981 = vmatpush1.msra.mxu0 %v3700
      %3982 = vmatprep.subr.mxu0 %v3708
      %3983 = vmatpush1.msra.mxu0 %v3707
      %3984 = vmatprep.subr.mxu0 %v3715
      %3985 = vmatpush1.msra.mxu0 %v3714
      %3986 = vmatprep.subr.mxu0 %v3722
      %3987 = vmatpush1.msra.mxu0 %v3721
      %3988 = vmatprep.subr.mxu0 %v3729
      %3989 = vmatpush1.msra.mxu0 %v3728
      %3990 = vmatprep.subr.mxu0 %v3736
      %3991 = vmatpush1.msra.mxu0 %v3735
      %3992 = vmatprep.subr.mxu0 %v3743
      %3993 = vmatpush1.msra.mxu0 %v3742
      %3994 = vmatprep.subr.mxu0 %v3750
      %3995 = vmatpush1.msra.mxu0 %v3749
      %3996 = vmatprep.subr.mxu0 %v3757
      %3997 = vmatpush1.msra.mxu0 %v3756
      %3998 = vmatprep.subr.mxu0 %v3764
      %3999 = vmatpush1.msra.mxu0 %v3763
      %4000 = vmatprep.subr.mxu0 %v3771
      %4001 = vmatpush1.msra.mxu0 %v3770
      %4002 = vmatprep.subr.mxu0 %v3778
      %4003 = vmatpush1.msra.mxu0 %v3777
      %4004 = vmatprep.subr.mxu0 %v3785
      %4005 = vmatpush1.msra.mxu0 %v3784
      %4006 = vmatprep.subr.mxu0 %v3792
      %4007 = vmatpush1.msra.mxu0 %v3791
      %4008 = vmatprep.subr.mxu0 %v3799
      %4009 = vmatpush1.msra.mxu0 %v3798
      %4010 = vmatprep.subr.mxu0 %v3806
      %4011 = vmatpush1.msra.mxu0 %v3805
      %4012 = vmatprep.subr.mxu0 %v3813
      %4013 = vmatpush1.msra.mxu0 %v3812
      %4014 = vmatprep.subr.mxu0 0.0
      %4015 = vmatpush1.msra.mxu0 0.0
      %4016 = vmatprep.subr.mxu0 0.0
      %4017 = vmatpush1.msra.mxu0 0.0
      %4018 = vmatprep.subr.mxu0 0.0
      %4019 = vmatpush1.msra.mxu0 0.0
      %4020 = vmatprep.subr.mxu0 0.0
      %4021 = vmatpush1.msra.mxu0 0.0
      %4022 = vmatprep.subr.mxu0 0.0
      %4023 = vmatpush1.msra.mxu0 0.0
      %4024 = vmatprep.mubr.f32.mxu0 %v3816
      %4025 = vmatmul.mubr.f32.gmra.mrb[0].mxu0 %v3624
      %v4026 = vpop.f32.mrb[0].mxu0
      %v4027 = vadd.f32 0.0, %v4026
      %v4028 = vpop.f32.mrb[0].mxu0
      %v4029 = vadd.f32 0.0, %v4028
      %4030 = vdwg.mxu0
      %4031 = vmatprep.subr.mxu0 0.0
      %4032 = vmatpush1.msra.mxu0 %v3632
      %4033 = vmatprep.subr.mxu0 0.0
      %4034 = vmatpush1.msra.mxu0 %v3639
      %4035 = vmatprep.subr.mxu0 0.0
      %4036 = vmatpush1.msra.mxu0 %v3646
      %4037 = vmatprep.subr.mxu0 0.0
      %4038 = vmatpush1.msra.mxu0 %v3653
      %4039 = vmatprep.subr.mxu0 0.0
      %4040 = vmatpush1.msra.mxu0 %v3660
      %4041 = vmatprep.subr.mxu0 0.0
      %4042 = vmatpush1.msra.mxu0 %v3667
      %4043 = vmatprep.subr.mxu0 0.0
      %4044 = vmatpush1.msra.mxu0 %v3674
      %4045 = vmatprep.subr.mxu0 0.0
      %4046 = vmatpush1.msra.mxu0 %v3681
      %4047 = vmatprep.subr.mxu0 0.0
      %4048 = vmatpush1.msra.mxu0 %v3688
      %4049 = vmatprep.subr.mxu0 0.0
      %4050 = vmatpush1.msra.mxu0 %v3695
      %4051 = vmatprep.subr.mxu0 0.0
      %4052 = vmatpush1.msra.mxu0 %v3702
      %4053 = vmatprep.subr.mxu0 0.0
      %4054 = vmatpush1.msra.mxu0 %v3709
      %4055 = vmatprep.subr.mxu0 0.0
      %4056 = vmatpush1.msra.mxu0 %v3716
      %4057 = vmatprep.subr.mxu0 0.0
      %4058 = vmatpush1.msra.mxu0 %v3723
      %4059 = vmatprep.subr.mxu0 0.0
      %4060 = vmatpush1.msra.mxu0 %v3730
      %4061 = vmatprep.subr.mxu0 0.0
      %4062 = vmatpush1.msra.mxu0 %v3737
      %4063 = vmatprep.subr.mxu0 0.0
      %4064 = vmatpush1.msra.mxu0 %v3744
      %4065 = vmatprep.subr.mxu0 0.0
      %4066 = vmatpush1.msra.mxu0 %v3751
      %4067 = vmatprep.subr.mxu0 0.0
      %4068 = vmatpush1.msra.mxu0 %v3758
      %4069 = vmatprep.subr.mxu0 0.0
      %4070 = vmatpush1.msra.mxu0 %v3765
      %4071 = vmatprep.subr.mxu0 0.0
      %4072 = vmatpush1.msra.mxu0 %v3772
      %4073 = vmatprep.subr.mxu0 0.0
      %4074 = vmatpush1.msra.mxu0 %v3779
      %4075 = vmatprep.subr.mxu0 0.0
      %4076 = vmatpush1.msra.mxu0 %v3786
      %4077 = vmatprep.subr.mxu0 0.0
      %4078 = vmatpush1.msra.mxu0 %v3793
      %4079 = vmatprep.subr.mxu0 0.0
      %4080 = vmatpush1.msra.mxu0 %v3800
      %4081 = vmatprep.subr.mxu0 0.0
      %4082 = vmatpush1.msra.mxu0 %v3807
      %4083 = vmatprep.subr.mxu0 0.0
      %4084 = vmatpush1.msra.mxu0 %v3814
      %4085 = vmatprep.subr.mxu0 0.0
      %4086 = vmatpush1.msra.mxu0 0.0
      %4087 = vmatprep.subr.mxu0 0.0
      %4088 = vmatpush1.msra.mxu0 0.0
      %4089 = vmatprep.subr.mxu0 0.0
      %4090 = vmatpush1.msra.mxu0 0.0
      %4091 = vmatprep.subr.mxu0 0.0
      %4092 = vmatpush1.msra.mxu0 0.0
      %4093 = vmatprep.subr.mxu0 0.0
      %4094 = vmatpush1.msra.mxu0 0.0
      %4095 = vmatprep.mubr.f32.mxu0 %v3816
      %4096 = vmatmul.mubr.f32.gmra.mrb[0].mxu0 %v3624
      %v4097 = vpop.f32.mrb[0].mxu0
      %v4098 = vadd.f32 0.0, %v4097
      %v4099 = vpop.f32.mrb[0].mxu0
      %4100 = vdwg.mxu0
      %s4101 = scalar_lea.vmem %s5, 8
      %v4102 = vld [vmem:[%s4101] sm:$0xff]
      %4104 = vset.pattern.permute.xlu0 0
      %4105 = vperm.xlu0 %4104, %v4102
      %v4106 = vpop.permute.xlu0 %4105
      %v4108 = vmul.f32 %v3885, %v4106
      %v4109 = vmul.f32 %v3887, %v4106
      %v4110 = vmul.f32 %v3956, %v4106
      %v4111 = vmul.f32 %v3958, %v4106
      %v4112 = vmul.f32 %v4027, %v4106
      %v4113 = vmul.f32 %v4029, %v4106
      %v4114 = vmul.f32 %v4098, %v4106
      %s4115 = scalar_lea.vmem %s6, 8
      %v4116 = vld [vmem:[%s4115] sm:$0xff]
      %4118 = vset.pattern.permute.xlu0 0
      %4119 = vperm.xlu0 %4118, %v4116
      %v4120 = vpop.permute.xlu0 %4119
      %v4122 = vadd.f32 %v4108, %v4120
      %v4123 = vadd.f32 %v4109, %v4120
      %v4124 = vadd.f32 %v4110, %v4120
      %v4125 = vadd.f32 %v4111, %v4120
      %v4126 = vadd.f32 %v4112, %v4120
      %v4127 = vadd.f32 %v4113, %v4120
      %v4128 = vadd.f32 %v4114, %v4120
      %v4129 = vmax.f32 %v4122, 0.0
      %v4130 = vmax.f32 %v4123, 0.0
      %v4131 = vmax.f32 %v4124, 0.0
      %v4132 = vmax.f32 %v4125, 0.0
      %v4133 = vmax.f32 %v4126, 0.0
      %v4134 = vmax.f32 %v4127, 0.0
      %v4135 = vmax.f32 %v4128, 0.0
      %v4136 = vld [vmem:[%s4] sm:$0xff]
      %v4137 = vld [vmem:[%s273] sm:$0xff]
      %v4138 = vld [vmem:[%s273 + $0x8] sm:$0xff]
      %v4139 = vld [vmem:[%s273 + $0x10] sm:$0xff]
      %v4140 = vld [vmem:[%s273 + $0x18] sm:$0xff]
      %v4145 = vcombine.high %v4137, %v4137
      %v4146 = vcombine.high %v4138, %v4138
      %v4147 = vcombine.high %v4139, %v4139
      %v4148 = vcombine.high %v4140, %v4140
      %4149 = vrot.lane.b32.xlu0 %v4137, 17
      %v4150 = vpop.permute.xlu0 %4149
      %4151 = vrot.lane.b32.xlu0 %v4145, 17
      %v4152 = vpop.permute.xlu0 %4151
      %4153 = vrot.lane.b32.xlu0 %v4138, 17
      %v4154 = vpop.permute.xlu0 %4153
      %4155 = vrot.lane.b32.xlu0 %v4146, 17
      %v4156 = vpop.permute.xlu0 %4155
      %4157 = vrot.lane.b32.xlu0 %v4139, 17
      %v4158 = vpop.permute.xlu0 %4157
      %4159 = vrot.lane.b32.xlu0 %v4147, 17
      %v4160 = vpop.permute.xlu0 %4159
      %4161 = vrot.lane.b32.xlu0 %v4140, 17
      %v4162 = vpop.permute.xlu0 %4161
      %4163 = vrot.lane.b32.xlu0 %v4148, 17
      %v4164 = vpop.permute.xlu0 %4163
      %v4165 = vsel %vm1087, %v4150, %v4152
      %v4166 = vsel %vm1087, %v4152, %v4154
      %v4167 = vsel %vm1087, %v4154, %v4156
      %v4168 = vsel %vm1087, %v4156, %v4158
      %v4169 = vsel %vm1087, %v4158, %v4160
      %v4170 = vsel %vm1087, %v4160, %v4162
      %v4171 = vsel %vm1087, %v4162, %v4164
      %vm4172 = vcmask 31744
      %v4174 = vsel %vm4172, %v4136, 0
      %vm4176 = vcmask 1043456
      %v4177 = vsel %vm4176, %v4165, 0
      %v4179 = vsel %vm4176, %v4166, 0
      %v4181 = vsel %vm4176, %v4167, 0
      %v4183 = vsel %vm4176, %v4168, 0
      %v4185 = vsel %vm4176, %v4169, 0
      %v4187 = vsel %vm4176, %v4170, 0
      %v4189 = vsel %vm4176, %v4171, 0
      %4191 = vmatprep.subr.mxu0 %v4179
      %4192 = vmatpush1.msra.mxu0 %v4177
      %4193 = vmatprep.subr.mxu0 0.0
      %4194 = vmatpush1.msra.mxu0 0.0
      %4195 = vmatprep.subr.mxu0 0.0
      %4196 = vmatpush1.msra.mxu0 0.0
      %4197 = vmatprep.subr.mxu0 0.0
      %4198 = vmatpush1.msra.mxu0 0.0
      %4199 = vmatprep.subr.mxu0 0.0
      %4200 = vmatpush1.msra.mxu0 0.0
      %4201 = vmatprep.subr.mxu0 0.0
      %4202 = vmatpush1.msra.mxu0 0.0
      %4203 = vmatprep.subr.mxu0 0.0
      %4204 = vmatpush1.msra.mxu0 0.0
      %4205 = vmatprep.subr.mxu0 0.0
      %4206 = vmatpush1.msra.mxu0 0.0
      %4207 = vmatprep.subr.mxu0 0.0
      %4208 = vmatpush1.msra.mxu0 0.0
      %4209 = vmatprep.subr.mxu0 0.0
      %4210 = vmatpush1.msra.mxu0 0.0
      %4211 = vmatprep.subr.mxu0 0.0
      %4212 = vmatpush1.msra.mxu0 0.0
      %4213 = vmatprep.subr.mxu0 0.0
      %4214 = vmatpush1.msra.mxu0 0.0
      %4215 = vmatprep.subr.mxu0 0.0
      %4216 = vmatpush1.msra.mxu0 0.0
      %4217 = vmatprep.subr.mxu0 0.0
      %4218 = vmatpush1.msra.mxu0 0.0
      %4219 = vmatprep.subr.mxu0 0.0
      %4220 = vmatpush1.msra.mxu0 0.0
      %4221 = vmatprep.subr.mxu0 0.0
      %4222 = vmatpush1.msra.mxu0 0.0
      %4223 = vmatprep.subr.mxu0 0.0
      %4224 = vmatpush1.msra.mxu0 0.0
      %4225 = vmatprep.subr.mxu0 0.0
      %4226 = vmatpush1.msra.mxu0 0.0
      %4227 = vmatprep.subr.mxu0 0.0
      %4228 = vmatpush1.msra.mxu0 0.0
      %4229 = vmatprep.subr.mxu0 0.0
      %4230 = vmatpush1.msra.mxu0 0.0
      %4231 = vmatprep.subr.mxu0 0.0
      %4232 = vmatpush1.msra.mxu0 0.0
      %4233 = vmatprep.subr.mxu0 0.0
      %4234 = vmatpush1.msra.mxu0 0.0
      %4235 = vmatprep.subr.mxu0 0.0
      %4236 = vmatpush1.msra.mxu0 0.0
      %4237 = vmatprep.subr.mxu0 0.0
      %4238 = vmatpush1.msra.mxu0 0.0
      %4239 = vmatprep.subr.mxu0 0.0
      %4240 = vmatpush1.msra.mxu0 0.0
      %4241 = vmatprep.subr.mxu0 0.0
      %4242 = vmatpush1.msra.mxu0 0.0
      %4243 = vmatprep.subr.mxu0 0.0
      %4244 = vmatpush1.msra.mxu0 0.0
      %4245 = vmatprep.subr.mxu0 0.0
      %4246 = vmatpush1.msra.mxu0 0.0
      %4247 = vmatprep.subr.mxu0 0.0
      %4248 = vmatpush1.msra.mxu0 0.0
      %4249 = vmatprep.subr.mxu0 0.0
      %4250 = vmatpush1.msra.mxu0 0.0
      %4251 = vmatprep.subr.mxu0 0.0
      %4252 = vmatpush1.msra.mxu0 0.0
      %4253 = vmatprep.subr.mxu0 0.0
      %4254 = vmatpush1.msra.mxu0 0.0
      %4255 = vmatprep.mubr.f32.mxu0 0.0
      %4256 = vmatmul.mubr.f32.gmra.mrb[0].mxu0 %v4174
      %v4257 = vpop.f32.mrb[0].mxu0
      %v4258 = vadd.f32 0.0, %v4257
      %v4259 = vpop.f32.mrb[0].mxu0
      %v4260 = vadd.f32 0.0, %v4259
      %4261 = vdwg.mxu0
      %4262 = vmatprep.subr.mxu0 %v4183
      %4263 = vmatpush1.msra.mxu0 %v4181
      %4264 = vmatprep.subr.mxu0 0.0
      %4265 = vmatpush1.msra.mxu0 0.0
      %4266 = vmatprep.subr.mxu0 0.0
      %4267 = vmatpush1.msra.mxu0 0.0
      %4268 = vmatprep.subr.mxu0 0.0
      %4269 = vmatpush1.msra.mxu0 0.0
      %4270 = vmatprep.subr.mxu0 0.0
      %4271 = vmatpush1.msra.mxu0 0.0
      %4272 = vmatprep.subr.mxu0 0.0
      %4273 = vmatpush1.msra.mxu0 0.0
      %4274 = vmatprep.subr.mxu0 0.0
      %4275 = vmatpush1.msra.mxu0 0.0
      %4276 = vmatprep.subr.mxu0 0.0
      %4277 = vmatpush1.msra.mxu0 0.0
      %4278 = vmatprep.subr.mxu0 0.0
      %4279 = vmatpush1.msra.mxu0 0.0
      %4280 = vmatprep.subr.mxu0 0.0
      %4281 = vmatpush1.msra.mxu0 0.0
      %4282 = vmatprep.subr.mxu0 0.0
      %4283 = vmatpush1.msra.mxu0 0.0
      %4284 = vmatprep.subr.mxu0 0.0
      %4285 = vmatpush1.msra.mxu0 0.0
      %4286 = vmatprep.subr.mxu0 0.0
      %4287 = vmatpush1.msra.mxu0 0.0
      %4288 = vmatprep.subr.mxu0 0.0
      %4289 = vmatpush1.msra.mxu0 0.0
      %4290 = vmatprep.subr.mxu0 0.0
      %4291 = vmatpush1.msra.mxu0 0.0
      %4292 = vmatprep.subr.mxu0 0.0
      %4293 = vmatpush1.msra.mxu0 0.0
      %4294 = vmatprep.subr.mxu0 0.0
      %4295 = vmatpush1.msra.mxu0 0.0
      %4296 = vmatprep.subr.mxu0 0.0
      %4297 = vmatpush1.msra.mxu0 0.0
      %4298 = vmatprep.subr.mxu0 0.0
      %4299 = vmatpush1.msra.mxu0 0.0
      %4300 = vmatprep.subr.mxu0 0.0
      %4301 = vmatpush1.msra.mxu0 0.0
      %4302 = vmatprep.subr.mxu0 0.0
      %4303 = vmatpush1.msra.mxu0 0.0
      %4304 = vmatprep.subr.mxu0 0.0
      %4305 = vmatpush1.msra.mxu0 0.0
      %4306 = vmatprep.subr.mxu0 0.0
      %4307 = vmatpush1.msra.mxu0 0.0
      %4308 = vmatprep.subr.mxu0 0.0
      %4309 = vmatpush1.msra.mxu0 0.0
      %4310 = vmatprep.subr.mxu0 0.0
      %4311 = vmatpush1.msra.mxu0 0.0
      %4312 = vmatprep.subr.mxu0 0.0
      %4313 = vmatpush1.msra.mxu0 0.0
      %4314 = vmatprep.subr.mxu0 0.0
      %4315 = vmatpush1.msra.mxu0 0.0
      %4316 = vmatprep.subr.mxu0 0.0
      %4317 = vmatpush1.msra.mxu0 0.0
      %4318 = vmatprep.subr.mxu0 0.0
      %4319 = vmatpush1.msra.mxu0 0.0
      %4320 = vmatprep.subr.mxu0 0.0
      %4321 = vmatpush1.msra.mxu0 0.0
      %4322 = vmatprep.subr.mxu0 0.0
      %4323 = vmatpush1.msra.mxu0 0.0
      %4324 = vmatprep.subr.mxu0 0.0
      %4325 = vmatpush1.msra.mxu0 0.0
      %4326 = vmatprep.mubr.f32.mxu0 0.0
      %4327 = vmatmul.mubr.f32.gmra.mrb[0].mxu0 %v4174
      %v4328 = vpop.f32.mrb[0].mxu0
      %v4329 = vadd.f32 0.0, %v4328
      %v4330 = vpop.f32.mrb[0].mxu0
      %v4331 = vadd.f32 0.0, %v4330
      %4332 = vdwg.mxu0
      %4333 = vmatprep.subr.mxu0 %v4187
      %4334 = vmatpush1.msra.mxu0 %v4185
      %4335 = vmatprep.subr.mxu0 0.0
      %4336 = vmatpush1.msra.mxu0 0.0
      %4337 = vmatprep.subr.mxu0 0.0
      %4338 = vmatpush1.msra.mxu0 0.0
      %4339 = vmatprep.subr.mxu0 0.0
      %4340 = vmatpush1.msra.mxu0 0.0
      %4341 = vmatprep.subr.mxu0 0.0
      %4342 = vmatpush1.msra.mxu0 0.0
      %4343 = vmatprep.subr.mxu0 0.0
      %4344 = vmatpush1.msra.mxu0 0.0
      %4345 = vmatprep.subr.mxu0 0.0
      %4346 = vmatpush1.msra.mxu0 0.0
      %4347 = vmatprep.subr.mxu0 0.0
      %4348 = vmatpush1.msra.mxu0 0.0
      %4349 = vmatprep.subr.mxu0 0.0
      %4350 = vmatpush1.msra.mxu0 0.0
      %4351 = vmatprep.subr.mxu0 0.0
      %4352 = vmatpush1.msra.mxu0 0.0
      %4353 = vmatprep.subr.mxu0 0.0
      %4354 = vmatpush1.msra.mxu0 0.0
      %4355 = vmatprep.subr.mxu0 0.0
      %4356 = vmatpush1.msra.mxu0 0.0
      %4357 = vmatprep.subr.mxu0 0.0
      %4358 = vmatpush1.msra.mxu0 0.0
      %4359 = vmatprep.subr.mxu0 0.0
      %4360 = vmatpush1.msra.mxu0 0.0
      %4361 = vmatprep.subr.mxu0 0.0
      %4362 = vmatpush1.msra.mxu0 0.0
      %4363 = vmatprep.subr.mxu0 0.0
      %4364 = vmatpush1.msra.mxu0 0.0
      %4365 = vmatprep.subr.mxu0 0.0
      %4366 = vmatpush1.msra.mxu0 0.0
      %4367 = vmatprep.subr.mxu0 0.0
      %4368 = vmatpush1.msra.mxu0 0.0
      %4369 = vmatprep.subr.mxu0 0.0
      %4370 = vmatpush1.msra.mxu0 0.0
      %4371 = vmatprep.subr.mxu0 0.0
      %4372 = vmatpush1.msra.mxu0 0.0
      %4373 = vmatprep.subr.mxu0 0.0
      %4374 = vmatpush1.msra.mxu0 0.0
      %4375 = vmatprep.subr.mxu0 0.0
      %4376 = vmatpush1.msra.mxu0 0.0
      %4377 = vmatprep.subr.mxu0 0.0
      %4378 = vmatpush1.msra.mxu0 0.0
      %4379 = vmatprep.subr.mxu0 0.0
      %4380 = vmatpush1.msra.mxu0 0.0
      %4381 = vmatprep.subr.mxu0 0.0
      %4382 = vmatpush1.msra.mxu0 0.0
      %4383 = vmatprep.subr.mxu0 0.0
      %4384 = vmatpush1.msra.mxu0 0.0
      %4385 = vmatprep.subr.mxu0 0.0
      %4386 = vmatpush1.msra.mxu0 0.0
      %4387 = vmatprep.subr.mxu0 0.0
      %4388 = vmatpush1.msra.mxu0 0.0
      %4389 = vmatprep.subr.mxu0 0.0
      %4390 = vmatpush1.msra.mxu0 0.0
      %4391 = vmatprep.subr.mxu0 0.0
      %4392 = vmatpush1.msra.mxu0 0.0
      %4393 = vmatprep.subr.mxu0 0.0
      %4394 = vmatpush1.msra.mxu0 0.0
      %4395 = vmatprep.subr.mxu0 0.0
      %4396 = vmatpush1.msra.mxu0 0.0
      %4397 = vmatprep.mubr.f32.mxu0 0.0
      %4398 = vmatmul.mubr.f32.gmra.mrb[0].mxu0 %v4174
      %v4399 = vpop.f32.mrb[0].mxu0
      %v4400 = vadd.f32 0.0, %v4399
      %v4401 = vpop.f32.mrb[0].mxu0
      %v4402 = vadd.f32 0.0, %v4401
      %4403 = vdwg.mxu0
      %4404 = vmatprep.subr.mxu0 0.0
      %4405 = vmatpush1.msra.mxu0 %v4189
      %4406 = vmatprep.subr.mxu0 0.0
      %4407 = vmatpush1.msra.mxu0 0.0
      %4408 = vmatprep.subr.mxu0 0.0
      %4409 = vmatpush1.msra.mxu0 0.0
      %4410 = vmatprep.subr.mxu0 0.0
      %4411 = vmatpush1.msra.mxu0 0.0
      %4412 = vmatprep.subr.mxu0 0.0
      %4413 = vmatpush1.msra.mxu0 0.0
      %4414 = vmatprep.subr.mxu0 0.0
      %4415 = vmatpush1.msra.mxu0 0.0
      %4416 = vmatprep.subr.mxu0 0.0
      %4417 = vmatpush1.msra.mxu0 0.0
      %4418 = vmatprep.subr.mxu0 0.0
      %4419 = vmatpush1.msra.mxu0 0.0
      %4420 = vmatprep.subr.mxu0 0.0
      %4421 = vmatpush1.msra.mxu0 0.0
      %4422 = vmatprep.subr.mxu0 0.0
      %4423 = vmatpush1.msra.mxu0 0.0
      %4424 = vmatprep.subr.mxu0 0.0
      %4425 = vmatpush1.msra.mxu0 0.0
      %4426 = vmatprep.subr.mxu0 0.0
      %4427 = vmatpush1.msra.mxu0 0.0
      %4428 = vmatprep.subr.mxu0 0.0
      %4429 = vmatpush1.msra.mxu0 0.0
      %4430 = vmatprep.subr.mxu0 0.0
      %4431 = vmatpush1.msra.mxu0 0.0
      %4432 = vmatprep.subr.mxu0 0.0
      %4433 = vmatpush1.msra.mxu0 0.0
      %4434 = vmatprep.subr.mxu0 0.0
      %4435 = vmatpush1.msra.mxu0 0.0
      %4436 = vmatprep.subr.mxu0 0.0
      %4437 = vmatpush1.msra.mxu0 0.0
      %4438 = vmatprep.subr.mxu0 0.0
      %4439 = vmatpush1.msra.mxu0 0.0
      %4440 = vmatprep.subr.mxu0 0.0
      %4441 = vmatpush1.msra.mxu0 0.0
      %4442 = vmatprep.subr.mxu0 0.0
      %4443 = vmatpush1.msra.mxu0 0.0
      %4444 = vmatprep.subr.mxu0 0.0
      %4445 = vmatpush1.msra.mxu0 0.0
      %4446 = vmatprep.subr.mxu0 0.0
      %4447 = vmatpush1.msra.mxu0 0.0
      %4448 = vmatprep.subr.mxu0 0.0
      %4449 = vmatpush1.msra.mxu0 0.0
      %4450 = vmatprep.subr.mxu0 0.0
      %4451 = vmatpush1.msra.mxu0 0.0
      %4452 = vmatprep.subr.mxu0 0.0
      %4453 = vmatpush1.msra.mxu0 0.0
      %4454 = vmatprep.subr.mxu0 0.0
      %4455 = vmatpush1.msra.mxu0 0.0
      %4456 = vmatprep.subr.mxu0 0.0
      %4457 = vmatpush1.msra.mxu0 0.0
      %4458 = vmatprep.subr.mxu0 0.0
      %4459 = vmatpush1.msra.mxu0 0.0
      %4460 = vmatprep.subr.mxu0 0.0
      %4461 = vmatpush1.msra.mxu0 0.0
      %4462 = vmatprep.subr.mxu0 0.0
      %4463 = vmatpush1.msra.mxu0 0.0
      %4464 = vmatprep.subr.mxu0 0.0
      %4465 = vmatpush1.msra.mxu0 0.0
      %4466 = vmatprep.subr.mxu0 0.0
      %4467 = vmatpush1.msra.mxu0 0.0
      %4468 = vmatprep.mubr.f32.mxu0 0.0
      %4469 = vmatmul.mubr.f32.gmra.mrb[0].mxu0 %v4174
      %v4470 = vpop.f32.mrb[0].mxu0
      %v4471 = vadd.f32 0.0, %v4470
      %v4472 = vpop.f32.mrb[0].mxu0
      %4473 = vdwg.mxu0
      %s4474 = scalar_lea.vmem %s5, 16
      %v4475 = vld [vmem:[%s4474] sm:$0xff]
      %4477 = vset.pattern.permute.xlu0 0
      %4478 = vperm.xlu0 %4477, %v4475
      %v4479 = vpop.permute.xlu0 %4478
      %v4481 = vmul.f32 %v4258, %v4479
      %v4482 = vmul.f32 %v4260, %v4479
      %v4483 = vmul.f32 %v4329, %v4479
      %v4484 = vmul.f32 %v4331, %v4479
      %v4485 = vmul.f32 %v4400, %v4479
      %v4486 = vmul.f32 %v4402, %v4479
      %v4487 = vmul.f32 %v4471, %v4479
      %s4488 = scalar_lea.vmem %s6, 16
      %v4489 = vld [vmem:[%s4488] sm:$0xff]
      %4491 = vset.pattern.permute.xlu0 0
      %4492 = vperm.xlu0 %4491, %v4489
      %v4493 = vpop.permute.xlu0 %4492
      %v4495 = vadd.f32 %v4481, %v4493
      %v4496 = vadd.f32 %v4482, %v4493
      %v4497 = vadd.f32 %v4483, %v4493
      %v4498 = vadd.f32 %v4484, %v4493
      %v4499 = vadd.f32 %v4485, %v4493
      %v4500 = vadd.f32 %v4486, %v4493
      %v4501 = vadd.f32 %v4487, %v4493
      %v4502 = vmax.f32 %v4495, 0.0
      %v4503 = vmax.f32 %v4496, 0.0
      %v4504 = vmax.f32 %v4497, 0.0
      %v4505 = vmax.f32 %v4498, 0.0
      %v4506 = vmax.f32 %v4499, 0.0
      %v4507 = vmax.f32 %v4500, 0.0
      %v4508 = vmax.f32 %v4501, 0.0
      %v4509 = vadd.f32 %v4129, %v4502
      %v4510 = vadd.f32 %v4130, %v4503
      %v4511 = vadd.f32 %v4131, %v4504
      %v4512 = vadd.f32 %v4132, %v4505
      %v4513 = vadd.f32 %v4133, %v4506
      %v4514 = vadd.f32 %v4134, %v4507
      %v4515 = vadd.f32 %v4135, %v4508
      %4516 = vst [vmem:[%s278] sm:$0xff] %v4509
      %4517 = vst [vmem:[%s278 + $0x8] sm:$0xff] %v4510
      %4518 = vst [vmem:[%s278 + $0x10] sm:$0xff] %v4511
      %4519 = vst [vmem:[%s278 + $0x18] sm:$0xff] %v4512
      %4520 = vst [vmem:[%s278 + $0x20] sm:$0xff] %v4513
      %4521 = vst [vmem:[%s278 + $0x28] sm:$0xff] %v4514
      %4522 = vst.msk [vmem:[%s278 + $0x30] sm:$0xff] %vm286, %v4515
      %p4523 = scmp.lt.s32.totalorder %s18, 1
      %s4524 = scalar_select %p4523, %s18, 1
      %s4525 = smul.addr %s4524, 7
      %s4526 = smul.addr %s4525, 8
      %s4527 = scalar_lea.vmem %s7, %s4526
      // Predicated region
      $region49: #{residual_block_forward.1} parent=47 // pred_check
        %p4528 = pneg %p188
      $region50: #{residual_block_forward.1} parent=47 // pred_check_branch
        %4530 = sbr.rel (%p4528) target = $region52
      $region51: #{residual_block_forward.1} parent=47 // pred_region
        _
      $region52: #{residual_block_forward.1} parent=47 // pred_fallthru
        _
    $region48: #{residual_block_forward.1} parent=5 // pred_fallthru
      _
    %p4531 = scmp.le.s32.totalorder 2, %s13
    // Predicated region
    $region53: #{residual_block_forward.1} parent=5 // pred_check
      %p4532 = pneg %p4531
    $region54: #{residual_block_forward.1} parent=5 // pred_check_branch
      %4534 = sbr.rel (%p4532) target = $region56
    $region55: #{residual_block_forward.1} parent=5 // pred_region
      %s4535 = ssub.s32 %s13, 2
      // Predicated region
      $region57: #{residual_block_forward.1} parent=55 // pred_check
        %p4536 = pneg %p194
      $region58: #{residual_block_forward.1} parent=55 // pred_check_branch
        %4538 = sbr.rel (%p4536) target = $region60
      $region59: #{residual_block_forward.1} parent=55 // pred_region
        %p4539 = scmp.lt.s32.totalorder %s19, 1
        %s4540 = scalar_select %p4539, %s19, 1
        %s4541 = smul.addr %s4540, 7
        %s4542 = smul.addr %s4541, 8
        %s4543 = scalar_lea.vmem %s7, %s4542
      $region60: #{residual_block_forward.1} parent=55 // pred_fallthru
        _
    $region56: #{residual_block_forward.1} parent=5 // pred_fallthru
      _
  $region6: #{residual_block_forward.1} parent=0 // loop_footer
    %s17 = sadd.s32 1, %s13
  $region7: #{residual_block_forward.1} parent=0 // loop_footer_branch
    %12 = sbr.rel target = $region3
  $region8: #{residual_block_forward.1} parent=0 // loop_exit
    _

</llo_original>
